<compile_context>
chip_gen: v6e
topology: v6e:2x2x1
jax: 0.10.0
libtpu: 0.0.40
codegen_flags: <defaults>
</compile_context>

<pallas_src>
import functools

import jax
import jax.numpy as jnp
from jax import lax
from jax.experimental import pallas as pl
from jax.experimental.pallas import tpu as pltpu

# Module hyper-parameters (scaled down to small, consistent values).
N_EMBD = 128                       # n_embd
NUM_HEADS = 4
HEAD_SIZE = N_EMBD // NUM_HEADS    # 32
SEQ_LEN = 64                       # T (<= context_size; causal mask in-kernel)
BATCH = 2


def _mha_kernel(x_ref, wqkv_ref, wp_ref, bp_ref, o_ref, qkv_ref, *,
                batch, seq, num_heads):
    # x_ref    : (B*T, C)   bf16, all batch rows stacked
    # wqkv_ref : (C, 3*C)   bf16, [Wq_all*scale | Wk_all | Wv_all]
    # wp_ref   : (C, C)     bf16, output projection (y = h @ Wp)
    # bp_ref   : (1, C)     f32
    # o_ref    : (B*T, C)   f32
    # qkv_ref  : (B*T, 3*C) bf16 VMEM scratch
    T = seq
    C = x_ref.shape[1]
    D = C // num_heads

    # Fused QKV projection for all batch rows at once: (B*T, C) @ (C, 3C).
    # bf16 operands, f32 accumulation; attention scale already folded into Wq.
    qkv = jnp.dot(x_ref[...], wqkv_ref[...],
                  preferred_element_type=jnp.float32)          # (B*T, 3C) f32
    # Stage once to VMEM scratch (bf16) so the head loop only loads small
    # (T, D) slices instead of holding the whole projection live in vregs.
    qkv_ref[...] = qkv.astype(jnp.bfloat16)

    # Additive causal mask built in-kernel (no HBM input / DMA for it).
    row = lax.broadcasted_iota(jnp.int32, (T, T), 0)
    col = lax.broadcasted_iota(jnp.int32, (T, T), 1)
    mask = jnp.where(col <= row, 0.0, -1e30).astype(jnp.float32)   # (T, T)

    bias = bp_ref[...]                                         # (1, C) f32

    for b in range(batch):                    # static unroll (batch = 2)
        rows = pl.ds(b * T, T)
        y = jnp.zeros((T, C), jnp.float32)    # per-batch accumulator
        for h in range(num_heads):            # static unroll (heads = 4)
            q = qkv_ref[rows, pl.ds(0 * C + h * D, D)]         # (T, D) bf16
            k = qkv_ref[rows, pl.ds(1 * C + h * D, D)]         # (T, D) bf16
            v = qkv_ref[rows, pl.ds(2 * C + h * D, D)]         # (T, D) bf16

            # q @ k^T without materializing a transpose: contract last dims.
            wei = lax.dot_general(q, k, (((1,), (1,)), ((), ())),
                                  preferred_element_type=jnp.float32)  # (T,T)
            wei = wei + mask

            # softmax over the last axis (divide via EUP approx reciprocal).
            m = jnp.max(wei, axis=-1, keepdims=True)
            e = jnp.exp(wei - m)
            denom = jnp.sum(e, axis=-1, keepdims=True)
            p = e * pl.reciprocal(denom, approx=True)

            head = jnp.dot(p.astype(jnp.bfloat16), v,
                           preferred_element_type=jnp.float32)         # (T, D)

            # Accumulate this head's contribution of "concat(heads) @ Wp".
            y = y + jnp.dot(head.astype(jnp.bfloat16),
                            wp_ref[h * D:(h + 1) * D, :],
                            preferred_element_type=jnp.float32)        # (T, C)

        o_ref[rows, :] = (y + bias).astype(o_ref.dtype)


@jax.jit
def multi_head_attention(x, wq, wk, wv, wp, bp):
    B, T, C = x.shape
    H = wq.shape[0]
    scale = C ** (-0.5)                 # NOTE: PyTorch code scales by n_embd**-0.5

    # Pack per-head weights into one lane-dense (C, 3*C) matrix; scale folded
    # into the Wq column block; stored bf16 (native MXU input dtype).
    def pack(w):                                   # (H, C, D) -> (C, H*D)
        return jnp.transpose(w, (1, 0, 2)).reshape(C, C)
    wqkv = jnp.concatenate([pack(wq) * scale, pack(wk), pack(wv)],
                           axis=1).astype(jnp.bfloat16)        # (C, 3C)
    wp_bf16 = wp.astype(jnp.bfloat16)                          # (C, C)
    x_flat = x.reshape(B * T, C).astype(jnp.bfloat16)          # (B*T, C)

    kernel = functools.partial(_mha_kernel, batch=B, seq=T, num_heads=H)

    out = pl.pallas_call(
        kernel,
        out_shape=jax.ShapeDtypeStruct((B * T, C), jnp.float32),
        grid=(1,),
        in_specs=[
            pl.BlockSpec((B * T, C), lambda i: (0, 0)),        # x (flattened)
            pl.BlockSpec((C, 3 * C), lambda i: (0, 0)),        # fused Wqkv
            pl.BlockSpec((C, C), lambda i: (0, 0)),            # Wproj
            pl.BlockSpec((1, C), lambda i: (0, 0)),            # bproj
        ],
        out_specs=pl.BlockSpec((B * T, C), lambda i: (0, 0)),
        scratch_shapes=[pltpu.VMEM((B * T, 3 * C), jnp.bfloat16)],
        compiler_params=pltpu.CompilerParams(
            dimension_semantics=("arbitrary",)),
    )(x_flat, wqkv, wp_bf16, bp)

    return out.reshape(B, T, C).astype(x.dtype)


def reference(x, wq, wk, wv, wp, bp):
    """Pure-JAX f32 reference mirroring the PyTorch forward (eval mode)."""
    B, T, C = x.shape
    scale = C ** (-0.5)
    mask = jnp.tril(jnp.ones((T, T), dtype=bool))
    outs = []
    for h in range(wq.shape[0]):
        q = x @ wq[h]
        k = x @ wk[h]
        v = x @ wv[h]
        wei = (q @ jnp.swapaxes(k, -1, -2)) * scale
        wei = jnp.where(mask, wei, -jnp.inf)
        wei = jax.nn.softmax(wei, axis=-1)
        outs.append(wei @ v)
    out = jnp.concatenate(outs, axis=-1)
    return out @ wp + bp[0]


if __name__ == "__main__":
    key = jax.random.PRNGKey(0)
    kx, kq, kk, kv, kp, kb = jax.random.split(key, 6)

    x = jax.random.normal(kx, (BATCH, SEQ_LEN, N_EMBD), dtype=jnp.float32)

    # Deterministic parameter init (not a checkpoint load).
    s = 1.0 / (N_EMBD ** 0.5)
    wq = jax.random.uniform(kq, (NUM_HEADS, N_EMBD, HEAD_SIZE), jnp.float32, -s, s)
    wk = jax.random.uniform(kk, (NUM_HEADS, N_EMBD, HEAD_SIZE), jnp.float32, -s, s)
    wv = jax.random.uniform(kv, (NUM_HEADS, N_EMBD, HEAD_SIZE), jnp.float32, -s, s)
    wp = jax.random.uniform(kp, (N_EMBD, N_EMBD), jnp.float32, -s, s)
    bp = jax.random.uniform(kb, (1, N_EMBD), jnp.float32, -s, s)

    out = multi_head_attention(x, wq, wk, wv, wp, bp)
    out = jax.block_until_ready(out)

    ref = reference(x, wq, wk, wv, wp, bp)
    assert out.shape == (BATCH, SEQ_LEN, N_EMBD)
    # Tolerance covers bf16 MXU operands (f32 accumulation) and the EUP
    # approximate reciprocal in the in-kernel softmax.
    assert jnp.allclose(out, ref, atol=2e-2, rtol=2e-2), "mismatch vs reference"

    print("KERNEL_OK")
</pallas_src>

<mosaic_0001>
module attributes {stable_mosaic.version = 11 : i64} {
  func.func @_mha_kernel(%arg0: i32, %arg1: memref<128x128xbf16, #tpu.memory_space<vmem>>, %arg2: memref<128x384xbf16, #tpu.memory_space<vmem>>, %arg3: memref<128x128xbf16, #tpu.memory_space<vmem>>, %arg4: memref<1x128xf32, #tpu.memory_space<vmem>>, %arg5: memref<128x128xf32, #tpu.memory_space<vmem>>, %arg6: memref<128x384xbf16, #tpu.memory_space<vmem>>) attributes {dimension_semantics = [#tpu.dimension_semantics<arbitrary>], iteration_bounds = array<i64: 1>, scalar_prefetch = 0 : i64, scratch_operands = 1 : i64, tpu.core_type = #tpu.core_type<tc>, window_params = [{pipeline_mode = #tpu.pipeline_mode<synchronous>, transform_indices = @transform_0, window_bounds = array<i64: 128, 128>}, {pipeline_mode = #tpu.pipeline_mode<synchronous>, transform_indices = @transform_1, window_bounds = array<i64: 128, 384>}, {pipeline_mode = #tpu.pipeline_mode<synchronous>, transform_indices = @transform_2, window_bounds = array<i64: 128, 128>}, {pipeline_mode = #tpu.pipeline_mode<synchronous>, transform_indices = @transform_3, window_bounds = array<i64: 1, 128>}, {pipeline_mode = #tpu.pipeline_mode<synchronous>, transform_indices = @transform_4, window_bounds = array<i64: 128, 128>}]} {
    %c0 = arith.constant 0 : index
    %c0_0 = arith.constant 0 : index
    %0 = vector.load %arg1[%c0, %c0_0] : memref<128x128xbf16, #tpu.memory_space<vmem>>, vector<128x128xbf16>
    %c0_1 = arith.constant 0 : index
    %c0_2 = arith.constant 0 : index
    %1 = vector.load %arg2[%c0_1, %c0_2] : memref<128x384xbf16, #tpu.memory_space<vmem>>, vector<128x384xbf16>
    %cst = arith.constant dense<0.000000e+00> : vector<128x384xf32>
    %2 = tpu.matmul %0, %1, %cst {dimension_numbers = #tpu.dot_dimension_numbers<[1], [0], [0], [1], [0, 0, 1, 1], [], []>} : vector<128x128xbf16>, vector<128x384xbf16>, vector<128x384xf32> -> vector<128x384xf32>
    %3 = arith.truncf %2 : vector<128x384xf32> to vector<128x384xbf16>
    %c0_3 = arith.constant 0 : index
    %c0_4 = arith.constant 0 : index
    %4 = vector.load %arg6[%c0_3, %c0_4] : memref<128x384xbf16, #tpu.memory_space<vmem>>, vector<128x384xbf16>
    tpu.vector_store %arg6[%c0_3, %c0_4], %3 {strides = array<i32>} : memref<128x384xbf16, #tpu.memory_space<vmem>>, vector<128x384xbf16>,
    %5 = tpu.iota {dimensions = array<i32: 0>} : vector<64x64xi32>
    %6 = tpu.iota {dimensions = array<i32: 1>} : vector<64x64xi32>
    %7 = arith.cmpi sle, %6, %5 : vector<64x64xi32>
    %cst_5 = arith.constant 0.000000e+00 : f32
    %cst_6 = arith.constant -1.000000e+30 : f32
    %8 = vector.broadcast %cst_5 : f32 to vector<64x64xf32>
    %9 = vector.broadcast %cst_6 : f32 to vector<64x64xf32>
    %10 = arith.select %7, %8, %9 : vector<64x64xi1>, vector<64x64xf32>
    %c0_7 = arith.constant 0 : index
    %c0_8 = arith.constant 0 : index
    %11 = vector.load %arg4[%c0_7, %c0_8] : memref<1x128xf32, #tpu.memory_space<vmem>>, vector<1x128xf32>
    %cst_9 = arith.constant 0.000000e+00 : f32
    %12 = vector.broadcast %cst_9 : f32 to vector<64x128xf32>
    %c0_10 = arith.constant 0 : index
    %c0_11 = arith.constant 0 : index
    %13 = vector.load %arg6[%c0_10, %c0_11] : memref<128x384xbf16, #tpu.memory_space<vmem>>, vector<64x32xbf16>
    %c0_12 = arith.constant 0 : index
    %c128 = arith.constant 128 : index
    %14 = vector.load %arg6[%c0_12, %c128] : memref<128x384xbf16, #tpu.memory_space<vmem>>, vector<64x32xbf16>
    %c0_13 = arith.constant 0 : index
    %c256 = arith.constant 256 : index
    %15 = vector.load %arg6[%c0_13, %c256] : memref<128x384xbf16, #tpu.memory_space<vmem>>, vector<64x32xbf16>
    %cst_14 = arith.constant dense<0.000000e+00> : vector<64x64xf32>
    %16 = tpu.matmul %13, %14, %cst_14 {dimension_numbers = #tpu.dot_dimension_numbers<[1], [1], [0], [0], [0, 0, 1, 0], [], []>} : vector<64x32xbf16>, vector<64x32xbf16>, vector<64x64xf32> -> vector<64x64xf32>
    %17 = arith.addf %16, %10 : vector<64x64xf32>
    %cst_15 = arith.constant dense<0xFF800000> : vector<64xf32>
    %18 = vector.multi_reduction <maximumf>, %17, %cst_15 [1] : vector<64x64xf32> to vector<64xf32>
    %19 = vector.shape_cast %18 : vector<64xf32> to vector<64x1xf32>
    %20 = vector.broadcast %19 : vector<64x1xf32> to vector<64x64xf32>
    %21 = arith.subf %17, %20 : vector<64x64xf32>
    %22 = math.exp %21 : vector<64x64xf32>
    %cst_16 = arith.constant dense<0.000000e+00> : vector<64xf32>
    %23 = vector.multi_reduction <add>, %22, %cst_16 [1] : vector<64x64xf32> to vector<64xf32>
    %24 = vector.shape_cast %23 : vector<64xf32> to vector<64x1xf32>
    %25 = tpu.reciprocal %24 {approx = true} : vector<64x1xf32> -> vector<64x1xf32>
    %26 = vector.broadcast %25 : vector<64x1xf32> to vector<64x64xf32>
    %27 = arith.mulf %22, %26 : vector<64x64xf32>
    %28 = arith.truncf %27 : vector<64x64xf32> to vector<64x64xbf16>
    %cst_17 = arith.constant dense<0.000000e+00> : vector<64x32xf32>
    %29 = tpu.matmul %28, %15, %cst_17 {dimension_numbers = #tpu.dot_dimension_numbers<[1], [0], [0], [1], [0, 0, 1, 1], [], []>} : vector<64x64xbf16>, vector<64x32xbf16>, vector<64x32xf32> -> vector<64x32xf32>
    %30 = arith.truncf %29 : vector<64x32xf32> to vector<64x32xbf16>
    %c0_18 = arith.constant 0 : index
    %c0_19 = arith.constant 0 : index
    %31 = vector.load %arg3[%c0_18, %c0_19] : memref<128x128xbf16, #tpu.memory_space<vmem>>, vector<32x128xbf16>
    %cst_20 = arith.constant dense<0.000000e+00> : vector<64x128xf32>
    %32 = tpu.matmul %30, %31, %cst_20 {dimension_numbers = #tpu.dot_dimension_numbers<[1], [0], [0], [1], [0, 0, 1, 1], [], []>} : vector<64x32xbf16>, vector<32x128xbf16>, vector<64x128xf32> -> vector<64x128xf32>
    %33 = arith.addf %12, %32 : vector<64x128xf32>
    %c0_21 = arith.constant 0 : index
    %c32 = arith.constant 32 : index
    %34 = vector.load %arg6[%c0_21, %c32] : memref<128x384xbf16, #tpu.memory_space<vmem>>, vector<64x32xbf16>
    %c0_22 = arith.constant 0 : index
    %c160 = arith.constant 160 : index
    %35 = vector.load %arg6[%c0_22, %c160] : memref<128x384xbf16, #tpu.memory_space<vmem>>, vector<64x32xbf16>
    %c0_23 = arith.constant 0 : index
    %c288 = arith.constant 288 : index
    %36 = vector.load %arg6[%c0_23, %c288] : memref<128x384xbf16, #tpu.memory_space<vmem>>, vector<64x32xbf16>
    %cst_24 = arith.constant dense<0.000000e+00> : vector<64x64xf32>
    %37 = tpu.matmul %34, %35, %cst_24 {dimension_numbers = #tpu.dot_dimension_numbers<[1], [1], [0], [0], [0, 0, 1, 0], [], []>} : vector<64x32xbf16>, vector<64x32xbf16>, vector<64x64xf32> -> vector<64x64xf32>
    %38 = arith.addf %37, %10 : vector<64x64xf32>
    %cst_25 = arith.constant dense<0xFF800000> : vector<64xf32>
    %39 = vector.multi_reduction <maximumf>, %38, %cst_25 [1] : vector<64x64xf32> to vector<64xf32>
    %40 = vector.shape_cast %39 : vector<64xf32> to vector<64x1xf32>
    %41 = vector.broadcast %40 : vector<64x1xf32> to vector<64x64xf32>
    %42 = arith.subf %38, %41 : vector<64x64xf32>
    %43 = math.exp %42 : vector<64x64xf32>
    %cst_26 = arith.constant dense<0.000000e+00> : vector<64xf32>
    %44 = vector.multi_reduction <add>, %43, %cst_26 [1] : vector<64x64xf32> to vector<64xf32>
    %45 = vector.shape_cast %44 : vector<64xf32> to vector<64x1xf32>
    %46 = tpu.reciprocal %45 {approx = true} : vector<64x1xf32> -> vector<64x1xf32>
    %47 = vector.broadcast %46 : vector<64x1xf32> to vector<64x64xf32>
    %48 = arith.mulf %43, %47 : vector<64x64xf32>
    %49 = arith.truncf %48 : vector<64x64xf32> to vector<64x64xbf16>
    %cst_27 = arith.constant dense<0.000000e+00> : vector<64x32xf32>
    %50 = tpu.matmul %49, %36, %cst_27 {dimension_numbers = #tpu.dot_dimension_numbers<[1], [0], [0], [1], [0, 0, 1, 1], [], []>} : vector<64x64xbf16>, vector<64x32xbf16>, vector<64x32xf32> -> vector<64x32xf32>
    %51 = arith.truncf %50 : vector<64x32xf32> to vector<64x32xbf16>
    %c32_28 = arith.constant 32 : index
    %c0_29 = arith.constant 0 : index
    %52 = vector.load %arg3[%c32_28, %c0_29] : memref<128x128xbf16, #tpu.memory_space<vmem>>, vector<32x128xbf16>
    %cst_30 = arith.constant dense<0.000000e+00> : vector<64x128xf32>
    %53 = tpu.matmul %51, %52, %cst_30 {dimension_numbers = #tpu.dot_dimension_numbers<[1], [0], [0], [1], [0, 0, 1, 1], [], []>} : vector<64x32xbf16>, vector<32x128xbf16>, vector<64x128xf32> -> vector<64x128xf32>
    %54 = arith.addf %33, %53 : vector<64x128xf32>
    %c0_31 = arith.constant 0 : index
    %c64 = arith.constant 64 : index
    %55 = vector.load %arg6[%c0_31, %c64] : memref<128x384xbf16, #tpu.memory_space<vmem>>, vector<64x32xbf16>
    %c0_32 = arith.constant 0 : index
    %c192 = arith.constant 192 : index
    %56 = vector.load %arg6[%c0_32, %c192] : memref<128x384xbf16, #tpu.memory_space<vmem>>, vector<64x32xbf16>
    %c0_33 = arith.constant 0 : index
    %c320 = arith.constant 320 : index
    %57 = vector.load %arg6[%c0_33, %c320] : memref<128x384xbf16, #tpu.memory_space<vmem>>, vector<64x32xbf16>
    %cst_34 = arith.constant dense<0.000000e+00> : vector<64x64xf32>
    %58 = tpu.matmul %55, %56, %cst_34 {dimension_numbers = #tpu.dot_dimension_numbers<[1], [1], [0], [0], [0, 0, 1, 0], [], []>} : vector<64x32xbf16>, vector<64x32xbf16>, vector<64x64xf32> -> vector<64x64xf32>
    %59 = arith.addf %58, %10 : vector<64x64xf32>
    %cst_35 = arith.constant dense<0xFF800000> : vector<64xf32>
    %60 = vector.multi_reduction <maximumf>, %59, %cst_35 [1] : vector<64x64xf32> to vector<64xf32>
    %61 = vector.shape_cast %60 : vector<64xf32> to vector<64x1xf32>
    %62 = vector.broadcast %61 : vector<64x1xf32> to vector<64x64xf32>
    %63 = arith.subf %59, %62 : vector<64x64xf32>
    %64 = math.exp %63 : vector<64x64xf32>
    %cst_36 = arith.constant dense<0.000000e+00> : vector<64xf32>
    %65 = vector.multi_reduction <add>, %64, %cst_36 [1] : vector<64x64xf32> to vector<64xf32>
    %66 = vector.shape_cast %65 : vector<64xf32> to vector<64x1xf32>
    %67 = tpu.reciprocal %66 {approx = true} : vector<64x1xf32> -> vector<64x1xf32>
    %68 = vector.broadcast %67 : vector<64x1xf32> to vector<64x64xf32>
    %69 = arith.mulf %64, %68 : vector<64x64xf32>
    %70 = arith.truncf %69 : vector<64x64xf32> to vector<64x64xbf16>
    %cst_37 = arith.constant dense<0.000000e+00> : vector<64x32xf32>
    %71 = tpu.matmul %70, %57, %cst_37 {dimension_numbers = #tpu.dot_dimension_numbers<[1], [0], [0], [1], [0, 0, 1, 1], [], []>} : vector<64x64xbf16>, vector<64x32xbf16>, vector<64x32xf32> -> vector<64x32xf32>
    %72 = arith.truncf %71 : vector<64x32xf32> to vector<64x32xbf16>
    %c64_38 = arith.constant 64 : index
    %c0_39 = arith.constant 0 : index
    %73 = vector.load %arg3[%c64_38, %c0_39] : memref<128x128xbf16, #tpu.memory_space<vmem>>, vector<32x128xbf16>
    %cst_40 = arith.constant dense<0.000000e+00> : vector<64x128xf32>
    %74 = tpu.matmul %72, %73, %cst_40 {dimension_numbers = #tpu.dot_dimension_numbers<[1], [0], [0], [1], [0, 0, 1, 1], [], []>} : vector<64x32xbf16>, vector<32x128xbf16>, vector<64x128xf32> -> vector<64x128xf32>
    %75 = arith.addf %54, %74 : vector<64x128xf32>
    %c0_41 = arith.constant 0 : index
    %c96 = arith.constant 96 : index
    %76 = vector.load %arg6[%c0_41, %c96] : memref<128x384xbf16, #tpu.memory_space<vmem>>, vector<64x32xbf16>
    %c0_42 = arith.constant 0 : index
    %c224 = arith.constant 224 : index
    %77 = vector.load %arg6[%c0_42, %c224] : memref<128x384xbf16, #tpu.memory_space<vmem>>, vector<64x32xbf16>
    %c0_43 = arith.constant 0 : index
    %c352 = arith.constant 352 : index
    %78 = vector.load %arg6[%c0_43, %c352] : memref<128x384xbf16, #tpu.memory_space<vmem>>, vector<64x32xbf16>
    %cst_44 = arith.constant dense<0.000000e+00> : vector<64x64xf32>
    %79 = tpu.matmul %76, %77, %cst_44 {dimension_numbers = #tpu.dot_dimension_numbers<[1], [1], [0], [0], [0, 0, 1, 0], [], []>} : vector<64x32xbf16>, vector<64x32xbf16>, vector<64x64xf32> -> vector<64x64xf32>
    %80 = arith.addf %79, %10 : vector<64x64xf32>
    %cst_45 = arith.constant dense<0xFF800000> : vector<64xf32>
    %81 = vector.multi_reduction <maximumf>, %80, %cst_45 [1] : vector<64x64xf32> to vector<64xf32>
    %82 = vector.shape_cast %81 : vector<64xf32> to vector<64x1xf32>
    %83 = vector.broadcast %82 : vector<64x1xf32> to vector<64x64xf32>
    %84 = arith.subf %80, %83 : vector<64x64xf32>
    %85 = math.exp %84 : vector<64x64xf32>
    %cst_46 = arith.constant dense<0.000000e+00> : vector<64xf32>
    %86 = vector.multi_reduction <add>, %85, %cst_46 [1] : vector<64x64xf32> to vector<64xf32>
    %87 = vector.shape_cast %86 : vector<64xf32> to vector<64x1xf32>
    %88 = tpu.reciprocal %87 {approx = true} : vector<64x1xf32> -> vector<64x1xf32>
    %89 = vector.broadcast %88 : vector<64x1xf32> to vector<64x64xf32>
    %90 = arith.mulf %85, %89 : vector<64x64xf32>
    %91 = arith.truncf %90 : vector<64x64xf32> to vector<64x64xbf16>
    %cst_47 = arith.constant dense<0.000000e+00> : vector<64x32xf32>
    %92 = tpu.matmul %91, %78, %cst_47 {dimension_numbers = #tpu.dot_dimension_numbers<[1], [0], [0], [1], [0, 0, 1, 1], [], []>} : vector<64x64xbf16>, vector<64x32xbf16>, vector<64x32xf32> -> vector<64x32xf32>
    %93 = arith.truncf %92 : vector<64x32xf32> to vector<64x32xbf16>
    %c96_48 = arith.constant 96 : index
    %c0_49 = arith.constant 0 : index
    %94 = vector.load %arg3[%c96_48, %c0_49] : memref<128x128xbf16, #tpu.memory_space<vmem>>, vector<32x128xbf16>
    %cst_50 = arith.constant dense<0.000000e+00> : vector<64x128xf32>
    %95 = tpu.matmul %93, %94, %cst_50 {dimension_numbers = #tpu.dot_dimension_numbers<[1], [0], [0], [1], [0, 0, 1, 1], [], []>} : vector<64x32xbf16>, vector<32x128xbf16>, vector<64x128xf32> -> vector<64x128xf32>
    %96 = arith.addf %75, %95 : vector<64x128xf32>
    %97 = vector.broadcast %11 : vector<1x128xf32> to vector<64x128xf32>
    %98 = arith.addf %96, %97 : vector<64x128xf32>
    %c0_51 = arith.constant 0 : index
    %c0_52 = arith.constant 0 : index
    %99 = vector.load %arg5[%c0_51, %c0_52] : memref<128x128xf32, #tpu.memory_space<vmem>>, vector<64x128xf32>
    tpu.vector_store %arg5[%c0_51, %c0_52], %98 {strides = array<i32>} : memref<128x128xf32, #tpu.memory_space<vmem>>, vector<64x128xf32>,
    %cst_53 = arith.constant 0.000000e+00 : f32
    %100 = vector.broadcast %cst_53 : f32 to vector<64x128xf32>
    %c64_54 = arith.constant 64 : index
    %c0_55 = arith.constant 0 : index
    %101 = vector.load %arg6[%c64_54, %c0_55] : memref<128x384xbf16, #tpu.memory_space<vmem>>, vector<64x32xbf16>
    %c64_56 = arith.constant 64 : index
    %c128_57 = arith.constant 128 : index
    %102 = vector.load %arg6[%c64_56, %c128_57] : memref<128x384xbf16, #tpu.memory_space<vmem>>, vector<64x32xbf16>
    %c64_58 = arith.constant 64 : index
    %c256_59 = arith.constant 256 : index
    %103 = vector.load %arg6[%c64_58, %c256_59] : memref<128x384xbf16, #tpu.memory_space<vmem>>, vector<64x32xbf16>
    %cst_60 = arith.constant dense<0.000000e+00> : vector<64x64xf32>
    %104 = tpu.matmul %101, %102, %cst_60 {dimension_numbers = #tpu.dot_dimension_numbers<[1], [1], [0], [0], [0, 0, 1, 0], [], []>} : vector<64x32xbf16>, vector<64x32xbf16>, vector<64x64xf32> -> vector<64x64xf32>
    %105 = arith.addf %104, %10 : vector<64x64xf32>
    %cst_61 = arith.constant dense<0xFF800000> : vector<64xf32>
    %106 = vector.multi_reduction <maximumf>, %105, %cst_61 [1] : vector<64x64xf32> to vector<64xf32>
    %107 = vector.shape_cast %106 : vector<64xf32> to vector<64x1xf32>
    %108 = vector.broadcast %107 : vector<64x1xf32> to vector<64x64xf32>
    %109 = arith.subf %105, %108 : vector<64x64xf32>
    %110 = math.exp %109 : vector<64x64xf32>
    %cst_62 = arith.constant dense<0.000000e+00> : vector<64xf32>
    %111 = vector.multi_reduction <add>, %110, %cst_62 [1] : vector<64x64xf32> to vector<64xf32>
    %112 = vector.shape_cast %111 : vector<64xf32> to vector<64x1xf32>
    %113 = tpu.reciprocal %112 {approx = true} : vector<64x1xf32> -> vector<64x1xf32>
    %114 = vector.broadcast %113 : vector<64x1xf32> to vector<64x64xf32>
    %115 = arith.mulf %110, %114 : vector<64x64xf32>
    %116 = arith.truncf %115 : vector<64x64xf32> to vector<64x64xbf16>
    %cst_63 = arith.constant dense<0.000000e+00> : vector<64x32xf32>
    %117 = tpu.matmul %116, %103, %cst_63 {dimension_numbers = #tpu.dot_dimension_numbers<[1], [0], [0], [1], [0, 0, 1, 1], [], []>} : vector<64x64xbf16>, vector<64x32xbf16>, vector<64x32xf32> -> vector<64x32xf32>
    %118 = arith.truncf %117 : vector<64x32xf32> to vector<64x32xbf16>
    %c0_64 = arith.constant 0 : index
    %c0_65 = arith.constant 0 : index
    %119 = vector.load %arg3[%c0_64, %c0_65] : memref<128x128xbf16, #tpu.memory_space<vmem>>, vector<32x128xbf16>
    %cst_66 = arith.constant dense<0.000000e+00> : vector<64x128xf32>
    %120 = tpu.matmul %118, %119, %cst_66 {dimension_numbers = #tpu.dot_dimension_numbers<[1], [0], [0], [1], [0, 0, 1, 1], [], []>} : vector<64x32xbf16>, vector<32x128xbf16>, vector<64x128xf32> -> vector<64x128xf32>
    %121 = arith.addf %100, %120 : vector<64x128xf32>
    %c64_67 = arith.constant 64 : index
    %c32_68 = arith.constant 32 : index
    %122 = vector.load %arg6[%c64_67, %c32_68] : memref<128x384xbf16, #tpu.memory_space<vmem>>, vector<64x32xbf16>
    %c64_69 = arith.constant 64 : index
    %c160_70 = arith.constant 160 : index
    %123 = vector.load %arg6[%c64_69, %c160_70] : memref<128x384xbf16, #tpu.memory_space<vmem>>, vector<64x32xbf16>
    %c64_71 = arith.constant 64 : index
    %c288_72 = arith.constant 288 : index
    %124 = vector.load %arg6[%c64_71, %c288_72] : memref<128x384xbf16, #tpu.memory_space<vmem>>, vector<64x32xbf16>
    %cst_73 = arith.constant dense<0.000000e+00> : vector<64x64xf32>
    %125 = tpu.matmul %122, %123, %cst_73 {dimension_numbers = #tpu.dot_dimension_numbers<[1], [1], [0], [0], [0, 0, 1, 0], [], []>} : vector<64x32xbf16>, vector<64x32xbf16>, vector<64x64xf32> -> vector<64x64xf32>
    %126 = arith.addf %125, %10 : vector<64x64xf32>
    %cst_74 = arith.constant dense<0xFF800000> : vector<64xf32>
    %127 = vector.multi_reduction <maximumf>, %126, %cst_74 [1] : vector<64x64xf32> to vector<64xf32>
    %128 = vector.shape_cast %127 : vector<64xf32> to vector<64x1xf32>
    %129 = vector.broadcast %128 : vector<64x1xf32> to vector<64x64xf32>
    %130 = arith.subf %126, %129 : vector<64x64xf32>
    %131 = math.exp %130 : vector<64x64xf32>
    %cst_75 = arith.constant dense<0.000000e+00> : vector<64xf32>
    %132 = vector.multi_reduction <add>, %131, %cst_75 [1] : vector<64x64xf32> to vector<64xf32>
    %133 = vector.shape_cast %132 : vector<64xf32> to vector<64x1xf32>
    %134 = tpu.reciprocal %133 {approx = true} : vector<64x1xf32> -> vector<64x1xf32>
    %135 = vector.broadcast %134 : vector<64x1xf32> to vector<64x64xf32>
    %136 = arith.mulf %131, %135 : vector<64x64xf32>
    %137 = arith.truncf %136 : vector<64x64xf32> to vector<64x64xbf16>
    %cst_76 = arith.constant dense<0.000000e+00> : vector<64x32xf32>
    %138 = tpu.matmul %137, %124, %cst_76 {dimension_numbers = #tpu.dot_dimension_numbers<[1], [0], [0], [1], [0, 0, 1, 1], [], []>} : vector<64x64xbf16>, vector<64x32xbf16>, vector<64x32xf32> -> vector<64x32xf32>
    %139 = arith.truncf %138 : vector<64x32xf32> to vector<64x32xbf16>
    %c32_77 = arith.constant 32 : index
    %c0_78 = arith.constant 0 : index
    %140 = vector.load %arg3[%c32_77, %c0_78] : memref<128x128xbf16, #tpu.memory_space<vmem>>, vector<32x128xbf16>
    %cst_79 = arith.constant dense<0.000000e+00> : vector<64x128xf32>
    %141 = tpu.matmul %139, %140, %cst_79 {dimension_numbers = #tpu.dot_dimension_numbers<[1], [0], [0], [1], [0, 0, 1, 1], [], []>} : vector<64x32xbf16>, vector<32x128xbf16>, vector<64x128xf32> -> vector<64x128xf32>
    %142 = arith.addf %121, %141 : vector<64x128xf32>
    %c64_80 = arith.constant 64 : index
    %c64_81 = arith.constant 64 : index
    %143 = vector.load %arg6[%c64_80, %c64_81] : memref<128x384xbf16, #tpu.memory_space<vmem>>, vector<64x32xbf16>
    %c64_82 = arith.constant 64 : index
    %c192_83 = arith.constant 192 : index
    %144 = vector.load %arg6[%c64_82, %c192_83] : memref<128x384xbf16, #tpu.memory_space<vmem>>, vector<64x32xbf16>
    %c64_84 = arith.constant 64 : index
    %c320_85 = arith.constant 320 : index
    %145 = vector.load %arg6[%c64_84, %c320_85] : memref<128x384xbf16, #tpu.memory_space<vmem>>, vector<64x32xbf16>
    %cst_86 = arith.constant dense<0.000000e+00> : vector<64x64xf32>
    %146 = tpu.matmul %143, %144, %cst_86 {dimension_numbers = #tpu.dot_dimension_numbers<[1], [1], [0], [0], [0, 0, 1, 0], [], []>} : vector<64x32xbf16>, vector<64x32xbf16>, vector<64x64xf32> -> vector<64x64xf32>
    %147 = arith.addf %146, %10 : vector<64x64xf32>
    %cst_87 = arith.constant dense<0xFF800000> : vector<64xf32>
    %148 = vector.multi_reduction <maximumf>, %147, %cst_87 [1] : vector<64x64xf32> to vector<64xf32>
    %149 = vector.shape_cast %148 : vector<64xf32> to vector<64x1xf32>
    %150 = vector.broadcast %149 : vector<64x1xf32> to vector<64x64xf32>
    %151 = arith.subf %147, %150 : vector<64x64xf32>
    %152 = math.exp %151 : vector<64x64xf32>
    %cst_88 = arith.constant dense<0.000000e+00> : vector<64xf32>
    %153 = vector.multi_reduction <add>, %152, %cst_88 [1] : vector<64x64xf32> to vector<64xf32>
    %154 = vector.shape_cast %153 : vector<64xf32> to vector<64x1xf32>
    %155 = tpu.reciprocal %154 {approx = true} : vector<64x1xf32> -> vector<64x1xf32>
    %156 = vector.broadcast %155 : vector<64x1xf32> to vector<64x64xf32>
    %157 = arith.mulf %152, %156 : vector<64x64xf32>
    %158 = arith.truncf %157 : vector<64x64xf32> to vector<64x64xbf16>
    %cst_89 = arith.constant dense<0.000000e+00> : vector<64x32xf32>
    %159 = tpu.matmul %158, %145, %cst_89 {dimension_numbers = #tpu.dot_dimension_numbers<[1], [0], [0], [1], [0, 0, 1, 1], [], []>} : vector<64x64xbf16>, vector<64x32xbf16>, vector<64x32xf32> -> vector<64x32xf32>
    %160 = arith.truncf %159 : vector<64x32xf32> to vector<64x32xbf16>
    %c64_90 = arith.constant 64 : index
    %c0_91 = arith.constant 0 : index
    %161 = vector.load %arg3[%c64_90, %c0_91] : memref<128x128xbf16, #tpu.memory_space<vmem>>, vector<32x128xbf16>
    %cst_92 = arith.constant dense<0.000000e+00> : vector<64x128xf32>
    %162 = tpu.matmul %160, %161, %cst_92 {dimension_numbers = #tpu.dot_dimension_numbers<[1], [0], [0], [1], [0, 0, 1, 1], [], []>} : vector<64x32xbf16>, vector<32x128xbf16>, vector<64x128xf32> -> vector<64x128xf32>
    %163 = arith.addf %142, %162 : vector<64x128xf32>
    %c64_93 = arith.constant 64 : index
    %c96_94 = arith.constant 96 : index
    %164 = vector.load %arg6[%c64_93, %c96_94] : memref<128x384xbf16, #tpu.memory_space<vmem>>, vector<64x32xbf16>
    %c64_95 = arith.constant 64 : index
    %c224_96 = arith.constant 224 : index
    %165 = vector.load %arg6[%c64_95, %c224_96] : memref<128x384xbf16, #tpu.memory_space<vmem>>, vector<64x32xbf16>
    %c64_97 = arith.constant 64 : index
    %c352_98 = arith.constant 352 : index
    %166 = vector.load %arg6[%c64_97, %c352_98] : memref<128x384xbf16, #tpu.memory_space<vmem>>, vector<64x32xbf16>
    %cst_99 = arith.constant dense<0.000000e+00> : vector<64x64xf32>
    %167 = tpu.matmul %164, %165, %cst_99 {dimension_numbers = #tpu.dot_dimension_numbers<[1], [1], [0], [0], [0, 0, 1, 0], [], []>} : vector<64x32xbf16>, vector<64x32xbf16>, vector<64x64xf32> -> vector<64x64xf32>
    %168 = arith.addf %167, %10 : vector<64x64xf32>
    %cst_100 = arith.constant dense<0xFF800000> : vector<64xf32>
    %169 = vector.multi_reduction <maximumf>, %168, %cst_100 [1] : vector<64x64xf32> to vector<64xf32>
    %170 = vector.shape_cast %169 : vector<64xf32> to vector<64x1xf32>
    %171 = vector.broadcast %170 : vector<64x1xf32> to vector<64x64xf32>
    %172 = arith.subf %168, %171 : vector<64x64xf32>
    %173 = math.exp %172 : vector<64x64xf32>
    %cst_101 = arith.constant dense<0.000000e+00> : vector<64xf32>
    %174 = vector.multi_reduction <add>, %173, %cst_101 [1] : vector<64x64xf32> to vector<64xf32>
    %175 = vector.shape_cast %174 : vector<64xf32> to vector<64x1xf32>
    %176 = tpu.reciprocal %175 {approx = true} : vector<64x1xf32> -> vector<64x1xf32>
    %177 = vector.broadcast %176 : vector<64x1xf32> to vector<64x64xf32>
    %178 = arith.mulf %173, %177 : vector<64x64xf32>
    %179 = arith.truncf %178 : vector<64x64xf32> to vector<64x64xbf16>
    %cst_102 = arith.constant dense<0.000000e+00> : vector<64x32xf32>
    %180 = tpu.matmul %179, %166, %cst_102 {dimension_numbers = #tpu.dot_dimension_numbers<[1], [0], [0], [1], [0, 0, 1, 1], [], []>} : vector<64x64xbf16>, vector<64x32xbf16>, vector<64x32xf32> -> vector<64x32xf32>
    %181 = arith.truncf %180 : vector<64x32xf32> to vector<64x32xbf16>
    %c96_103 = arith.constant 96 : index
    %c0_104 = arith.constant 0 : index
    %182 = vector.load %arg3[%c96_103, %c0_104] : memref<128x128xbf16, #tpu.memory_space<vmem>>, vector<32x128xbf16>
    %cst_105 = arith.constant dense<0.000000e+00> : vector<64x128xf32>
    %183 = tpu.matmul %181, %182, %cst_105 {dimension_numbers = #tpu.dot_dimension_numbers<[1], [0], [0], [1], [0, 0, 1, 1], [], []>} : vector<64x32xbf16>, vector<32x128xbf16>, vector<64x128xf32> -> vector<64x128xf32>
    %184 = arith.addf %163, %183 : vector<64x128xf32>
    %185 = vector.broadcast %11 : vector<1x128xf32> to vector<64x128xf32>
    %186 = arith.addf %184, %185 : vector<64x128xf32>
    %c64_106 = arith.constant 64 : index
    %c0_107 = arith.constant 0 : index
    %187 = vector.load %arg5[%c64_106, %c0_107] : memref<128x128xf32, #tpu.memory_space<vmem>>, vector<64x128xf32>
    tpu.vector_store %arg5[%c64_106, %c0_107], %186 {strides = array<i32>} : memref<128x128xf32, #tpu.memory_space<vmem>>, vector<64x128xf32>,
    return
  }
  func.func @transform_0(%arg0: i32) -> (i32, i32) {
    %c0_i32 = arith.constant 0 : i32
    %c0_i32_0 = arith.constant 0 : i32
    %c0_i32_1 = arith.constant 0 : i32
    return %c0_i32, %c0_i32_0 : i32, i32
  }
  func.func @transform_1(%arg0: i32) -> (i32, i32) {
    %c0_i32 = arith.constant 0 : i32
    %c0_i32_0 = arith.constant 0 : i32
    %c0_i32_1 = arith.constant 0 : i32
    return %c0_i32, %c0_i32_0 : i32, i32
  }
  func.func @transform_2(%arg0: i32) -> (i32, i32) {
    %c0_i32 = arith.constant 0 : i32
    %c0_i32_0 = arith.constant 0 : i32
    %c0_i32_1 = arith.constant 0 : i32
    return %c0_i32, %c0_i32_0 : i32, i32
  }
  func.func @transform_3(%arg0: i32) -> (i32, i32) {
    %c0_i32 = arith.constant 0 : i32
    %c0_i32_0 = arith.constant 0 : i32
    %c0_i32_1 = arith.constant 0 : i32
    return %c0_i32, %c0_i32_0 : i32, i32
  }
  func.func @transform_4(%arg0: i32) -> (i32, i32) {
    %c0_i32 = arith.constant 0 : i32
    %c0_i32_0 = arith.constant 0 : i32
    %c0_i32_1 = arith.constant 0 : i32
    return %c0_i32, %c0_i32_0 : i32, i32
  }
}

</mosaic_0001>

<llo_original>
// kernel: multi_head_attention.1
$region0: #{multi_head_attention.1}
  #allocation0 [shape = 'u32[]', space=smem, size = 0x4, offset = 0x4, fixed_abs, tag = 'smem constant byte address 0x4 - core index']
  #allocation1 [shape = 'u32[144,128]{1,0:T(1,128)}', space=vmem, size = 0x12000, scoped, tag = 'internal scratch']
  #allocation2 [shape = 'bf16[128,384]{1,0:T(8,128)(2,1)}', space=vmem, size = 0x18000, scoped, tag = 'scratch operand']
  %s0 = inlined_call_operand.vmem [shape: bf16[128,128], index: 0, kind: input, shape index: {}]
  %s1 = inlined_call_operand.vmem [shape: bf16[128,384], index: 1, kind: input, shape index: {}]
  %s2 = inlined_call_operand.vmem [shape: bf16[128,128], index: 2, kind: input, shape index: {}]
  %s3 = inlined_call_operand.vmem [shape: f32[1,128], index: 3, kind: input, shape index: {}]
  %s4 = inlined_call_operand.hbm [shape: f32[128,128], index: 4, kind: output, shape index: {}]
  %s5 = sld [smem:[#allocation0]]
  $region26: #{multi_head_attention.1} parent=0
    _
  %s7 = ssub.s32 1, %s5
  %s8 = scalar_select 0, %s7, %s5
  $region1: #{multi_head_attention.1} parent=0
    #allocation3 [shape = 'u8[65536]{0}', space=vmem, size = 0x10000, scoped, tag = 'output window, operand 0, single buffered']
    #allocation4 [shape = 's32[1]{0}', space=sflag, size = 0x4, scoped, tag = 'scoped memory for multi_head_attention.1']
    %9 = vsyncpa [#allocation4], 0
    // Predicated region
    $region2: #{multi_head_attention.1} parent=1 // pred_check
      _
    $region3: #{multi_head_attention.1} parent=1 // pred_check_branch
      %11 = sbr.rel (0) target = $region5
    $region4: #{multi_head_attention.1} parent=1 // pred_region
      _
    $region5: #{multi_head_attention.1} parent=1 // pred_fallthru
      _
    // Predicated region
    $region6: #{multi_head_attention.1} parent=1 // pred_check
      _
    $region7: #{multi_head_attention.1} parent=1 // pred_check_branch
      %13 = sbr.rel (0) target = $region9
    $region8: #{multi_head_attention.1} parent=1 // pred_region
      _
    $region9: #{multi_head_attention.1} parent=1 // pred_fallthru
      _
    // Predicated region
    $region10: #{multi_head_attention.1} parent=1 // pred_check
      _
    $region11: #{multi_head_attention.1} parent=1 // pred_check_branch
      %15 = sbr.rel (0) target = $region13
    $region12: #{multi_head_attention.1} parent=1 // pred_region
      _
    $region13: #{multi_head_attention.1} parent=1 // pred_fallthru
      _
    // Predicated region
    $region14: #{multi_head_attention.1} parent=1 // pred_check
      _
    $region15: #{multi_head_attention.1} parent=1 // pred_check_branch
      %17 = sbr.rel (0) target = $region17
    $region16: #{multi_head_attention.1} parent=1 // pred_region
      _
    $region17: #{multi_head_attention.1} parent=1 // pred_fallthru
      _
    %v19 = vld [vmem:[%s0] sm:$0xf]
    %v20 = vld [vmem:[%s0 + $0x4] sm:$0xf]
    %v21 = vld [vmem:[%s0 + $0x8] sm:$0xf]
    %v22 = vld [vmem:[%s0 + $0xc] sm:$0xf]
    %v23 = vld [vmem:[%s0 + $0x10] sm:$0xf]
    %v24 = vld [vmem:[%s0 + $0x14] sm:$0xf]
    %v25 = vld [vmem:[%s0 + $0x18] sm:$0xf]
    %v26 = vld [vmem:[%s0 + $0x1c] sm:$0xf]
    %v27 = vld [vmem:[%s0 + $0x20] sm:$0xf]
    %v28 = vld [vmem:[%s0 + $0x24] sm:$0xf]
    %v29 = vld [vmem:[%s0 + $0x28] sm:$0xf]
    %v30 = vld [vmem:[%s0 + $0x2c] sm:$0xf]
    %v31 = vld [vmem:[%s0 + $0x30] sm:$0xf]
    %v32 = vld [vmem:[%s0 + $0x34] sm:$0xf]
    %v33 = vld [vmem:[%s0 + $0x38] sm:$0xf]
    %v34 = vld [vmem:[%s0 + $0x3c] sm:$0xf]
    %v35 = vld [vmem:[%s1] sm:$0xff]
    %v36 = vld [vmem:[%s1 + $0x8] sm:$0xf]
    %v37 = vld [vmem:[%s1 + $0xc] sm:$0xff]
    %v38 = vld [vmem:[%s1 + $0x14] sm:$0xf]
    %v39 = vld [vmem:[%s1 + $0x18] sm:$0xff]
    %v40 = vld [vmem:[%s1 + $0x20] sm:$0xf]
    %v41 = vld [vmem:[%s1 + $0x24] sm:$0xff]
    %v42 = vld [vmem:[%s1 + $0x2c] sm:$0xf]
    %v43 = vld [vmem:[%s1 + $0x30] sm:$0xff]
    %v44 = vld [vmem:[%s1 + $0x38] sm:$0xf]
    %v45 = vld [vmem:[%s1 + $0x3c] sm:$0xff]
    %v46 = vld [vmem:[%s1 + $0x44] sm:$0xf]
    %v47 = vld [vmem:[%s1 + $0x48] sm:$0xff]
    %v48 = vld [vmem:[%s1 + $0x50] sm:$0xf]
    %v49 = vld [vmem:[%s1 + $0x54] sm:$0xff]
    %v50 = vld [vmem:[%s1 + $0x5c] sm:$0xf]
    %v51 = vld [vmem:[%s1 + $0x60] sm:$0xff]
    %v52 = vld [vmem:[%s1 + $0x68] sm:$0xf]
    %v53 = vld [vmem:[%s1 + $0x6c] sm:$0xff]
    %v54 = vld [vmem:[%s1 + $0x74] sm:$0xf]
    %v55 = vld [vmem:[%s1 + $0x78] sm:$0xff]
    %v56 = vld [vmem:[%s1 + $0x80] sm:$0xf]
    %v57 = vld [vmem:[%s1 + $0x84] sm:$0xff]
    %v58 = vld [vmem:[%s1 + $0x8c] sm:$0xf]
    %v59 = vld [vmem:[%s1 + $0x90] sm:$0xff]
    %v60 = vld [vmem:[%s1 + $0x98] sm:$0xf]
    %v61 = vld [vmem:[%s1 + $0x9c] sm:$0xff]
    %v62 = vld [vmem:[%s1 + $0xa4] sm:$0xf]
    %v63 = vld [vmem:[%s1 + $0xa8] sm:$0xff]
    %v64 = vld [vmem:[%s1 + $0xb0] sm:$0xf]
    %v65 = vld [vmem:[%s1 + $0xb4] sm:$0xff]
    %v66 = vld [vmem:[%s1 + $0xbc] sm:$0xf]
    %v83 = vunpack.c.l.b16 %v19
    %v84 = vunpack.c.l.b16 %v20
    %v85 = vunpack.c.l.b16 %v21
    %v86 = vunpack.c.l.b16 %v22
    %v87 = vunpack.c.l.b16 %v23
    %v88 = vunpack.c.l.b16 %v24
    %v89 = vunpack.c.l.b16 %v25
    %v90 = vunpack.c.l.b16 %v26
    %v91 = vunpack.c.l.b16 %v27
    %v92 = vunpack.c.l.b16 %v28
    %v93 = vunpack.c.l.b16 %v29
    %v94 = vunpack.c.l.b16 %v30
    %v95 = vunpack.c.l.b16 %v31
    %v96 = vunpack.c.l.b16 %v32
    %v97 = vunpack.c.l.b16 %v33
    %v98 = vunpack.c.l.b16 %v34
    %v99 = vpack.c.b16 %v84, %v83
    %v100 = vpack.c.b16 %v86, %v85
    %v101 = vpack.c.b16 %v88, %v87
    %v102 = vpack.c.b16 %v90, %v89
    %v103 = vpack.c.b16 %v92, %v91
    %v104 = vpack.c.b16 %v94, %v93
    %v105 = vpack.c.b16 %v96, %v95
    %v106 = vpack.c.b16 %v98, %v97
    %v147 = vunpack.c.l.b16 %v35
    %v148 = vunpack.c.h.b16 %v35
    %v149 = vunpack.c.l.b16 %v36
    %v150 = vunpack.c.l.b16 %v37
    %v151 = vunpack.c.h.b16 %v37
    %v152 = vunpack.c.l.b16 %v38
    %v153 = vunpack.c.l.b16 %v39
    %v154 = vunpack.c.h.b16 %v39
    %v155 = vunpack.c.l.b16 %v40
    %v156 = vunpack.c.l.b16 %v41
    %v157 = vunpack.c.h.b16 %v41
    %v158 = vunpack.c.l.b16 %v42
    %v159 = vunpack.c.l.b16 %v43
    %v160 = vunpack.c.h.b16 %v43
    %v161 = vunpack.c.l.b16 %v44
    %v162 = vunpack.c.l.b16 %v45
    %v163 = vunpack.c.h.b16 %v45
    %v164 = vunpack.c.l.b16 %v46
    %v165 = vunpack.c.l.b16 %v47
    %v166 = vunpack.c.h.b16 %v47
    %v167 = vunpack.c.l.b16 %v48
    %v168 = vunpack.c.l.b16 %v49
    %v169 = vunpack.c.h.b16 %v49
    %v170 = vunpack.c.l.b16 %v50
    %v171 = vunpack.c.l.b16 %v51
    %v172 = vunpack.c.h.b16 %v51
    %v173 = vunpack.c.l.b16 %v52
    %v174 = vunpack.c.l.b16 %v53
    %v175 = vunpack.c.h.b16 %v53
    %v176 = vunpack.c.l.b16 %v54
    %v177 = vunpack.c.l.b16 %v55
    %v178 = vunpack.c.h.b16 %v55
    %v179 = vunpack.c.l.b16 %v56
    %v180 = vunpack.c.l.b16 %v57
    %v181 = vunpack.c.h.b16 %v57
    %v182 = vunpack.c.l.b16 %v58
    %v183 = vunpack.c.l.b16 %v59
    %v184 = vunpack.c.h.b16 %v59
    %v185 = vunpack.c.l.b16 %v60
    %v186 = vunpack.c.l.b16 %v61
    %v187 = vunpack.c.h.b16 %v61
    %v188 = vunpack.c.l.b16 %v62
    %v189 = vunpack.c.l.b16 %v63
    %v190 = vunpack.c.h.b16 %v63
    %v191 = vunpack.c.l.b16 %v64
    %v192 = vunpack.c.l.b16 %v65
    %v193 = vunpack.c.h.b16 %v65
    %v194 = vunpack.c.l.b16 %v66
    %v195 = vpack.c.b16 %v150, %v147
    %v196 = vpack.c.b16 %v151, %v148
    %v197 = vpack.c.b16 %v152, %v149
    %v198 = vpack.c.b16 %v156, %v153
    %v199 = vpack.c.b16 %v157, %v154
    %v200 = vpack.c.b16 %v158, %v155
    %v201 = vpack.c.b16 %v162, %v159
    %v202 = vpack.c.b16 %v163, %v160
    %v203 = vpack.c.b16 %v164, %v161
    %v204 = vpack.c.b16 %v168, %v165
    %v205 = vpack.c.b16 %v169, %v166
    %v206 = vpack.c.b16 %v170, %v167
    %v207 = vpack.c.b16 %v174, %v171
    %v208 = vpack.c.b16 %v175, %v172
    %v209 = vpack.c.b16 %v176, %v173
    %v210 = vpack.c.b16 %v180, %v177
    %v211 = vpack.c.b16 %v181, %v178
    %v212 = vpack.c.b16 %v182, %v179
    %v213 = vpack.c.b16 %v186, %v183
    %v214 = vpack.c.b16 %v187, %v184
    %v215 = vpack.c.b16 %v188, %v185
    %v216 = vpack.c.b16 %v192, %v189
    %v217 = vpack.c.b16 %v193, %v190
    %v218 = vpack.c.b16 %v194, %v191
    %243 = vmatprep.subr.bf16.mxu0 %v217
    %244 = vmatpush1.bf16.msra.mxu0 %v216
    %245 = vmatprep.subr.bf16.mxu0 %v214
    %246 = vmatpush1.bf16.msra.mxu0 %v213
    %247 = vmatprep.subr.bf16.mxu0 %v211
    %248 = vmatpush1.bf16.msra.mxu0 %v210
    %249 = vmatprep.subr.bf16.mxu0 %v208
    %250 = vmatpush1.bf16.msra.mxu0 %v207
    %251 = vmatprep.subr.bf16.mxu0 %v205
    %252 = vmatpush1.bf16.msra.mxu0 %v204
    %253 = vmatprep.subr.bf16.mxu0 %v202
    %254 = vmatpush1.bf16.msra.mxu0 %v201
    %255 = vmatprep.subr.bf16.mxu0 %v199
    %256 = vmatpush1.bf16.msra.mxu0 %v198
    %257 = vmatprep.subr.bf16.mxu0 %v196
    %258 = vmatpush1.bf16.msra.mxu0 %v195
    %259 = vmatprep.subr.bf16.mxu0 0
    %260 = vmatpush2.bf16.msra.mxu0 0
    %261 = vmatprep.subr.bf16.mxu0 0
    %262 = vmatpush2.bf16.msra.mxu0 0
    %263 = vmatprep.subr.bf16.mxu0 0
    %264 = vmatpush2.bf16.msra.mxu0 0
    %265 = vmatprep.subr.bf16.mxu0 0
    %266 = vmatpush2.bf16.msra.mxu0 0
    %267 = vmatprep.subr.bf16.mxu0 0
    %268 = vmatpush2.bf16.msra.mxu0 0
    %269 = vmatprep.subr.bf16.mxu0 0
    %270 = vmatpush2.bf16.msra.mxu0 0
    %271 = vmatprep.subr.bf16.mxu0 0
    %272 = vmatpush2.bf16.msra.mxu0 0
    %273 = vmatprep.subr.bf16.mxu0 0
    %274 = vmatpush2.bf16.msra.mxu0 0
    %275 = vmatprep.mubr.bf16.mxu0 0
    %276 = vmatmul.mubr.bf16.gmra.mxu0 %v99
    %v277 = vpop.f32.mrf.mxu0
    %v278 = vadd.f32 0.0, %v277
    %v279 = vpop.f32.mrf.mxu0
    %v280 = vadd.f32 0.0, %v279
    %v281 = vpop.f32.mrf.mxu0
    %v282 = vadd.f32 0.0, %v281
    %v283 = vpop.f32.mrf.mxu0
    %v284 = vadd.f32 0.0, %v283
    %285 = vmatprep.mubr.bf16.mxu0 0
    %286 = vmatmul.mubr.bf16.gmra.mxu0 %v100
    %v287 = vpop.f32.mrf.mxu0
    %v288 = vadd.f32 0.0, %v287
    %v289 = vpop.f32.mrf.mxu0
    %v290 = vadd.f32 0.0, %v289
    %v291 = vpop.f32.mrf.mxu0
    %v292 = vadd.f32 0.0, %v291
    %v293 = vpop.f32.mrf.mxu0
    %v294 = vadd.f32 0.0, %v293
    %295 = vmatprep.mubr.bf16.mxu0 0
    %296 = vmatmul.mubr.bf16.gmra.mxu0 %v101
    %v297 = vpop.f32.mrf.mxu0
    %v298 = vadd.f32 0.0, %v297
    %v299 = vpop.f32.mrf.mxu0
    %v300 = vadd.f32 0.0, %v299
    %v301 = vpop.f32.mrf.mxu0
    %v302 = vadd.f32 0.0, %v301
    %v303 = vpop.f32.mrf.mxu0
    %v304 = vadd.f32 0.0, %v303
    %305 = vmatprep.mubr.bf16.mxu0 0
    %306 = vmatmul.mubr.bf16.gmra.mxu0 %v102
    %v307 = vpop.f32.mrf.mxu0
    %v308 = vadd.f32 0.0, %v307
    %v309 = vpop.f32.mrf.mxu0
    %v310 = vadd.f32 0.0, %v309
    %v311 = vpop.f32.mrf.mxu0
    %v312 = vadd.f32 0.0, %v311
    %v313 = vpop.f32.mrf.mxu0
    %v314 = vadd.f32 0.0, %v313
    %315 = vmatprep.mubr.bf16.mxu0 0
    %316 = vmatmul.mubr.bf16.gmra.mxu0 %v103
    %v317 = vpop.f32.mrf.mxu0
    %v318 = vadd.f32 0.0, %v317
    %v319 = vpop.f32.mrf.mxu0
    %v320 = vadd.f32 0.0, %v319
    %v321 = vpop.f32.mrf.mxu0
    %v322 = vadd.f32 0.0, %v321
    %v323 = vpop.f32.mrf.mxu0
    %v324 = vadd.f32 0.0, %v323
    %325 = vmatprep.mubr.bf16.mxu0 0
    %326 = vmatmul.mubr.bf16.gmra.mxu0 %v104
    %v327 = vpop.f32.mrf.mxu0
    %v328 = vadd.f32 0.0, %v327
    %v329 = vpop.f32.mrf.mxu0
    %v330 = vadd.f32 0.0, %v329
    %v331 = vpop.f32.mrf.mxu0
    %v332 = vadd.f32 0.0, %v331
    %v333 = vpop.f32.mrf.mxu0
    %v334 = vadd.f32 0.0, %v333
    %335 = vmatprep.mubr.bf16.mxu0 0
    %336 = vmatmul.mubr.bf16.gmra.mxu0 %v105
    %v337 = vpop.f32.mrf.mxu0
    %v338 = vadd.f32 0.0, %v337
    %v339 = vpop.f32.mrf.mxu0
    %v340 = vadd.f32 0.0, %v339
    %v341 = vpop.f32.mrf.mxu0
    %v342 = vadd.f32 0.0, %v341
    %v343 = vpop.f32.mrf.mxu0
    %v344 = vadd.f32 0.0, %v343
    %345 = vmatprep.mubr.bf16.mxu0 0
    %346 = vmatmul.mubr.bf16.gmra.mxu0 %v106
    %v347 = vpop.f32.mrf.mxu0
    %v348 = vadd.f32 0.0, %v347
    %v349 = vpop.f32.mrf.mxu0
    %v350 = vadd.f32 0.0, %v349
    %v351 = vpop.f32.mrf.mxu0
    %v352 = vadd.f32 0.0, %v351
    %v353 = vpop.f32.mrf.mxu0
    %v354 = vadd.f32 0.0, %v353
    %355 = vdwg.mxu0
    %356 = vmatprep.subr.bf16.mxu0 0
    %357 = vmatpush1.bf16.msra.mxu0 %v218
    %358 = vmatprep.subr.bf16.mxu0 0
    %359 = vmatpush1.bf16.msra.mxu0 %v215
    %360 = vmatprep.subr.bf16.mxu0 0
    %361 = vmatpush1.bf16.msra.mxu0 %v212
    %362 = vmatprep.subr.bf16.mxu0 0
    %363 = vmatpush1.bf16.msra.mxu0 %v209
    %364 = vmatprep.subr.bf16.mxu0 0
    %365 = vmatpush1.bf16.msra.mxu0 %v206
    %366 = vmatprep.subr.bf16.mxu0 0
    %367 = vmatpush1.bf16.msra.mxu0 %v203
    %368 = vmatprep.subr.bf16.mxu0 0
    %369 = vmatpush1.bf16.msra.mxu0 %v200
    %370 = vmatprep.subr.bf16.mxu0 0
    %371 = vmatpush1.bf16.msra.mxu0 %v197
    %372 = vmatprep.subr.bf16.mxu0 0
    %373 = vmatpush2.bf16.msra.mxu0 0
    %374 = vmatprep.subr.bf16.mxu0 0
    %375 = vmatpush2.bf16.msra.mxu0 0
    %376 = vmatprep.subr.bf16.mxu0 0
    %377 = vmatpush2.bf16.msra.mxu0 0
    %378 = vmatprep.subr.bf16.mxu0 0
    %379 = vmatpush2.bf16.msra.mxu0 0
    %380 = vmatprep.subr.bf16.mxu0 0
    %381 = vmatpush2.bf16.msra.mxu0 0
    %382 = vmatprep.subr.bf16.mxu0 0
    %383 = vmatpush2.bf16.msra.mxu0 0
    %384 = vmatprep.subr.bf16.mxu0 0
    %385 = vmatpush2.bf16.msra.mxu0 0
    %386 = vmatprep.subr.bf16.mxu0 0
    %387 = vmatpush2.bf16.msra.mxu0 0
    %388 = vmatprep.mubr.bf16.mxu0 0
    %389 = vmatmul.mubr.bf16.gmra.mxu0 %v99
    %v390 = vpop.f32.mrf.mxu0
    %v391 = vadd.f32 0.0, %v390
    %v392 = vpop.f32.mrf.mxu0
    %v393 = vpop.f32.mrf.mxu0
    %v394 = vadd.f32 0.0, %v393
    %v395 = vpop.f32.mrf.mxu0
    %396 = vmatprep.mubr.bf16.mxu0 0
    %397 = vmatmul.mubr.bf16.gmra.mxu0 %v100
    %v398 = vpop.f32.mrf.mxu0
    %v399 = vadd.f32 0.0, %v398
    %v400 = vpop.f32.mrf.mxu0
    %v401 = vpop.f32.mrf.mxu0
    %v402 = vadd.f32 0.0, %v401
    %v403 = vpop.f32.mrf.mxu0
    %404 = vmatprep.mubr.bf16.mxu0 0
    %405 = vmatmul.mubr.bf16.gmra.mxu0 %v101
    %v406 = vpop.f32.mrf.mxu0
    %v407 = vadd.f32 0.0, %v406
    %v408 = vpop.f32.mrf.mxu0
    %v409 = vpop.f32.mrf.mxu0
    %v410 = vadd.f32 0.0, %v409
    %v411 = vpop.f32.mrf.mxu0
    %412 = vmatprep.mubr.bf16.mxu0 0
    %413 = vmatmul.mubr.bf16.gmra.mxu0 %v102
    %v414 = vpop.f32.mrf.mxu0
    %v415 = vadd.f32 0.0, %v414
    %v416 = vpop.f32.mrf.mxu0
    %v417 = vpop.f32.mrf.mxu0
    %v418 = vadd.f32 0.0, %v417
    %v419 = vpop.f32.mrf.mxu0
    %420 = vmatprep.mubr.bf16.mxu0 0
    %421 = vmatmul.mubr.bf16.gmra.mxu0 %v103
    %v422 = vpop.f32.mrf.mxu0
    %v423 = vadd.f32 0.0, %v422
    %v424 = vpop.f32.mrf.mxu0
    %v425 = vpop.f32.mrf.mxu0
    %v426 = vadd.f32 0.0, %v425
    %v427 = vpop.f32.mrf.mxu0
    %428 = vmatprep.mubr.bf16.mxu0 0
    %429 = vmatmul.mubr.bf16.gmra.mxu0 %v104
    %v430 = vpop.f32.mrf.mxu0
    %v431 = vadd.f32 0.0, %v430
    %v432 = vpop.f32.mrf.mxu0
    %v433 = vpop.f32.mrf.mxu0
    %v434 = vadd.f32 0.0, %v433
    %v435 = vpop.f32.mrf.mxu0
    %436 = vmatprep.mubr.bf16.mxu0 0
    %437 = vmatmul.mubr.bf16.gmra.mxu0 %v105
    %v438 = vpop.f32.mrf.mxu0
    %v439 = vadd.f32 0.0, %v438
    %v440 = vpop.f32.mrf.mxu0
    %v441 = vpop.f32.mrf.mxu0
    %v442 = vadd.f32 0.0, %v441
    %v443 = vpop.f32.mrf.mxu0
    %444 = vmatprep.mubr.bf16.mxu0 0
    %445 = vmatmul.mubr.bf16.gmra.mxu0 %v106
    %v446 = vpop.f32.mrf.mxu0
    %v447 = vadd.f32 0.0, %v446
    %v448 = vpop.f32.mrf.mxu0
    %v449 = vpop.f32.mrf.mxu0
    %v450 = vadd.f32 0.0, %v449
    %v451 = vpop.f32.mrf.mxu0
    %452 = vdwg.mxu0
    %v453 = vpack.c.bf16 %v282, %v278
    %v454 = vpack.c.bf16 %v284, %v280
    %v455 = vpack.c.bf16 %v394, %v391
    %v456 = vpack.c.bf16 %v292, %v288
    %v457 = vpack.c.bf16 %v294, %v290
    %v458 = vpack.c.bf16 %v402, %v399
    %v459 = vpack.c.bf16 %v302, %v298
    %v460 = vpack.c.bf16 %v304, %v300
    %v461 = vpack.c.bf16 %v410, %v407
    %v462 = vpack.c.bf16 %v312, %v308
    %v463 = vpack.c.bf16 %v314, %v310
    %v464 = vpack.c.bf16 %v418, %v415
    %v465 = vpack.c.bf16 %v322, %v318
    %v466 = vpack.c.bf16 %v324, %v320
    %v467 = vpack.c.bf16 %v426, %v423
    %v468 = vpack.c.bf16 %v332, %v328
    %v469 = vpack.c.bf16 %v334, %v330
    %v470 = vpack.c.bf16 %v434, %v431
    %v471 = vpack.c.bf16 %v342, %v338
    %v472 = vpack.c.bf16 %v344, %v340
    %v473 = vpack.c.bf16 %v442, %v439
    %v474 = vpack.c.bf16 %v352, %v348
    %v475 = vpack.c.bf16 %v354, %v350
    %v476 = vpack.c.bf16 %v450, %v447
    %v501 = vunpack.c.l.b16 %v453
    %v502 = vunpack.c.l.b16 %v454
    %v503 = vunpack.c.l.b16 %v455
    %v504 = vunpack.c.h.b16 %v453
    %v505 = vunpack.c.h.b16 %v454
    %v506 = vunpack.c.h.b16 %v455
    %v507 = vunpack.c.l.b16 %v456
    %v508 = vunpack.c.l.b16 %v457
    %v509 = vunpack.c.l.b16 %v458
    %v510 = vunpack.c.h.b16 %v456
    %v511 = vunpack.c.h.b16 %v457
    %v512 = vunpack.c.h.b16 %v458
    %v513 = vunpack.c.l.b16 %v459
    %v514 = vunpack.c.l.b16 %v460
    %v515 = vunpack.c.l.b16 %v461
    %v516 = vunpack.c.h.b16 %v459
    %v517 = vunpack.c.h.b16 %v460
    %v518 = vunpack.c.h.b16 %v461
    %v519 = vunpack.c.l.b16 %v462
    %v520 = vunpack.c.l.b16 %v463
    %v521 = vunpack.c.l.b16 %v464
    %v522 = vunpack.c.h.b16 %v462
    %v523 = vunpack.c.h.b16 %v463
    %v524 = vunpack.c.h.b16 %v464
    %v525 = vunpack.c.l.b16 %v465
    %v526 = vunpack.c.l.b16 %v466
    %v527 = vunpack.c.l.b16 %v467
    %v528 = vunpack.c.h.b16 %v465
    %v529 = vunpack.c.h.b16 %v466
    %v530 = vunpack.c.h.b16 %v467
    %v531 = vunpack.c.l.b16 %v468
    %v532 = vunpack.c.l.b16 %v469
    %v533 = vunpack.c.l.b16 %v470
    %v534 = vunpack.c.h.b16 %v468
    %v535 = vunpack.c.h.b16 %v469
    %v536 = vunpack.c.h.b16 %v470
    %v537 = vunpack.c.l.b16 %v471
    %v538 = vunpack.c.l.b16 %v472
    %v539 = vunpack.c.l.b16 %v473
    %v540 = vunpack.c.h.b16 %v471
    %v541 = vunpack.c.h.b16 %v472
    %v542 = vunpack.c.h.b16 %v473
    %v543 = vunpack.c.l.b16 %v474
    %v544 = vunpack.c.l.b16 %v475
    %v545 = vunpack.c.l.b16 %v476
    %v546 = vunpack.c.h.b16 %v474
    %v547 = vunpack.c.h.b16 %v475
    %v548 = vunpack.c.h.b16 %v476
    %v549 = vpack.c.b16 %v502, %v501
    %v550 = vpack.c.b16 %v503, %v503
    %v551 = vpack.c.b16 %v505, %v504
    %v552 = vpack.c.b16 %v506, %v506
    %v553 = vpack.c.b16 %v508, %v507
    %v554 = vpack.c.b16 %v509, %v509
    %v555 = vpack.c.b16 %v511, %v510
    %v556 = vpack.c.b16 %v512, %v512
    %v557 = vpack.c.b16 %v514, %v513
    %v558 = vpack.c.b16 %v515, %v515
    %v559 = vpack.c.b16 %v517, %v516
    %v560 = vpack.c.b16 %v518, %v518
    %v561 = vpack.c.b16 %v520, %v519
    %v562 = vpack.c.b16 %v521, %v521
    %v563 = vpack.c.b16 %v523, %v522
    %v564 = vpack.c.b16 %v524, %v524
    %v565 = vpack.c.b16 %v526, %v525
    %v566 = vpack.c.b16 %v527, %v527
    %v567 = vpack.c.b16 %v529, %v528
    %v568 = vpack.c.b16 %v530, %v530
    %v569 = vpack.c.b16 %v532, %v531
    %v570 = vpack.c.b16 %v533, %v533
    %v571 = vpack.c.b16 %v535, %v534
    %v572 = vpack.c.b16 %v536, %v536
    %v573 = vpack.c.b16 %v538, %v537
    %v574 = vpack.c.b16 %v539, %v539
    %v575 = vpack.c.b16 %v541, %v540
    %v576 = vpack.c.b16 %v542, %v542
    %v577 = vpack.c.b16 %v544, %v543
    %v578 = vpack.c.b16 %v545, %v545
    %v579 = vpack.c.b16 %v547, %v546
    %v580 = vpack.c.b16 %v548, %v548
    %613 = vst [vmem:[#allocation2] sm:$0xff] %v549
    %614 = vst [vmem:[#allocation2 + $0x8] sm:$0xf] %v550
    %615 = vst [vmem:[#allocation2 + $0xc] sm:$0xff] %v551
    %616 = vst [vmem:[#allocation2 + $0x14] sm:$0xf] %v552
    %617 = vst [vmem:[#allocation2 + $0x18] sm:$0xff] %v553
    %618 = vst [vmem:[#allocation2 + $0x20] sm:$0xf] %v554
    %619 = vst [vmem:[#allocation2 + $0x24] sm:$0xff] %v555
    %620 = vst [vmem:[#allocation2 + $0x2c] sm:$0xf] %v556
    %621 = vst [vmem:[#allocation2 + $0x30] sm:$0xff] %v557
    %622 = vst [vmem:[#allocation2 + $0x38] sm:$0xf] %v558
    %623 = vst [vmem:[#allocation2 + $0x3c] sm:$0xff] %v559
    %624 = vst [vmem:[#allocation2 + $0x44] sm:$0xf] %v560
    %625 = vst [vmem:[#allocation2 + $0x48] sm:$0xff] %v561
    %626 = vst [vmem:[#allocation2 + $0x50] sm:$0xf] %v562
    %627 = vst [vmem:[#allocation2 + $0x54] sm:$0xff] %v563
    %628 = vst [vmem:[#allocation2 + $0x5c] sm:$0xf] %v564
    %629 = vst [vmem:[#allocation2 + $0x60] sm:$0xff] %v565
    %630 = vst [vmem:[#allocation2 + $0x68] sm:$0xf] %v566
    %631 = vst [vmem:[#allocation2 + $0x6c] sm:$0xff] %v567
    %632 = vst [vmem:[#allocation2 + $0x74] sm:$0xf] %v568
    %633 = vst [vmem:[#allocation2 + $0x78] sm:$0xff] %v569
    %634 = vst [vmem:[#allocation2 + $0x80] sm:$0xf] %v570
    %635 = vst [vmem:[#allocation2 + $0x84] sm:$0xff] %v571
    %636 = vst [vmem:[#allocation2 + $0x8c] sm:$0xf] %v572
    %637 = vst [vmem:[#allocation2 + $0x90] sm:$0xff] %v573
    %638 = vst [vmem:[#allocation2 + $0x98] sm:$0xf] %v574
    %639 = vst [vmem:[#allocation2 + $0x9c] sm:$0xff] %v575
    %640 = vst [vmem:[#allocation2 + $0xa4] sm:$0xf] %v576
    %641 = vst [vmem:[#allocation2 + $0xa8] sm:$0xff] %v577
    %642 = vst [vmem:[#allocation2 + $0xb0] sm:$0xf] %v578
    %643 = vst [vmem:[#allocation2 + $0xb4] sm:$0xff] %v579
    %644 = vst [vmem:[#allocation2 + $0xbc] sm:$0xf] %v580
    %v645 = vlaneseq
    %v646 = vshrl.u32 %v645, 7
    %v647 = vadd.s32 %v646, 8
    %v648 = vadd.s32 %v646, 16
    %v649 = vadd.s32 %v646, 24
    %v650 = vadd.s32 %v646, 32
    %v651 = vadd.s32 %v646, 40
    %v652 = vadd.s32 %v646, 48
    %v653 = vadd.s32 %v646, 56
    %v654 = vlaneseq
    %v655 = vand.u32 %v654, 127
    %vm656 = vcmp.le.s32.totalorder %v655, %v646
    %vm657 = vcmp.le.s32.totalorder %v655, %v647
    %vm658 = vcmp.le.s32.totalorder %v655, %v648
    %vm659 = vcmp.le.s32.totalorder %v655, %v649
    %vm660 = vcmp.le.s32.totalorder %v655, %v650
    %vm661 = vcmp.le.s32.totalorder %v655, %v651
    %vm662 = vcmp.le.s32.totalorder %v655, %v652
    %vm663 = vcmp.le.s32.totalorder %v655, %v653
    %v664 = vsel %vm656, 0.0, -1e+30
    %v665 = vsel %vm657, 0.0, -1e+30
    %v666 = vsel %vm658, 0.0, -1e+30
    %v667 = vsel %vm659, 0.0, -1e+30
    %v668 = vsel %vm660, 0.0, -1e+30
    %v669 = vsel %vm661, 0.0, -1e+30
    %v670 = vsel %vm662, 0.0, -1e+30
    %v671 = vsel %vm663, 0.0, -1e+30
    %v672 = vld [vmem:[%s3] sm:$0x1]
    %v673 = vld [vmem:[#allocation2] sm:$0xf]
    %v674 = vld [vmem:[#allocation2 + $0xc] sm:$0xf]
    %v675 = vld [vmem:[#allocation2 + $0x18] sm:$0xf]
    %v676 = vld [vmem:[#allocation2 + $0x24] sm:$0xf]
    %v677 = vld [vmem:[#allocation2 + $0x30] sm:$0xf]
    %v678 = vld [vmem:[#allocation2 + $0x3c] sm:$0xf]
    %v679 = vld [vmem:[#allocation2 + $0x48] sm:$0xf]
    %v680 = vld [vmem:[#allocation2 + $0x54] sm:$0xf]
    %v681 = vld [vmem:[#allocation2 + $0x4] sm:$0xf]
    %v682 = vld [vmem:[#allocation2 + $0x10] sm:$0xf]
    %v683 = vld [vmem:[#allocation2 + $0x1c] sm:$0xf]
    %v684 = vld [vmem:[#allocation2 + $0x28] sm:$0xf]
    %v685 = vld [vmem:[#allocation2 + $0x34] sm:$0xf]
    %v686 = vld [vmem:[#allocation2 + $0x40] sm:$0xf]
    %v687 = vld [vmem:[#allocation2 + $0x4c] sm:$0xf]
    %v688 = vld [vmem:[#allocation2 + $0x58] sm:$0xf]
    %v689 = vld [vmem:[#allocation2 + $0x8] sm:$0xf]
    %v690 = vld [vmem:[#allocation2 + $0x14] sm:$0xf]
    %v691 = vld [vmem:[#allocation2 + $0x20] sm:$0xf]
    %v692 = vld [vmem:[#allocation2 + $0x2c] sm:$0xf]
    %v693 = vld [vmem:[#allocation2 + $0x38] sm:$0xf]
    %v694 = vld [vmem:[#allocation2 + $0x44] sm:$0xf]
    %v695 = vld [vmem:[#allocation2 + $0x50] sm:$0xf]
    %v696 = vld [vmem:[#allocation2 + $0x5c] sm:$0xf]
    %v705 = vunpack.c.l.b16 %v673
    %v706 = vunpack.c.l.b16 %v674
    %v707 = vunpack.c.l.b16 %v675
    %v708 = vunpack.c.l.b16 %v676
    %v709 = vunpack.c.l.b16 %v677
    %v710 = vunpack.c.l.b16 %v678
    %v711 = vunpack.c.l.b16 %v679
    %v712 = vunpack.c.l.b16 %v680
    %v713 = vpack.c.b16 %v706, %v705
    %v714 = vpack.c.b16 %v708, %v707
    %v715 = vpack.c.b16 %v710, %v709
    %v716 = vpack.c.b16 %v712, %v711
    %v725 = vunpack.c.l.b16 %v681
    %v726 = vunpack.c.l.b16 %v682
    %v727 = vunpack.c.l.b16 %v683
    %v728 = vunpack.c.l.b16 %v684
    %v729 = vunpack.c.l.b16 %v685
    %v730 = vunpack.c.l.b16 %v686
    %v731 = vunpack.c.l.b16 %v687
    %v732 = vunpack.c.l.b16 %v688
    %v733 = vpack.c.b16 %v726, %v725
    %v734 = vpack.c.b16 %v728, %v727
    %v735 = vpack.c.b16 %v730, %v729
    %v736 = vpack.c.b16 %v732, %v731
    %vm737 = vcmask 261120
    %v739 = vsel %vm737, %v713, 0
    %v742 = vsel %vm737, %v714, 0
    %v745 = vsel %vm737, %v715, 0
    %v748 = vsel %vm737, %v716, 0
    %v751 = vsel %vm737, %v733, 0
    %v754 = vsel %vm737, %v734, 0
    %v757 = vsel %vm737, %v735, 0
    %v760 = vsel %vm737, %v736, 0
    %762 = vmatprep.subr.bf16.mxu0 0
    %763 = vmatpush1.bf16.xpose.msra.mxu0 0
    %764 = vmatprep.subr.bf16.mxu0 0
    %765 = vmatpush1.bf16.xpose.msra.mxu0 0
    %766 = vmatprep.subr.bf16.mxu0 0
    %767 = vmatpush1.bf16.xpose.msra.mxu0 0
    %768 = vmatprep.subr.bf16.mxu0 0
    %769 = vmatpush1.bf16.xpose.msra.mxu0 0
    %770 = vmatprep.subr.bf16.mxu0 0
    %771 = vmatpush1.bf16.xpose.msra.mxu0 %v760
    %772 = vmatprep.subr.bf16.mxu0 0
    %773 = vmatpush1.bf16.xpose.msra.mxu0 %v757
    %774 = vmatprep.subr.bf16.mxu0 0
    %775 = vmatpush1.bf16.xpose.msra.mxu0 %v754
    %776 = vmatprep.subr.bf16.mxu0 0
    %777 = vmatpush1.bf16.xpose.msra.mxu0 %v751
    %778 = vmatprep.subr.bf16.mxu0 0
    %779 = vmatpush2.bf16.xpose.msra.mxu0 0
    %780 = vmatprep.subr.bf16.mxu0 0
    %781 = vmatpush2.bf16.xpose.msra.mxu0 0
    %782 = vmatprep.subr.bf16.mxu0 0
    %783 = vmatpush2.bf16.xpose.msra.mxu0 0
    %784 = vmatprep.subr.bf16.mxu0 0
    %785 = vmatpush2.bf16.xpose.msra.mxu0 0
    %786 = vmatprep.subr.bf16.mxu0 0
    %787 = vmatpush2.bf16.xpose.msra.mxu0 0
    %788 = vmatprep.subr.bf16.mxu0 0
    %789 = vmatpush2.bf16.xpose.msra.mxu0 0
    %790 = vmatprep.subr.bf16.mxu0 0
    %791 = vmatpush2.bf16.xpose.msra.mxu0 0
    %792 = vmatprep.subr.bf16.mxu0 0
    %793 = vmatpush2.bf16.xpose.msra.mxu0 0
    %794 = vmatprep.mubr.bf16.mxu0 0
    %795 = vmatmul.mubr.bf16.gmra.mxu0 %v739
    %v796 = vpop.f32.mrf.mxu0
    %v797 = vadd.f32 %v664, %v796
    %v798 = vpop.f32.mrf.mxu0
    %v799 = vpop.f32.mrf.mxu0
    %v800 = vadd.f32 %v665, %v799
    %v801 = vpop.f32.mrf.mxu0
    %802 = vmatprep.mubr.bf16.mxu0 0
    %803 = vmatmul.mubr.bf16.gmra.mxu0 %v742
    %v804 = vpop.f32.mrf.mxu0
    %v805 = vadd.f32 %v666, %v804
    %v806 = vpop.f32.mrf.mxu0
    %v807 = vpop.f32.mrf.mxu0
    %v808 = vadd.f32 %v667, %v807
    %v809 = vpop.f32.mrf.mxu0
    %810 = vmatprep.mubr.bf16.mxu0 0
    %811 = vmatmul.mubr.bf16.gmra.mxu0 %v745
    %v812 = vpop.f32.mrf.mxu0
    %v813 = vadd.f32 %v668, %v812
    %v814 = vpop.f32.mrf.mxu0
    %v815 = vpop.f32.mrf.mxu0
    %v816 = vadd.f32 %v669, %v815
    %v817 = vpop.f32.mrf.mxu0
    %818 = vmatprep.mubr.bf16.mxu0 0
    %819 = vmatmul.mubr.bf16.gmra.mxu0 %v748
    %v820 = vpop.f32.mrf.mxu0
    %v821 = vadd.f32 %v670, %v820
    %v822 = vpop.f32.mrf.mxu0
    %v823 = vpop.f32.mrf.mxu0
    %v824 = vadd.f32 %v671, %v823
    %v825 = vpop.f32.mrf.mxu0
    %826 = vdwg.mxu0
    %vm827 = vcmask 523264
    %v828 = vsel %vm827, %v797, -inf
    %829 = vmax.xlane.f32.xlu0 %v828
    %v830 = vpop.xlane.xlu0 %829
    %v831 = vsel %vm827, %v800, -inf
    %832 = vmax.xlane.f32.xlu0 %v831
    %v833 = vpop.xlane.xlu0 %832
    %v834 = vsel %vm827, %v805, -inf
    %835 = vmax.xlane.f32.xlu0 %v834
    %v836 = vpop.xlane.xlu0 %835
    %v837 = vsel %vm827, %v808, -inf
    %838 = vmax.xlane.f32.xlu0 %v837
    %v839 = vpop.xlane.xlu0 %838
    %v840 = vsel %vm827, %v813, -inf
    %841 = vmax.xlane.f32.xlu0 %v840
    %v842 = vpop.xlane.xlu0 %841
    %v843 = vsel %vm827, %v816, -inf
    %844 = vmax.xlane.f32.xlu0 %v843
    %v845 = vpop.xlane.xlu0 %844
    %v846 = vsel %vm827, %v821, -inf
    %847 = vmax.xlane.f32.xlu0 %v846
    %v848 = vpop.xlane.xlu0 %847
    %v849 = vsel %vm827, %v824, -inf
    %850 = vmax.xlane.f32.xlu0 %v849
    %v851 = vpop.xlane.xlu0 %850
    %v852 = vsub.f32 %v797, %v830
    %v853 = vsub.f32 %v800, %v833
    %v854 = vsub.f32 %v805, %v836
    %v855 = vsub.f32 %v808, %v839
    %v856 = vsub.f32 %v813, %v842
    %v857 = vsub.f32 %v816, %v845
    %v858 = vsub.f32 %v821, %v848
    %v859 = vsub.f32 %v824, %v851
    %v860 = vmul.f32 %v852, 1.442695
    %v861 = vpow.pop %v860
    %v862 = vmul.f32 %v853, 1.442695
    %v863 = vpow.pop %v862
    %v864 = vmul.f32 %v854, 1.442695
    %v865 = vpow.pop %v864
    %v866 = vmul.f32 %v855, 1.442695
    %v867 = vpow.pop %v866
    %v868 = vmul.f32 %v856, 1.442695
    %v869 = vpow.pop %v868
    %v870 = vmul.f32 %v857, 1.442695
    %v871 = vpow.pop %v870
    %v872 = vmul.f32 %v858, 1.442695
    %v873 = vpow.pop %v872
    %v874 = vmul.f32 %v859, 1.442695
    %v875 = vpow.pop %v874
    %v876 = vsel %vm827, %v861, 0.0
    %877 = vadd.xlane.f32.xlu0 %v876
    %v878 = vpop.xlane.xlu0 %877
    %v879 = vsel %vm827, %v863, 0.0
    %880 = vadd.xlane.f32.xlu0 %v879
    %v881 = vpop.xlane.xlu0 %880
    %v882 = vsel %vm827, %v865, 0.0
    %883 = vadd.xlane.f32.xlu0 %v882
    %v884 = vpop.xlane.xlu0 %883
    %v885 = vsel %vm827, %v867, 0.0
    %886 = vadd.xlane.f32.xlu0 %v885
    %v887 = vpop.xlane.xlu0 %886
    %v888 = vsel %vm827, %v869, 0.0
    %889 = vadd.xlane.f32.xlu0 %v888
    %v890 = vpop.xlane.xlu0 %889
    %v891 = vsel %vm827, %v871, 0.0
    %892 = vadd.xlane.f32.xlu0 %v891
    %v893 = vpop.xlane.xlu0 %892
    %v894 = vsel %vm827, %v873, 0.0
    %895 = vadd.xlane.f32.xlu0 %v894
    %v896 = vpop.xlane.xlu0 %895
    %v897 = vsel %vm827, %v875, 0.0
    %898 = vadd.xlane.f32.xlu0 %v897
    %v899 = vpop.xlane.xlu0 %898
    %v900 = vrcp.pop %v878
    %v901 = vrcp.pop %v881
    %v902 = vrcp.pop %v884
    %v903 = vrcp.pop %v887
    %v904 = vrcp.pop %v890
    %v905 = vrcp.pop %v893
    %v906 = vrcp.pop %v896
    %v907 = vrcp.pop %v899
    %v908 = vmul.f32 %v861, %v900
    %v909 = vmul.f32 %v863, %v901
    %v910 = vmul.f32 %v865, %v902
    %v911 = vmul.f32 %v867, %v903
    %v912 = vmul.f32 %v869, %v904
    %v913 = vmul.f32 %v871, %v905
    %v914 = vmul.f32 %v873, %v906
    %v915 = vmul.f32 %v875, %v907
    %v916 = vpack.c.bf16 %v909, %v908
    %v917 = vpack.c.bf16 %v911, %v910
    %v918 = vpack.c.bf16 %v913, %v912
    %v919 = vpack.c.bf16 %v915, %v914
    %v928 = vunpack.c.l.b16 %v689
    %v929 = vunpack.c.l.b16 %v690
    %v930 = vunpack.c.l.b16 %v691
    %v931 = vunpack.c.l.b16 %v692
    %v932 = vunpack.c.l.b16 %v693
    %v933 = vunpack.c.l.b16 %v694
    %v934 = vunpack.c.l.b16 %v695
    %v935 = vunpack.c.l.b16 %v696
    %v936 = vpack.c.b16 %v929, %v928
    %v937 = vpack.c.b16 %v931, %v930
    %v938 = vpack.c.b16 %v933, %v932
    %v939 = vpack.c.b16 %v935, %v934
    %v945 = vsel %vm827, %v916, 0
    %v948 = vsel %vm827, %v917, 0
    %v951 = vsel %vm827, %v918, 0
    %v954 = vsel %vm827, %v919, 0
    %956 = vmatprep.subr.bf16.mxu0 0
    %957 = vmatpush1.bf16.msra.mxu0 0
    %958 = vmatprep.subr.bf16.mxu0 0
    %959 = vmatpush1.bf16.msra.mxu0 0
    %960 = vmatprep.subr.bf16.mxu0 0
    %961 = vmatpush1.bf16.msra.mxu0 0
    %962 = vmatprep.subr.bf16.mxu0 0
    %963 = vmatpush1.bf16.msra.mxu0 0
    %964 = vmatprep.subr.bf16.mxu0 0
    %965 = vmatpush1.bf16.msra.mxu0 %v939
    %966 = vmatprep.subr.bf16.mxu0 0
    %967 = vmatpush1.bf16.msra.mxu0 %v938
    %968 = vmatprep.subr.bf16.mxu0 0
    %969 = vmatpush1.bf16.msra.mxu0 %v937
    %970 = vmatprep.subr.bf16.mxu0 0
    %971 = vmatpush1.bf16.msra.mxu0 %v936
    %972 = vmatprep.subr.bf16.mxu0 0
    %973 = vmatpush2.bf16.msra.mxu0 0
    %974 = vmatprep.subr.bf16.mxu0 0
    %975 = vmatpush2.bf16.msra.mxu0 0
    %976 = vmatprep.subr.bf16.mxu0 0
    %977 = vmatpush2.bf16.msra.mxu0 0
    %978 = vmatprep.subr.bf16.mxu0 0
    %979 = vmatpush2.bf16.msra.mxu0 0
    %980 = vmatprep.subr.bf16.mxu0 0
    %981 = vmatpush2.bf16.msra.mxu0 0
    %982 = vmatprep.subr.bf16.mxu0 0
    %983 = vmatpush2.bf16.msra.mxu0 0
    %984 = vmatprep.subr.bf16.mxu0 0
    %985 = vmatpush2.bf16.msra.mxu0 0
    %986 = vmatprep.subr.bf16.mxu0 0
    %987 = vmatpush2.bf16.msra.mxu0 0
    %988 = vmatprep.mubr.bf16.mxu0 0
    %989 = vmatmul.mubr.bf16.gmra.mxu0 %v945
    %v990 = vpop.f32.mrf.mxu0
    %v991 = vadd.f32 0.0, %v990
    %v992 = vpop.f32.mrf.mxu0
    %v993 = vpop.f32.mrf.mxu0
    %v994 = vadd.f32 0.0, %v993
    %v995 = vpop.f32.mrf.mxu0
    %996 = vmatprep.mubr.bf16.mxu0 0
    %997 = vmatmul.mubr.bf16.gmra.mxu0 %v948
    %v998 = vpop.f32.mrf.mxu0
    %v999 = vadd.f32 0.0, %v998
    %v1000 = vpop.f32.mrf.mxu0
    %v1001 = vpop.f32.mrf.mxu0
    %v1002 = vadd.f32 0.0, %v1001
    %v1003 = vpop.f32.mrf.mxu0
    %1004 = vmatprep.mubr.bf16.mxu0 0
    %1005 = vmatmul.mubr.bf16.gmra.mxu0 %v951
    %v1006 = vpop.f32.mrf.mxu0
    %v1007 = vadd.f32 0.0, %v1006
    %v1008 = vpop.f32.mrf.mxu0
    %v1009 = vpop.f32.mrf.mxu0
    %v1010 = vadd.f32 0.0, %v1009
    %v1011 = vpop.f32.mrf.mxu0
    %1012 = vmatprep.mubr.bf16.mxu0 0
    %1013 = vmatmul.mubr.bf16.gmra.mxu0 %v954
    %v1014 = vpop.f32.mrf.mxu0
    %v1015 = vadd.f32 0.0, %v1014
    %v1016 = vpop.f32.mrf.mxu0
    %v1017 = vpop.f32.mrf.mxu0
    %v1018 = vadd.f32 0.0, %v1017
    %v1019 = vpop.f32.mrf.mxu0
    %1020 = vdwg.mxu0
    %v1021 = vpack.c.bf16 %v994, %v991
    %v1022 = vpack.c.bf16 %v1002, %v999
    %v1023 = vpack.c.bf16 %v1010, %v1007
    %v1024 = vpack.c.bf16 %v1018, %v1015
    %v1025 = vld [vmem:[%s2] sm:$0xf]
    %v1026 = vld [vmem:[%s2 + $0x4] sm:$0xf]
    %v1027 = vld [vmem:[%s2 + $0x8] sm:$0xf]
    %v1028 = vld [vmem:[%s2 + $0xc] sm:$0xf]
    %1029 = vrot.lane.b32.xlu0 %v713, 96
    %v1030 = vpop.permute.xlu0 %1029
    %1031 = vrot.lane.b32.xlu0 %v714, 96
    %v1032 = vpop.permute.xlu0 %1031
    %1033 = vrot.lane.b32.xlu0 %v715, 96
    %v1034 = vpop.permute.xlu0 %1033
    %1035 = vrot.lane.b32.xlu0 %v716, 96
    %v1036 = vpop.permute.xlu0 %1035
    %1037 = vrot.lane.b32.xlu0 %v733, 96
    %v1038 = vpop.permute.xlu0 %1037
    %1039 = vrot.lane.b32.xlu0 %v734, 96
    %v1040 = vpop.permute.xlu0 %1039
    %1041 = vrot.lane.b32.xlu0 %v735, 96
    %v1042 = vpop.permute.xlu0 %1041
    %1043 = vrot.lane.b32.xlu0 %v736, 96
    %v1044 = vpop.permute.xlu0 %1043
    %v1046 = vsel %vm737, %v1030, 0
    %v1049 = vsel %vm737, %v1032, 0
    %v1052 = vsel %vm737, %v1034, 0
    %v1055 = vsel %vm737, %v1036, 0
    %v1058 = vsel %vm737, %v1038, 0
    %v1061 = vsel %vm737, %v1040, 0
    %v1064 = vsel %vm737, %v1042, 0
    %v1067 = vsel %vm737, %v1044, 0
    %1069 = vmatprep.subr.bf16.mxu0 0
    %1070 = vmatpush1.bf16.xpose.msra.mxu0 0
    %1071 = vmatprep.subr.bf16.mxu0 0
    %1072 = vmatpush1.bf16.xpose.msra.mxu0 0
    %1073 = vmatprep.subr.bf16.mxu0 0
    %1074 = vmatpush1.bf16.xpose.msra.mxu0 0
    %1075 = vmatprep.subr.bf16.mxu0 0
    %1076 = vmatpush1.bf16.xpose.msra.mxu0 0
    %1077 = vmatprep.subr.bf16.mxu0 0
    %1078 = vmatpush1.bf16.xpose.msra.mxu0 %v1067
    %1079 = vmatprep.subr.bf16.mxu0 0
    %1080 = vmatpush1.bf16.xpose.msra.mxu0 %v1064
    %1081 = vmatprep.subr.bf16.mxu0 0
    %1082 = vmatpush1.bf16.xpose.msra.mxu0 %v1061
    %1083 = vmatprep.subr.bf16.mxu0 0
    %1084 = vmatpush1.bf16.xpose.msra.mxu0 %v1058
    %1085 = vmatprep.subr.bf16.mxu0 0
    %1086 = vmatpush2.bf16.xpose.msra.mxu0 0
    %1087 = vmatprep.subr.bf16.mxu0 0
    %1088 = vmatpush2.bf16.xpose.msra.mxu0 0
    %1089 = vmatprep.subr.bf16.mxu0 0
    %1090 = vmatpush2.bf16.xpose.msra.mxu0 0
    %1091 = vmatprep.subr.bf16.mxu0 0
    %1092 = vmatpush2.bf16.xpose.msra.mxu0 0
    %1093 = vmatprep.subr.bf16.mxu0 0
    %1094 = vmatpush2.bf16.xpose.msra.mxu0 0
    %1095 = vmatprep.subr.bf16.mxu0 0
    %1096 = vmatpush2.bf16.xpose.msra.mxu0 0
    %1097 = vmatprep.subr.bf16.mxu0 0
    %1098 = vmatpush2.bf16.xpose.msra.mxu0 0
    %1099 = vmatprep.subr.bf16.mxu0 0
    %1100 = vmatpush2.bf16.xpose.msra.mxu0 0
    %1101 = vmatprep.mubr.bf16.mxu0 0
    %1102 = vmatmul.mubr.bf16.gmra.mxu0 %v1046
    %v1103 = vpop.f32.mrf.mxu0
    %v1104 = vadd.f32 %v664, %v1103
    %v1105 = vpop.f32.mrf.mxu0
    %v1106 = vpop.f32.mrf.mxu0
    %v1107 = vadd.f32 %v665, %v1106
    %v1108 = vpop.f32.mrf.mxu0
    %1109 = vmatprep.mubr.bf16.mxu0 0
    %1110 = vmatmul.mubr.bf16.gmra.mxu0 %v1049
    %v1111 = vpop.f32.mrf.mxu0
    %v1112 = vadd.f32 %v666, %v1111
    %v1113 = vpop.f32.mrf.mxu0
    %v1114 = vpop.f32.mrf.mxu0
    %v1115 = vadd.f32 %v667, %v1114
    %v1116 = vpop.f32.mrf.mxu0
    %1117 = vmatprep.mubr.bf16.mxu0 0
    %1118 = vmatmul.mubr.bf16.gmra.mxu0 %v1052
    %v1119 = vpop.f32.mrf.mxu0
    %v1120 = vadd.f32 %v668, %v1119
    %v1121 = vpop.f32.mrf.mxu0
    %v1122 = vpop.f32.mrf.mxu0
    %v1123 = vadd.f32 %v669, %v1122
    %v1124 = vpop.f32.mrf.mxu0
    %1125 = vmatprep.mubr.bf16.mxu0 0
    %1126 = vmatmul.mubr.bf16.gmra.mxu0 %v1055
    %v1127 = vpop.f32.mrf.mxu0
    %v1128 = vadd.f32 %v670, %v1127
    %v1129 = vpop.f32.mrf.mxu0
    %v1130 = vpop.f32.mrf.mxu0
    %v1131 = vadd.f32 %v671, %v1130
    %v1132 = vpop.f32.mrf.mxu0
    %1133 = vdwg.mxu0
    %v1134 = vsel %vm827, %v1104, -inf
    %1135 = vmax.xlane.f32.xlu0 %v1134
    %v1136 = vpop.xlane.xlu0 %1135
    %v1137 = vsel %vm827, %v1107, -inf
    %1138 = vmax.xlane.f32.xlu0 %v1137
    %v1139 = vpop.xlane.xlu0 %1138
    %v1140 = vsel %vm827, %v1112, -inf
    %1141 = vmax.xlane.f32.xlu0 %v1140
    %v1142 = vpop.xlane.xlu0 %1141
    %v1143 = vsel %vm827, %v1115, -inf
    %1144 = vmax.xlane.f32.xlu0 %v1143
    %v1145 = vpop.xlane.xlu0 %1144
    %v1146 = vsel %vm827, %v1120, -inf
    %1147 = vmax.xlane.f32.xlu0 %v1146
    %v1148 = vpop.xlane.xlu0 %1147
    %v1149 = vsel %vm827, %v1123, -inf
    %1150 = vmax.xlane.f32.xlu0 %v1149
    %v1151 = vpop.xlane.xlu0 %1150
    %v1152 = vsel %vm827, %v1128, -inf
    %1153 = vmax.xlane.f32.xlu0 %v1152
    %v1154 = vpop.xlane.xlu0 %1153
    %v1155 = vsel %vm827, %v1131, -inf
    %1156 = vmax.xlane.f32.xlu0 %v1155
    %v1157 = vpop.xlane.xlu0 %1156
    %v1158 = vsub.f32 %v1104, %v1136
    %v1159 = vsub.f32 %v1107, %v1139
    %v1160 = vsub.f32 %v1112, %v1142
    %v1161 = vsub.f32 %v1115, %v1145
    %v1162 = vsub.f32 %v1120, %v1148
    %v1163 = vsub.f32 %v1123, %v1151
    %v1164 = vsub.f32 %v1128, %v1154
    %v1165 = vsub.f32 %v1131, %v1157
    %v1166 = vmul.f32 %v1158, 1.442695
    %v1167 = vpow.pop %v1166
    %v1168 = vmul.f32 %v1159, 1.442695
    %v1169 = vpow.pop %v1168
    %v1170 = vmul.f32 %v1160, 1.442695
    %v1171 = vpow.pop %v1170
    %v1172 = vmul.f32 %v1161, 1.442695
    %v1173 = vpow.pop %v1172
    %v1174 = vmul.f32 %v1162, 1.442695
    %v1175 = vpow.pop %v1174
    %v1176 = vmul.f32 %v1163, 1.442695
    %v1177 = vpow.pop %v1176
    %v1178 = vmul.f32 %v1164, 1.442695
    %v1179 = vpow.pop %v1178
    %v1180 = vmul.f32 %v1165, 1.442695
    %v1181 = vpow.pop %v1180
    %v1182 = vsel %vm827, %v1167, 0.0
    %1183 = vadd.xlane.f32.xlu0 %v1182
    %v1184 = vpop.xlane.xlu0 %1183
    %v1185 = vsel %vm827, %v1169, 0.0
    %1186 = vadd.xlane.f32.xlu0 %v1185
    %v1187 = vpop.xlane.xlu0 %1186
    %v1188 = vsel %vm827, %v1171, 0.0
    %1189 = vadd.xlane.f32.xlu0 %v1188
    %v1190 = vpop.xlane.xlu0 %1189
    %v1191 = vsel %vm827, %v1173, 0.0
    %1192 = vadd.xlane.f32.xlu0 %v1191
    %v1193 = vpop.xlane.xlu0 %1192
    %v1194 = vsel %vm827, %v1175, 0.0
    %1195 = vadd.xlane.f32.xlu0 %v1194
    %v1196 = vpop.xlane.xlu0 %1195
    %v1197 = vsel %vm827, %v1177, 0.0
    %1198 = vadd.xlane.f32.xlu0 %v1197
    %v1199 = vpop.xlane.xlu0 %1198
    %v1200 = vsel %vm827, %v1179, 0.0
    %1201 = vadd.xlane.f32.xlu0 %v1200
    %v1202 = vpop.xlane.xlu0 %1201
    %v1203 = vsel %vm827, %v1181, 0.0
    %1204 = vadd.xlane.f32.xlu0 %v1203
    %v1205 = vpop.xlane.xlu0 %1204
    %v1206 = vrcp.pop %v1184
    %v1207 = vrcp.pop %v1187
    %v1208 = vrcp.pop %v1190
    %v1209 = vrcp.pop %v1193
    %v1210 = vrcp.pop %v1196
    %v1211 = vrcp.pop %v1199
    %v1212 = vrcp.pop %v1202
    %v1213 = vrcp.pop %v1205
    %v1214 = vmul.f32 %v1167, %v1206
    %v1215 = vmul.f32 %v1169, %v1207
    %v1216 = vmul.f32 %v1171, %v1208
    %v1217 = vmul.f32 %v1173, %v1209
    %v1218 = vmul.f32 %v1175, %v1210
    %v1219 = vmul.f32 %v1177, %v1211
    %v1220 = vmul.f32 %v1179, %v1212
    %v1221 = vmul.f32 %v1181, %v1213
    %v1222 = vpack.c.bf16 %v1215, %v1214
    %v1223 = vpack.c.bf16 %v1217, %v1216
    %v1224 = vpack.c.bf16 %v1219, %v1218
    %v1225 = vpack.c.bf16 %v1221, %v1220
    %1226 = vrot.lane.b32.xlu0 %v936, 96
    %v1227 = vpop.permute.xlu0 %1226
    %1228 = vrot.lane.b32.xlu0 %v937, 96
    %v1229 = vpop.permute.xlu0 %1228
    %1230 = vrot.lane.b32.xlu0 %v938, 96
    %v1231 = vpop.permute.xlu0 %1230
    %1232 = vrot.lane.b32.xlu0 %v939, 96
    %v1233 = vpop.permute.xlu0 %1232
    %v1239 = vsel %vm827, %v1222, 0
    %v1242 = vsel %vm827, %v1223, 0
    %v1245 = vsel %vm827, %v1224, 0
    %v1248 = vsel %vm827, %v1225, 0
    %1250 = vmatprep.subr.bf16.mxu0 0
    %1251 = vmatpush1.bf16.msra.mxu0 0
    %1252 = vmatprep.subr.bf16.mxu0 0
    %1253 = vmatpush1.bf16.msra.mxu0 0
    %1254 = vmatprep.subr.bf16.mxu0 0
    %1255 = vmatpush1.bf16.msra.mxu0 0
    %1256 = vmatprep.subr.bf16.mxu0 0
    %1257 = vmatpush1.bf16.msra.mxu0 0
    %1258 = vmatprep.subr.bf16.mxu0 0
    %1259 = vmatpush1.bf16.msra.mxu0 %v1233
    %1260 = vmatprep.subr.bf16.mxu0 0
    %1261 = vmatpush1.bf16.msra.mxu0 %v1231
    %1262 = vmatprep.subr.bf16.mxu0 0
    %1263 = vmatpush1.bf16.msra.mxu0 %v1229
    %1264 = vmatprep.subr.bf16.mxu0 0
    %1265 = vmatpush1.bf16.msra.mxu0 %v1227
    %1266 = vmatprep.subr.bf16.mxu0 0
    %1267 = vmatpush2.bf16.msra.mxu0 0
    %1268 = vmatprep.subr.bf16.mxu0 0
    %1269 = vmatpush2.bf16.msra.mxu0 0
    %1270 = vmatprep.subr.bf16.mxu0 0
    %1271 = vmatpush2.bf16.msra.mxu0 0
    %1272 = vmatprep.subr.bf16.mxu0 0
    %1273 = vmatpush2.bf16.msra.mxu0 0
    %1274 = vmatprep.subr.bf16.mxu0 0
    %1275 = vmatpush2.bf16.msra.mxu0 0
    %1276 = vmatprep.subr.bf16.mxu0 0
    %1277 = vmatpush2.bf16.msra.mxu0 0
    %1278 = vmatprep.subr.bf16.mxu0 0
    %1279 = vmatpush2.bf16.msra.mxu0 0
    %1280 = vmatprep.subr.bf16.mxu0 0
    %1281 = vmatpush2.bf16.msra.mxu0 0
    %1282 = vmatprep.mubr.bf16.mxu0 0
    %1283 = vmatmul.mubr.bf16.gmra.mxu0 %v1239
    %v1284 = vpop.f32.mrf.mxu0
    %v1285 = vadd.f32 0.0, %v1284
    %v1286 = vpop.f32.mrf.mxu0
    %v1287 = vpop.f32.mrf.mxu0
    %v1288 = vadd.f32 0.0, %v1287
    %v1289 = vpop.f32.mrf.mxu0
    %1290 = vmatprep.mubr.bf16.mxu0 0
    %1291 = vmatmul.mubr.bf16.gmra.mxu0 %v1242
    %v1292 = vpop.f32.mrf.mxu0
    %v1293 = vadd.f32 0.0, %v1292
    %v1294 = vpop.f32.mrf.mxu0
    %v1295 = vpop.f32.mrf.mxu0
    %v1296 = vadd.f32 0.0, %v1295
    %v1297 = vpop.f32.mrf.mxu0
    %1298 = vmatprep.mubr.bf16.mxu0 0
    %1299 = vmatmul.mubr.bf16.gmra.mxu0 %v1245
    %v1300 = vpop.f32.mrf.mxu0
    %v1301 = vadd.f32 0.0, %v1300
    %v1302 = vpop.f32.mrf.mxu0
    %v1303 = vpop.f32.mrf.mxu0
    %v1304 = vadd.f32 0.0, %v1303
    %v1305 = vpop.f32.mrf.mxu0
    %1306 = vmatprep.mubr.bf16.mxu0 0
    %1307 = vmatmul.mubr.bf16.gmra.mxu0 %v1248
    %v1308 = vpop.f32.mrf.mxu0
    %v1309 = vadd.f32 0.0, %v1308
    %v1310 = vpop.f32.mrf.mxu0
    %v1311 = vpop.f32.mrf.mxu0
    %v1312 = vadd.f32 0.0, %v1311
    %v1313 = vpop.f32.mrf.mxu0
    %1314 = vdwg.mxu0
    %v1315 = vpack.c.bf16 %v1288, %v1285
    %v1316 = vpack.c.bf16 %v1296, %v1293
    %v1317 = vpack.c.bf16 %v1304, %v1301
    %v1318 = vpack.c.bf16 %v1312, %v1309
    %v1319 = vld [vmem:[%s2 + $0x10] sm:$0xf]
    %v1320 = vld [vmem:[%s2 + $0x14] sm:$0xf]
    %v1321 = vld [vmem:[%s2 + $0x18] sm:$0xf]
    %v1322 = vld [vmem:[%s2 + $0x1c] sm:$0xf]
    %v1327 = vunpack.c.l.b16 %v1319
    %v1328 = vunpack.c.l.b16 %v1320
    %v1329 = vunpack.c.l.b16 %v1321
    %v1330 = vunpack.c.l.b16 %v1322
    %v1331 = vpack.c.b16 %v1328, %v1327
    %v1332 = vpack.c.b16 %v1330, %v1329
    %v1336 = vsel %vm737, %v1315, 0
    %v1339 = vsel %vm737, %v1316, 0
    %v1342 = vsel %vm737, %v1317, 0
    %v1345 = vsel %vm737, %v1318, 0
    %1347 = vmatprep.subr.bf16.mxu0 0
    %1348 = vmatpush1.bf16.msra.mxu0 0
    %1349 = vmatprep.subr.bf16.mxu0 0
    %1350 = vmatpush1.bf16.msra.mxu0 0
    %1351 = vmatprep.subr.bf16.mxu0 0
    %1352 = vmatpush1.bf16.msra.mxu0 0
    %1353 = vmatprep.subr.bf16.mxu0 0
    %1354 = vmatpush1.bf16.msra.mxu0 0
    %1355 = vmatprep.subr.bf16.mxu0 0
    %1356 = vmatpush1.bf16.msra.mxu0 0
    %1357 = vmatprep.subr.bf16.mxu0 0
    %1358 = vmatpush1.bf16.msra.mxu0 0
    %1359 = vmatprep.subr.bf16.mxu0 0
    %1360 = vmatpush1.bf16.msra.mxu0 %v1332
    %1361 = vmatprep.subr.bf16.mxu0 0
    %1362 = vmatpush1.bf16.msra.mxu0 %v1331
    %1363 = vmatprep.subr.bf16.mxu0 0
    %1364 = vmatpush2.bf16.msra.mxu0 0
    %1365 = vmatprep.subr.bf16.mxu0 0
    %1366 = vmatpush2.bf16.msra.mxu0 0
    %1367 = vmatprep.subr.bf16.mxu0 0
    %1368 = vmatpush2.bf16.msra.mxu0 0
    %1369 = vmatprep.subr.bf16.mxu0 0
    %1370 = vmatpush2.bf16.msra.mxu0 0
    %1371 = vmatprep.subr.bf16.mxu0 0
    %1372 = vmatpush2.bf16.msra.mxu0 0
    %1373 = vmatprep.subr.bf16.mxu0 0
    %1374 = vmatpush2.bf16.msra.mxu0 0
    %1375 = vmatprep.subr.bf16.mxu0 0
    %1376 = vmatpush2.bf16.msra.mxu0 0
    %1377 = vmatprep.subr.bf16.mxu0 0
    %1378 = vmatpush2.bf16.msra.mxu0 0
    %1379 = vmatprep.mubr.bf16.mxu0 0
    %1380 = vmatmul.mubr.bf16.gmra.mxu0 %v1336
    %v1381 = vpop.f32.mrf.mxu0
    %v1382 = vadd.f32 0.0, %v1381
    %v1383 = vpop.f32.mrf.mxu0
    %v1384 = vpop.f32.mrf.mxu0
    %v1385 = vadd.f32 0.0, %v1384
    %v1386 = vpop.f32.mrf.mxu0
    %1387 = vmatprep.mubr.bf16.mxu0 0
    %1388 = vmatmul.mubr.bf16.gmra.mxu0 %v1339
    %v1389 = vpop.f32.mrf.mxu0
    %v1390 = vadd.f32 0.0, %v1389
    %v1391 = vpop.f32.mrf.mxu0
    %v1392 = vpop.f32.mrf.mxu0
    %v1393 = vadd.f32 0.0, %v1392
    %v1394 = vpop.f32.mrf.mxu0
    %1395 = vmatprep.mubr.bf16.mxu0 0
    %1396 = vmatmul.mubr.bf16.gmra.mxu0 %v1342
    %v1397 = vpop.f32.mrf.mxu0
    %v1398 = vadd.f32 0.0, %v1397
    %v1399 = vpop.f32.mrf.mxu0
    %v1400 = vpop.f32.mrf.mxu0
    %v1401 = vadd.f32 0.0, %v1400
    %v1402 = vpop.f32.mrf.mxu0
    %1403 = vmatprep.mubr.bf16.mxu0 0
    %1404 = vmatmul.mubr.bf16.gmra.mxu0 %v1345
    %v1405 = vpop.f32.mrf.mxu0
    %v1406 = vadd.f32 0.0, %v1405
    %v1407 = vpop.f32.mrf.mxu0
    %v1408 = vpop.f32.mrf.mxu0
    %v1409 = vadd.f32 0.0, %v1408
    %v1410 = vpop.f32.mrf.mxu0
    %1411 = vdwg.mxu0
    %v1416 = vunpack.c.l.b16 %v1025
    %v1417 = vunpack.c.l.b16 %v1026
    %v1418 = vunpack.c.l.b16 %v1027
    %v1419 = vunpack.c.l.b16 %v1028
    %v1420 = vpack.c.b16 %v1417, %v1416
    %v1421 = vpack.c.b16 %v1419, %v1418
    %v1425 = vsel %vm737, %v1021, 0
    %v1428 = vsel %vm737, %v1022, 0
    %v1431 = vsel %vm737, %v1023, 0
    %v1434 = vsel %vm737, %v1024, 0
    %1436 = vmatprep.subr.bf16.mxu0 0
    %1437 = vmatpush1.bf16.msra.mxu0 0
    %1438 = vmatprep.subr.bf16.mxu0 0
    %1439 = vmatpush1.bf16.msra.mxu0 0
    %1440 = vmatprep.subr.bf16.mxu0 0
    %1441 = vmatpush1.bf16.msra.mxu0 0
    %1442 = vmatprep.subr.bf16.mxu0 0
    %1443 = vmatpush1.bf16.msra.mxu0 0
    %1444 = vmatprep.subr.bf16.mxu0 0
    %1445 = vmatpush1.bf16.msra.mxu0 0
    %1446 = vmatprep.subr.bf16.mxu0 0
    %1447 = vmatpush1.bf16.msra.mxu0 0
    %1448 = vmatprep.subr.bf16.mxu0 0
    %1449 = vmatpush1.bf16.msra.mxu0 %v1421
    %1450 = vmatprep.subr.bf16.mxu0 0
    %1451 = vmatpush1.bf16.msra.mxu0 %v1420
    %1452 = vmatprep.subr.bf16.mxu0 0
    %1453 = vmatpush2.bf16.msra.mxu0 0
    %1454 = vmatprep.subr.bf16.mxu0 0
    %1455 = vmatpush2.bf16.msra.mxu0 0
    %1456 = vmatprep.subr.bf16.mxu0 0
    %1457 = vmatpush2.bf16.msra.mxu0 0
    %1458 = vmatprep.subr.bf16.mxu0 0
    %1459 = vmatpush2.bf16.msra.mxu0 0
    %1460 = vmatprep.subr.bf16.mxu0 0
    %1461 = vmatpush2.bf16.msra.mxu0 0
    %1462 = vmatprep.subr.bf16.mxu0 0
    %1463 = vmatpush2.bf16.msra.mxu0 0
    %1464 = vmatprep.subr.bf16.mxu0 0
    %1465 = vmatpush2.bf16.msra.mxu0 0
    %1466 = vmatprep.subr.bf16.mxu0 0
    %1467 = vmatpush2.bf16.msra.mxu0 0
    %1468 = vmatprep.mubr.bf16.mxu0 0
    %1469 = vmatmul.mubr.bf16.gmra.mxu0 %v1425
    %v1470 = vpop.f32.mrf.mxu0
    %v1471 = vadd.f32 %v1382, %v1470
    %v1472 = vpop.f32.mrf.mxu0
    %v1473 = vpop.f32.mrf.mxu0
    %v1474 = vadd.f32 %v1385, %v1473
    %v1475 = vpop.f32.mrf.mxu0
    %1476 = vmatprep.mubr.bf16.mxu0 0
    %1477 = vmatmul.mubr.bf16.gmra.mxu0 %v1428
    %v1478 = vpop.f32.mrf.mxu0
    %v1479 = vadd.f32 %v1390, %v1478
    %v1480 = vpop.f32.mrf.mxu0
    %v1481 = vpop.f32.mrf.mxu0
    %v1482 = vadd.f32 %v1393, %v1481
    %v1483 = vpop.f32.mrf.mxu0
    %1484 = vmatprep.mubr.bf16.mxu0 0
    %1485 = vmatmul.mubr.bf16.gmra.mxu0 %v1431
    %v1486 = vpop.f32.mrf.mxu0
    %v1487 = vadd.f32 %v1398, %v1486
    %v1488 = vpop.f32.mrf.mxu0
    %v1489 = vpop.f32.mrf.mxu0
    %v1490 = vadd.f32 %v1401, %v1489
    %v1491 = vpop.f32.mrf.mxu0
    %1492 = vmatprep.mubr.bf16.mxu0 0
    %1493 = vmatmul.mubr.bf16.gmra.mxu0 %v1434
    %v1494 = vpop.f32.mrf.mxu0
    %v1495 = vadd.f32 %v1406, %v1494
    %v1496 = vpop.f32.mrf.mxu0
    %v1497 = vpop.f32.mrf.mxu0
    %v1498 = vadd.f32 %v1409, %v1497
    %v1499 = vpop.f32.mrf.mxu0
    %1500 = vdwg.mxu0
    %1501 = vrot.lane.b32.xlu0 %v713, 64
    %v1502 = vpop.permute.xlu0 %1501
    %1503 = vrot.lane.b32.xlu0 %v714, 64
    %v1504 = vpop.permute.xlu0 %1503
    %1505 = vrot.lane.b32.xlu0 %v715, 64
    %v1506 = vpop.permute.xlu0 %1505
    %1507 = vrot.lane.b32.xlu0 %v716, 64
    %v1508 = vpop.permute.xlu0 %1507
    %1509 = vrot.lane.b32.xlu0 %v733, 64
    %v1510 = vpop.permute.xlu0 %1509
    %1511 = vrot.lane.b32.xlu0 %v734, 64
    %v1512 = vpop.permute.xlu0 %1511
    %1513 = vrot.lane.b32.xlu0 %v735, 64
    %v1514 = vpop.permute.xlu0 %1513
    %1515 = vrot.lane.b32.xlu0 %v736, 64
    %v1516 = vpop.permute.xlu0 %1515
    %v1518 = vsel %vm737, %v1502, 0
    %v1521 = vsel %vm737, %v1504, 0
    %v1524 = vsel %vm737, %v1506, 0
    %v1527 = vsel %vm737, %v1508, 0
    %v1530 = vsel %vm737, %v1510, 0
    %v1533 = vsel %vm737, %v1512, 0
    %v1536 = vsel %vm737, %v1514, 0
    %v1539 = vsel %vm737, %v1516, 0
    %1541 = vmatprep.subr.bf16.mxu0 0
    %1542 = vmatpush1.bf16.xpose.msra.mxu0 0
    %1543 = vmatprep.subr.bf16.mxu0 0
    %1544 = vmatpush1.bf16.xpose.msra.mxu0 0
    %1545 = vmatprep.subr.bf16.mxu0 0
    %1546 = vmatpush1.bf16.xpose.msra.mxu0 0
    %1547 = vmatprep.subr.bf16.mxu0 0
    %1548 = vmatpush1.bf16.xpose.msra.mxu0 0
    %1549 = vmatprep.subr.bf16.mxu0 0
    %1550 = vmatpush1.bf16.xpose.msra.mxu0 %v1539
    %1551 = vmatprep.subr.bf16.mxu0 0
    %1552 = vmatpush1.bf16.xpose.msra.mxu0 %v1536
    %1553 = vmatprep.subr.bf16.mxu0 0
    %1554 = vmatpush1.bf16.xpose.msra.mxu0 %v1533
    %1555 = vmatprep.subr.bf16.mxu0 0
    %1556 = vmatpush1.bf16.xpose.msra.mxu0 %v1530
    %1557 = vmatprep.subr.bf16.mxu0 0
    %1558 = vmatpush2.bf16.xpose.msra.mxu0 0
    %1559 = vmatprep.subr.bf16.mxu0 0
    %1560 = vmatpush2.bf16.xpose.msra.mxu0 0
    %1561 = vmatprep.subr.bf16.mxu0 0
    %1562 = vmatpush2.bf16.xpose.msra.mxu0 0
    %1563 = vmatprep.subr.bf16.mxu0 0
    %1564 = vmatpush2.bf16.xpose.msra.mxu0 0
    %1565 = vmatprep.subr.bf16.mxu0 0
    %1566 = vmatpush2.bf16.xpose.msra.mxu0 0
    %1567 = vmatprep.subr.bf16.mxu0 0
    %1568 = vmatpush2.bf16.xpose.msra.mxu0 0
    %1569 = vmatprep.subr.bf16.mxu0 0
    %1570 = vmatpush2.bf16.xpose.msra.mxu0 0
    %1571 = vmatprep.subr.bf16.mxu0 0
    %1572 = vmatpush2.bf16.xpose.msra.mxu0 0
    %1573 = vmatprep.mubr.bf16.mxu0 0
    %1574 = vmatmul.mubr.bf16.gmra.mxu0 %v1518
    %v1575 = vpop.f32.mrf.mxu0
    %v1576 = vadd.f32 %v664, %v1575
    %v1577 = vpop.f32.mrf.mxu0
    %v1578 = vpop.f32.mrf.mxu0
    %v1579 = vadd.f32 %v665, %v1578
    %v1580 = vpop.f32.mrf.mxu0
    %1581 = vmatprep.mubr.bf16.mxu0 0
    %1582 = vmatmul.mubr.bf16.gmra.mxu0 %v1521
    %v1583 = vpop.f32.mrf.mxu0
    %v1584 = vadd.f32 %v666, %v1583
    %v1585 = vpop.f32.mrf.mxu0
    %v1586 = vpop.f32.mrf.mxu0
    %v1587 = vadd.f32 %v667, %v1586
    %v1588 = vpop.f32.mrf.mxu0
    %1589 = vmatprep.mubr.bf16.mxu0 0
    %1590 = vmatmul.mubr.bf16.gmra.mxu0 %v1524
    %v1591 = vpop.f32.mrf.mxu0
    %v1592 = vadd.f32 %v668, %v1591
    %v1593 = vpop.f32.mrf.mxu0
    %v1594 = vpop.f32.mrf.mxu0
    %v1595 = vadd.f32 %v669, %v1594
    %v1596 = vpop.f32.mrf.mxu0
    %1597 = vmatprep.mubr.bf16.mxu0 0
    %1598 = vmatmul.mubr.bf16.gmra.mxu0 %v1527
    %v1599 = vpop.f32.mrf.mxu0
    %v1600 = vadd.f32 %v670, %v1599
    %v1601 = vpop.f32.mrf.mxu0
    %v1602 = vpop.f32.mrf.mxu0
    %v1603 = vadd.f32 %v671, %v1602
    %v1604 = vpop.f32.mrf.mxu0
    %1605 = vdwg.mxu0
    %v1606 = vsel %vm827, %v1576, -inf
    %1607 = vmax.xlane.f32.xlu0 %v1606
    %v1608 = vpop.xlane.xlu0 %1607
    %v1609 = vsel %vm827, %v1579, -inf
    %1610 = vmax.xlane.f32.xlu0 %v1609
    %v1611 = vpop.xlane.xlu0 %1610
    %v1612 = vsel %vm827, %v1584, -inf
    %1613 = vmax.xlane.f32.xlu0 %v1612
    %v1614 = vpop.xlane.xlu0 %1613
    %v1615 = vsel %vm827, %v1587, -inf
    %1616 = vmax.xlane.f32.xlu0 %v1615
    %v1617 = vpop.xlane.xlu0 %1616
    %v1618 = vsel %vm827, %v1592, -inf
    %1619 = vmax.xlane.f32.xlu0 %v1618
    %v1620 = vpop.xlane.xlu0 %1619
    %v1621 = vsel %vm827, %v1595, -inf
    %1622 = vmax.xlane.f32.xlu0 %v1621
    %v1623 = vpop.xlane.xlu0 %1622
    %v1624 = vsel %vm827, %v1600, -inf
    %1625 = vmax.xlane.f32.xlu0 %v1624
    %v1626 = vpop.xlane.xlu0 %1625
    %v1627 = vsel %vm827, %v1603, -inf
    %1628 = vmax.xlane.f32.xlu0 %v1627
    %v1629 = vpop.xlane.xlu0 %1628
    %v1630 = vsub.f32 %v1576, %v1608
    %v1631 = vsub.f32 %v1579, %v1611
    %v1632 = vsub.f32 %v1584, %v1614
    %v1633 = vsub.f32 %v1587, %v1617
    %v1634 = vsub.f32 %v1592, %v1620
    %v1635 = vsub.f32 %v1595, %v1623
    %v1636 = vsub.f32 %v1600, %v1626
    %v1637 = vsub.f32 %v1603, %v1629
    %v1638 = vmul.f32 %v1630, 1.442695
    %v1639 = vpow.pop %v1638
    %v1640 = vmul.f32 %v1631, 1.442695
    %v1641 = vpow.pop %v1640
    %v1642 = vmul.f32 %v1632, 1.442695
    %v1643 = vpow.pop %v1642
    %v1644 = vmul.f32 %v1633, 1.442695
    %v1645 = vpow.pop %v1644
    %v1646 = vmul.f32 %v1634, 1.442695
    %v1647 = vpow.pop %v1646
    %v1648 = vmul.f32 %v1635, 1.442695
    %v1649 = vpow.pop %v1648
    %v1650 = vmul.f32 %v1636, 1.442695
    %v1651 = vpow.pop %v1650
    %v1652 = vmul.f32 %v1637, 1.442695
    %v1653 = vpow.pop %v1652
    %v1654 = vsel %vm827, %v1639, 0.0
    %1655 = vadd.xlane.f32.xlu0 %v1654
    %v1656 = vpop.xlane.xlu0 %1655
    %v1657 = vsel %vm827, %v1641, 0.0
    %1658 = vadd.xlane.f32.xlu0 %v1657
    %v1659 = vpop.xlane.xlu0 %1658
    %v1660 = vsel %vm827, %v1643, 0.0
    %1661 = vadd.xlane.f32.xlu0 %v1660
    %v1662 = vpop.xlane.xlu0 %1661
    %v1663 = vsel %vm827, %v1645, 0.0
    %1664 = vadd.xlane.f32.xlu0 %v1663
    %v1665 = vpop.xlane.xlu0 %1664
    %v1666 = vsel %vm827, %v1647, 0.0
    %1667 = vadd.xlane.f32.xlu0 %v1666
    %v1668 = vpop.xlane.xlu0 %1667
    %v1669 = vsel %vm827, %v1649, 0.0
    %1670 = vadd.xlane.f32.xlu0 %v1669
    %v1671 = vpop.xlane.xlu0 %1670
    %v1672 = vsel %vm827, %v1651, 0.0
    %1673 = vadd.xlane.f32.xlu0 %v1672
    %v1674 = vpop.xlane.xlu0 %1673
    %v1675 = vsel %vm827, %v1653, 0.0
    %1676 = vadd.xlane.f32.xlu0 %v1675
    %v1677 = vpop.xlane.xlu0 %1676
    %v1678 = vrcp.pop %v1656
    %v1679 = vrcp.pop %v1659
    %v1680 = vrcp.pop %v1662
    %v1681 = vrcp.pop %v1665
    %v1682 = vrcp.pop %v1668
    %v1683 = vrcp.pop %v1671
    %v1684 = vrcp.pop %v1674
    %v1685 = vrcp.pop %v1677
    %v1686 = vmul.f32 %v1639, %v1678
    %v1687 = vmul.f32 %v1641, %v1679
    %v1688 = vmul.f32 %v1643, %v1680
    %v1689 = vmul.f32 %v1645, %v1681
    %v1690 = vmul.f32 %v1647, %v1682
    %v1691 = vmul.f32 %v1649, %v1683
    %v1692 = vmul.f32 %v1651, %v1684
    %v1693 = vmul.f32 %v1653, %v1685
    %v1694 = vpack.c.bf16 %v1687, %v1686
    %v1695 = vpack.c.bf16 %v1689, %v1688
    %v1696 = vpack.c.bf16 %v1691, %v1690
    %v1697 = vpack.c.bf16 %v1693, %v1692
    %1698 = vrot.lane.b32.xlu0 %v936, 64
    %v1699 = vpop.permute.xlu0 %1698
    %1700 = vrot.lane.b32.xlu0 %v937, 64
    %v1701 = vpop.permute.xlu0 %1700
    %1702 = vrot.lane.b32.xlu0 %v938, 64
    %v1703 = vpop.permute.xlu0 %1702
    %1704 = vrot.lane.b32.xlu0 %v939, 64
    %v1705 = vpop.permute.xlu0 %1704
    %v1711 = vsel %vm827, %v1694, 0
    %v1714 = vsel %vm827, %v1695, 0
    %v1717 = vsel %vm827, %v1696, 0
    %v1720 = vsel %vm827, %v1697, 0
    %1722 = vmatprep.subr.bf16.mxu0 0
    %1723 = vmatpush1.bf16.msra.mxu0 0
    %1724 = vmatprep.subr.bf16.mxu0 0
    %1725 = vmatpush1.bf16.msra.mxu0 0
    %1726 = vmatprep.subr.bf16.mxu0 0
    %1727 = vmatpush1.bf16.msra.mxu0 0
    %1728 = vmatprep.subr.bf16.mxu0 0
    %1729 = vmatpush1.bf16.msra.mxu0 0
    %1730 = vmatprep.subr.bf16.mxu0 0
    %1731 = vmatpush1.bf16.msra.mxu0 %v1705
    %1732 = vmatprep.subr.bf16.mxu0 0
    %1733 = vmatpush1.bf16.msra.mxu0 %v1703
    %1734 = vmatprep.subr.bf16.mxu0 0
    %1735 = vmatpush1.bf16.msra.mxu0 %v1701
    %1736 = vmatprep.subr.bf16.mxu0 0
    %1737 = vmatpush1.bf16.msra.mxu0 %v1699
    %1738 = vmatprep.subr.bf16.mxu0 0
    %1739 = vmatpush2.bf16.msra.mxu0 0
    %1740 = vmatprep.subr.bf16.mxu0 0
    %1741 = vmatpush2.bf16.msra.mxu0 0
    %1742 = vmatprep.subr.bf16.mxu0 0
    %1743 = vmatpush2.bf16.msra.mxu0 0
    %1744 = vmatprep.subr.bf16.mxu0 0
    %1745 = vmatpush2.bf16.msra.mxu0 0
    %1746 = vmatprep.subr.bf16.mxu0 0
    %1747 = vmatpush2.bf16.msra.mxu0 0
    %1748 = vmatprep.subr.bf16.mxu0 0
    %1749 = vmatpush2.bf16.msra.mxu0 0
    %1750 = vmatprep.subr.bf16.mxu0 0
    %1751 = vmatpush2.bf16.msra.mxu0 0
    %1752 = vmatprep.subr.bf16.mxu0 0
    %1753 = vmatpush2.bf16.msra.mxu0 0
    %1754 = vmatprep.mubr.bf16.mxu0 0
    %1755 = vmatmul.mubr.bf16.gmra.mxu0 %v1711
    %v1756 = vpop.f32.mrf.mxu0
    %v1757 = vadd.f32 0.0, %v1756
    %v1758 = vpop.f32.mrf.mxu0
    %v1759 = vpop.f32.mrf.mxu0
    %v1760 = vadd.f32 0.0, %v1759
    %v1761 = vpop.f32.mrf.mxu0
    %1762 = vmatprep.mubr.bf16.mxu0 0
    %1763 = vmatmul.mubr.bf16.gmra.mxu0 %v1714
    %v1764 = vpop.f32.mrf.mxu0
    %v1765 = vadd.f32 0.0, %v1764
    %v1766 = vpop.f32.mrf.mxu0
    %v1767 = vpop.f32.mrf.mxu0
    %v1768 = vadd.f32 0.0, %v1767
    %v1769 = vpop.f32.mrf.mxu0
    %1770 = vmatprep.mubr.bf16.mxu0 0
    %1771 = vmatmul.mubr.bf16.gmra.mxu0 %v1717
    %v1772 = vpop.f32.mrf.mxu0
    %v1773 = vadd.f32 0.0, %v1772
    %v1774 = vpop.f32.mrf.mxu0
    %v1775 = vpop.f32.mrf.mxu0
    %v1776 = vadd.f32 0.0, %v1775
    %v1777 = vpop.f32.mrf.mxu0
    %1778 = vmatprep.mubr.bf16.mxu0 0
    %1779 = vmatmul.mubr.bf16.gmra.mxu0 %v1720
    %v1780 = vpop.f32.mrf.mxu0
    %v1781 = vadd.f32 0.0, %v1780
    %v1782 = vpop.f32.mrf.mxu0
    %v1783 = vpop.f32.mrf.mxu0
    %v1784 = vadd.f32 0.0, %v1783
    %v1785 = vpop.f32.mrf.mxu0
    %1786 = vdwg.mxu0
    %v1787 = vpack.c.bf16 %v1760, %v1757
    %v1788 = vpack.c.bf16 %v1768, %v1765
    %v1789 = vpack.c.bf16 %v1776, %v1773
    %v1790 = vpack.c.bf16 %v1784, %v1781
    %v1791 = vld [vmem:[%s2 + $0x20] sm:$0xf]
    %v1792 = vld [vmem:[%s2 + $0x24] sm:$0xf]
    %v1793 = vld [vmem:[%s2 + $0x28] sm:$0xf]
    %v1794 = vld [vmem:[%s2 + $0x2c] sm:$0xf]
    %v1799 = vunpack.c.l.b16 %v1791
    %v1800 = vunpack.c.l.b16 %v1792
    %v1801 = vunpack.c.l.b16 %v1793
    %v1802 = vunpack.c.l.b16 %v1794
    %v1803 = vpack.c.b16 %v1800, %v1799
    %v1804 = vpack.c.b16 %v1802, %v1801
    %v1808 = vsel %vm737, %v1787, 0
    %v1811 = vsel %vm737, %v1788, 0
    %v1814 = vsel %vm737, %v1789, 0
    %v1817 = vsel %vm737, %v1790, 0
    %1819 = vmatprep.subr.bf16.mxu0 0
    %1820 = vmatpush1.bf16.msra.mxu0 0
    %1821 = vmatprep.subr.bf16.mxu0 0
    %1822 = vmatpush1.bf16.msra.mxu0 0
    %1823 = vmatprep.subr.bf16.mxu0 0
    %1824 = vmatpush1.bf16.msra.mxu0 0
    %1825 = vmatprep.subr.bf16.mxu0 0
    %1826 = vmatpush1.bf16.msra.mxu0 0
    %1827 = vmatprep.subr.bf16.mxu0 0
    %1828 = vmatpush1.bf16.msra.mxu0 0
    %1829 = vmatprep.subr.bf16.mxu0 0
    %1830 = vmatpush1.bf16.msra.mxu0 0
    %1831 = vmatprep.subr.bf16.mxu0 0
    %1832 = vmatpush1.bf16.msra.mxu0 %v1804
    %1833 = vmatprep.subr.bf16.mxu0 0
    %1834 = vmatpush1.bf16.msra.mxu0 %v1803
    %1835 = vmatprep.subr.bf16.mxu0 0
    %1836 = vmatpush2.bf16.msra.mxu0 0
    %1837 = vmatprep.subr.bf16.mxu0 0
    %1838 = vmatpush2.bf16.msra.mxu0 0
    %1839 = vmatprep.subr.bf16.mxu0 0
    %1840 = vmatpush2.bf16.msra.mxu0 0
    %1841 = vmatprep.subr.bf16.mxu0 0
    %1842 = vmatpush2.bf16.msra.mxu0 0
    %1843 = vmatprep.subr.bf16.mxu0 0
    %1844 = vmatpush2.bf16.msra.mxu0 0
    %1845 = vmatprep.subr.bf16.mxu0 0
    %1846 = vmatpush2.bf16.msra.mxu0 0
    %1847 = vmatprep.subr.bf16.mxu0 0
    %1848 = vmatpush2.bf16.msra.mxu0 0
    %1849 = vmatprep.subr.bf16.mxu0 0
    %1850 = vmatpush2.bf16.msra.mxu0 0
    %1851 = vmatprep.mubr.bf16.mxu0 0
    %1852 = vmatmul.mubr.bf16.gmra.mxu0 %v1808
    %v1853 = vpop.f32.mrf.mxu0
    %v1854 = vadd.f32 0.0, %v1853
    %v1855 = vpop.f32.mrf.mxu0
    %v1856 = vpop.f32.mrf.mxu0
    %v1857 = vadd.f32 0.0, %v1856
    %v1858 = vpop.f32.mrf.mxu0
    %1859 = vmatprep.mubr.bf16.mxu0 0
    %1860 = vmatmul.mubr.bf16.gmra.mxu0 %v1811
    %v1861 = vpop.f32.mrf.mxu0
    %v1862 = vadd.f32 0.0, %v1861
    %v1863 = vpop.f32.mrf.mxu0
    %v1864 = vpop.f32.mrf.mxu0
    %v1865 = vadd.f32 0.0, %v1864
    %v1866 = vpop.f32.mrf.mxu0
    %1867 = vmatprep.mubr.bf16.mxu0 0
    %1868 = vmatmul.mubr.bf16.gmra.mxu0 %v1814
    %v1869 = vpop.f32.mrf.mxu0
    %v1870 = vadd.f32 0.0, %v1869
    %v1871 = vpop.f32.mrf.mxu0
    %v1872 = vpop.f32.mrf.mxu0
    %v1873 = vadd.f32 0.0, %v1872
    %v1874 = vpop.f32.mrf.mxu0
    %1875 = vmatprep.mubr.bf16.mxu0 0
    %1876 = vmatmul.mubr.bf16.gmra.mxu0 %v1817
    %v1877 = vpop.f32.mrf.mxu0
    %v1878 = vadd.f32 0.0, %v1877
    %v1879 = vpop.f32.mrf.mxu0
    %v1880 = vpop.f32.mrf.mxu0
    %v1881 = vadd.f32 0.0, %v1880
    %v1882 = vpop.f32.mrf.mxu0
    %1883 = vdwg.mxu0
    %v1884 = vadd.f32 %v1471, %v1854
    %v1885 = vadd.f32 %v1474, %v1857
    %v1886 = vadd.f32 %v1479, %v1862
    %v1887 = vadd.f32 %v1482, %v1865
    %v1888 = vadd.f32 %v1487, %v1870
    %v1889 = vadd.f32 %v1490, %v1873
    %v1890 = vadd.f32 %v1495, %v1878
    %v1891 = vadd.f32 %v1498, %v1881
    %1892 = vrot.lane.b32.xlu0 %v713, 32
    %v1893 = vpop.permute.xlu0 %1892
    %1894 = vrot.lane.b32.xlu0 %v714, 32
    %v1895 = vpop.permute.xlu0 %1894
    %1896 = vrot.lane.b32.xlu0 %v715, 32
    %v1897 = vpop.permute.xlu0 %1896
    %1898 = vrot.lane.b32.xlu0 %v716, 32
    %v1899 = vpop.permute.xlu0 %1898
    %1900 = vrot.lane.b32.xlu0 %v733, 32
    %v1901 = vpop.permute.xlu0 %1900
    %1902 = vrot.lane.b32.xlu0 %v734, 32
    %v1903 = vpop.permute.xlu0 %1902
    %1904 = vrot.lane.b32.xlu0 %v735, 32
    %v1905 = vpop.permute.xlu0 %1904
    %1906 = vrot.lane.b32.xlu0 %v736, 32
    %v1907 = vpop.permute.xlu0 %1906
    %v1909 = vsel %vm737, %v1893, 0
    %v1912 = vsel %vm737, %v1895, 0
    %v1915 = vsel %vm737, %v1897, 0
    %v1918 = vsel %vm737, %v1899, 0
    %v1921 = vsel %vm737, %v1901, 0
    %v1924 = vsel %vm737, %v1903, 0
    %v1927 = vsel %vm737, %v1905, 0
    %v1930 = vsel %vm737, %v1907, 0
    %1932 = vmatprep.subr.bf16.mxu0 0
    %1933 = vmatpush1.bf16.xpose.msra.mxu0 0
    %1934 = vmatprep.subr.bf16.mxu0 0
    %1935 = vmatpush1.bf16.xpose.msra.mxu0 0
    %1936 = vmatprep.subr.bf16.mxu0 0
    %1937 = vmatpush1.bf16.xpose.msra.mxu0 0
    %1938 = vmatprep.subr.bf16.mxu0 0
    %1939 = vmatpush1.bf16.xpose.msra.mxu0 0
    %1940 = vmatprep.subr.bf16.mxu0 0
    %1941 = vmatpush1.bf16.xpose.msra.mxu0 %v1930
    %1942 = vmatprep.subr.bf16.mxu0 0
    %1943 = vmatpush1.bf16.xpose.msra.mxu0 %v1927
    %1944 = vmatprep.subr.bf16.mxu0 0
    %1945 = vmatpush1.bf16.xpose.msra.mxu0 %v1924
    %1946 = vmatprep.subr.bf16.mxu0 0
    %1947 = vmatpush1.bf16.xpose.msra.mxu0 %v1921
    %1948 = vmatprep.subr.bf16.mxu0 0
    %1949 = vmatpush2.bf16.xpose.msra.mxu0 0
    %1950 = vmatprep.subr.bf16.mxu0 0
    %1951 = vmatpush2.bf16.xpose.msra.mxu0 0
    %1952 = vmatprep.subr.bf16.mxu0 0
    %1953 = vmatpush2.bf16.xpose.msra.mxu0 0
    %1954 = vmatprep.subr.bf16.mxu0 0
    %1955 = vmatpush2.bf16.xpose.msra.mxu0 0
    %1956 = vmatprep.subr.bf16.mxu0 0
    %1957 = vmatpush2.bf16.xpose.msra.mxu0 0
    %1958 = vmatprep.subr.bf16.mxu0 0
    %1959 = vmatpush2.bf16.xpose.msra.mxu0 0
    %1960 = vmatprep.subr.bf16.mxu0 0
    %1961 = vmatpush2.bf16.xpose.msra.mxu0 0
    %1962 = vmatprep.subr.bf16.mxu0 0
    %1963 = vmatpush2.bf16.xpose.msra.mxu0 0
    %1964 = vmatprep.mubr.bf16.mxu0 0
    %1965 = vmatmul.mubr.bf16.gmra.mxu0 %v1909
    %v1966 = vpop.f32.mrf.mxu0
    %v1967 = vadd.f32 %v664, %v1966
    %v1968 = vpop.f32.mrf.mxu0
    %v1969 = vpop.f32.mrf.mxu0
    %v1970 = vadd.f32 %v665, %v1969
    %v1971 = vpop.f32.mrf.mxu0
    %1972 = vmatprep.mubr.bf16.mxu0 0
    %1973 = vmatmul.mubr.bf16.gmra.mxu0 %v1912
    %v1974 = vpop.f32.mrf.mxu0
    %v1975 = vadd.f32 %v666, %v1974
    %v1976 = vpop.f32.mrf.mxu0
    %v1977 = vpop.f32.mrf.mxu0
    %v1978 = vadd.f32 %v667, %v1977
    %v1979 = vpop.f32.mrf.mxu0
    %1980 = vmatprep.mubr.bf16.mxu0 0
    %1981 = vmatmul.mubr.bf16.gmra.mxu0 %v1915
    %v1982 = vpop.f32.mrf.mxu0
    %v1983 = vadd.f32 %v668, %v1982
    %v1984 = vpop.f32.mrf.mxu0
    %v1985 = vpop.f32.mrf.mxu0
    %v1986 = vadd.f32 %v669, %v1985
    %v1987 = vpop.f32.mrf.mxu0
    %1988 = vmatprep.mubr.bf16.mxu0 0
    %1989 = vmatmul.mubr.bf16.gmra.mxu0 %v1918
    %v1990 = vpop.f32.mrf.mxu0
    %v1991 = vadd.f32 %v670, %v1990
    %v1992 = vpop.f32.mrf.mxu0
    %v1993 = vpop.f32.mrf.mxu0
    %v1994 = vadd.f32 %v671, %v1993
    %v1995 = vpop.f32.mrf.mxu0
    %1996 = vdwg.mxu0
    %v1997 = vsel %vm827, %v1967, -inf
    %1998 = vmax.xlane.f32.xlu0 %v1997
    %v1999 = vpop.xlane.xlu0 %1998
    %v2000 = vsel %vm827, %v1970, -inf
    %2001 = vmax.xlane.f32.xlu0 %v2000
    %v2002 = vpop.xlane.xlu0 %2001
    %v2003 = vsel %vm827, %v1975, -inf
    %2004 = vmax.xlane.f32.xlu0 %v2003
    %v2005 = vpop.xlane.xlu0 %2004
    %v2006 = vsel %vm827, %v1978, -inf
    %2007 = vmax.xlane.f32.xlu0 %v2006
    %v2008 = vpop.xlane.xlu0 %2007
    %v2009 = vsel %vm827, %v1983, -inf
    %2010 = vmax.xlane.f32.xlu0 %v2009
    %v2011 = vpop.xlane.xlu0 %2010
    %v2012 = vsel %vm827, %v1986, -inf
    %2013 = vmax.xlane.f32.xlu0 %v2012
    %v2014 = vpop.xlane.xlu0 %2013
    %v2015 = vsel %vm827, %v1991, -inf
    %2016 = vmax.xlane.f32.xlu0 %v2015
    %v2017 = vpop.xlane.xlu0 %2016
    %v2018 = vsel %vm827, %v1994, -inf
    %2019 = vmax.xlane.f32.xlu0 %v2018
    %v2020 = vpop.xlane.xlu0 %2019
    %v2021 = vsub.f32 %v1967, %v1999
    %v2022 = vsub.f32 %v1970, %v2002
    %v2023 = vsub.f32 %v1975, %v2005
    %v2024 = vsub.f32 %v1978, %v2008
    %v2025 = vsub.f32 %v1983, %v2011
    %v2026 = vsub.f32 %v1986, %v2014
    %v2027 = vsub.f32 %v1991, %v2017
    %v2028 = vsub.f32 %v1994, %v2020
    %v2029 = vmul.f32 %v2021, 1.442695
    %v2030 = vpow.pop %v2029
    %v2031 = vmul.f32 %v2022, 1.442695
    %v2032 = vpow.pop %v2031
    %v2033 = vmul.f32 %v2023, 1.442695
    %v2034 = vpow.pop %v2033
    %v2035 = vmul.f32 %v2024, 1.442695
    %v2036 = vpow.pop %v2035
    %v2037 = vmul.f32 %v2025, 1.442695
    %v2038 = vpow.pop %v2037
    %v2039 = vmul.f32 %v2026, 1.442695
    %v2040 = vpow.pop %v2039
    %v2041 = vmul.f32 %v2027, 1.442695
    %v2042 = vpow.pop %v2041
    %v2043 = vmul.f32 %v2028, 1.442695
    %v2044 = vpow.pop %v2043
    %v2045 = vsel %vm827, %v2030, 0.0
    %2046 = vadd.xlane.f32.xlu0 %v2045
    %v2047 = vpop.xlane.xlu0 %2046
    %v2048 = vsel %vm827, %v2032, 0.0
    %2049 = vadd.xlane.f32.xlu0 %v2048
    %v2050 = vpop.xlane.xlu0 %2049
    %v2051 = vsel %vm827, %v2034, 0.0
    %2052 = vadd.xlane.f32.xlu0 %v2051
    %v2053 = vpop.xlane.xlu0 %2052
    %v2054 = vsel %vm827, %v2036, 0.0
    %2055 = vadd.xlane.f32.xlu0 %v2054
    %v2056 = vpop.xlane.xlu0 %2055
    %v2057 = vsel %vm827, %v2038, 0.0
    %2058 = vadd.xlane.f32.xlu0 %v2057
    %v2059 = vpop.xlane.xlu0 %2058
    %v2060 = vsel %vm827, %v2040, 0.0
    %2061 = vadd.xlane.f32.xlu0 %v2060
    %v2062 = vpop.xlane.xlu0 %2061
    %v2063 = vsel %vm827, %v2042, 0.0
    %2064 = vadd.xlane.f32.xlu0 %v2063
    %v2065 = vpop.xlane.xlu0 %2064
    %v2066 = vsel %vm827, %v2044, 0.0
    %2067 = vadd.xlane.f32.xlu0 %v2066
    %v2068 = vpop.xlane.xlu0 %2067
    %v2069 = vrcp.pop %v2047
    %v2070 = vrcp.pop %v2050
    %v2071 = vrcp.pop %v2053
    %v2072 = vrcp.pop %v2056
    %v2073 = vrcp.pop %v2059
    %v2074 = vrcp.pop %v2062
    %v2075 = vrcp.pop %v2065
    %v2076 = vrcp.pop %v2068
    %v2077 = vmul.f32 %v2030, %v2069
    %v2078 = vmul.f32 %v2032, %v2070
    %v2079 = vmul.f32 %v2034, %v2071
    %v2080 = vmul.f32 %v2036, %v2072
    %v2081 = vmul.f32 %v2038, %v2073
    %v2082 = vmul.f32 %v2040, %v2074
    %v2083 = vmul.f32 %v2042, %v2075
    %v2084 = vmul.f32 %v2044, %v2076
    %v2085 = vpack.c.bf16 %v2078, %v2077
    %v2086 = vpack.c.bf16 %v2080, %v2079
    %v2087 = vpack.c.bf16 %v2082, %v2081
    %v2088 = vpack.c.bf16 %v2084, %v2083
    %2089 = vrot.lane.b32.xlu0 %v936, 32
    %v2090 = vpop.permute.xlu0 %2089
    %2091 = vrot.lane.b32.xlu0 %v937, 32
    %v2092 = vpop.permute.xlu0 %2091
    %2093 = vrot.lane.b32.xlu0 %v938, 32
    %v2094 = vpop.permute.xlu0 %2093
    %2095 = vrot.lane.b32.xlu0 %v939, 32
    %v2096 = vpop.permute.xlu0 %2095
    %v2102 = vsel %vm827, %v2085, 0
    %v2105 = vsel %vm827, %v2086, 0
    %v2108 = vsel %vm827, %v2087, 0
    %v2111 = vsel %vm827, %v2088, 0
    %2113 = vmatprep.subr.bf16.mxu0 0
    %2114 = vmatpush1.bf16.msra.mxu0 0
    %2115 = vmatprep.subr.bf16.mxu0 0
    %2116 = vmatpush1.bf16.msra.mxu0 0
    %2117 = vmatprep.subr.bf16.mxu0 0
    %2118 = vmatpush1.bf16.msra.mxu0 0
    %2119 = vmatprep.subr.bf16.mxu0 0
    %2120 = vmatpush1.bf16.msra.mxu0 0
    %2121 = vmatprep.subr.bf16.mxu0 0
    %2122 = vmatpush1.bf16.msra.mxu0 %v2096
    %2123 = vmatprep.subr.bf16.mxu0 0
    %2124 = vmatpush1.bf16.msra.mxu0 %v2094
    %2125 = vmatprep.subr.bf16.mxu0 0
    %2126 = vmatpush1.bf16.msra.mxu0 %v2092
    %2127 = vmatprep.subr.bf16.mxu0 0
    %2128 = vmatpush1.bf16.msra.mxu0 %v2090
    %2129 = vmatprep.subr.bf16.mxu0 0
    %2130 = vmatpush2.bf16.msra.mxu0 0
    %2131 = vmatprep.subr.bf16.mxu0 0
    %2132 = vmatpush2.bf16.msra.mxu0 0
    %2133 = vmatprep.subr.bf16.mxu0 0
    %2134 = vmatpush2.bf16.msra.mxu0 0
    %2135 = vmatprep.subr.bf16.mxu0 0
    %2136 = vmatpush2.bf16.msra.mxu0 0
    %2137 = vmatprep.subr.bf16.mxu0 0
    %2138 = vmatpush2.bf16.msra.mxu0 0
    %2139 = vmatprep.subr.bf16.mxu0 0
    %2140 = vmatpush2.bf16.msra.mxu0 0
    %2141 = vmatprep.subr.bf16.mxu0 0
    %2142 = vmatpush2.bf16.msra.mxu0 0
    %2143 = vmatprep.subr.bf16.mxu0 0
    %2144 = vmatpush2.bf16.msra.mxu0 0
    %2145 = vmatprep.mubr.bf16.mxu0 0
    %2146 = vmatmul.mubr.bf16.gmra.mxu0 %v2102
    %v2147 = vpop.f32.mrf.mxu0
    %v2148 = vadd.f32 0.0, %v2147
    %v2149 = vpop.f32.mrf.mxu0
    %v2150 = vpop.f32.mrf.mxu0
    %v2151 = vadd.f32 0.0, %v2150
    %v2152 = vpop.f32.mrf.mxu0
    %2153 = vmatprep.mubr.bf16.mxu0 0
    %2154 = vmatmul.mubr.bf16.gmra.mxu0 %v2105
    %v2155 = vpop.f32.mrf.mxu0
    %v2156 = vadd.f32 0.0, %v2155
    %v2157 = vpop.f32.mrf.mxu0
    %v2158 = vpop.f32.mrf.mxu0
    %v2159 = vadd.f32 0.0, %v2158
    %v2160 = vpop.f32.mrf.mxu0
    %2161 = vmatprep.mubr.bf16.mxu0 0
    %2162 = vmatmul.mubr.bf16.gmra.mxu0 %v2108
    %v2163 = vpop.f32.mrf.mxu0
    %v2164 = vadd.f32 0.0, %v2163
    %v2165 = vpop.f32.mrf.mxu0
    %v2166 = vpop.f32.mrf.mxu0
    %v2167 = vadd.f32 0.0, %v2166
    %v2168 = vpop.f32.mrf.mxu0
    %2169 = vmatprep.mubr.bf16.mxu0 0
    %2170 = vmatmul.mubr.bf16.gmra.mxu0 %v2111
    %v2171 = vpop.f32.mrf.mxu0
    %v2172 = vadd.f32 0.0, %v2171
    %v2173 = vpop.f32.mrf.mxu0
    %v2174 = vpop.f32.mrf.mxu0
    %v2175 = vadd.f32 0.0, %v2174
    %v2176 = vpop.f32.mrf.mxu0
    %2177 = vdwg.mxu0
    %v2178 = vpack.c.bf16 %v2151, %v2148
    %v2179 = vpack.c.bf16 %v2159, %v2156
    %v2180 = vpack.c.bf16 %v2167, %v2164
    %v2181 = vpack.c.bf16 %v2175, %v2172
    %v2182 = vld [vmem:[%s2 + $0x30] sm:$0xf]
    %v2183 = vld [vmem:[%s2 + $0x34] sm:$0xf]
    %v2184 = vld [vmem:[%s2 + $0x38] sm:$0xf]
    %v2185 = vld [vmem:[%s2 + $0x3c] sm:$0xf]
    %v2190 = vunpack.c.l.b16 %v2182
    %v2191 = vunpack.c.l.b16 %v2183
    %v2192 = vunpack.c.l.b16 %v2184
    %v2193 = vunpack.c.l.b16 %v2185
    %v2194 = vpack.c.b16 %v2191, %v2190
    %v2195 = vpack.c.b16 %v2193, %v2192
    %v2199 = vsel %vm737, %v2178, 0
    %v2202 = vsel %vm737, %v2179, 0
    %v2205 = vsel %vm737, %v2180, 0
    %v2208 = vsel %vm737, %v2181, 0
    %2210 = vmatprep.subr.bf16.mxu0 0
    %2211 = vmatpush1.bf16.msra.mxu0 0
    %2212 = vmatprep.subr.bf16.mxu0 0
    %2213 = vmatpush1.bf16.msra.mxu0 0
    %2214 = vmatprep.subr.bf16.mxu0 0
    %2215 = vmatpush1.bf16.msra.mxu0 0
    %2216 = vmatprep.subr.bf16.mxu0 0
    %2217 = vmatpush1.bf16.msra.mxu0 0
    %2218 = vmatprep.subr.bf16.mxu0 0
    %2219 = vmatpush1.bf16.msra.mxu0 0
    %2220 = vmatprep.subr.bf16.mxu0 0
    %2221 = vmatpush1.bf16.msra.mxu0 0
    %2222 = vmatprep.subr.bf16.mxu0 0
    %2223 = vmatpush1.bf16.msra.mxu0 %v2195
    %2224 = vmatprep.subr.bf16.mxu0 0
    %2225 = vmatpush1.bf16.msra.mxu0 %v2194
    %2226 = vmatprep.subr.bf16.mxu0 0
    %2227 = vmatpush2.bf16.msra.mxu0 0
    %2228 = vmatprep.subr.bf16.mxu0 0
    %2229 = vmatpush2.bf16.msra.mxu0 0
    %2230 = vmatprep.subr.bf16.mxu0 0
    %2231 = vmatpush2.bf16.msra.mxu0 0
    %2232 = vmatprep.subr.bf16.mxu0 0
    %2233 = vmatpush2.bf16.msra.mxu0 0
    %2234 = vmatprep.subr.bf16.mxu0 0
    %2235 = vmatpush2.bf16.msra.mxu0 0
    %2236 = vmatprep.subr.bf16.mxu0 0
    %2237 = vmatpush2.bf16.msra.mxu0 0
    %2238 = vmatprep.subr.bf16.mxu0 0
    %2239 = vmatpush2.bf16.msra.mxu0 0
    %2240 = vmatprep.subr.bf16.mxu0 0
    %2241 = vmatpush2.bf16.msra.mxu0 0
    %2242 = vmatprep.mubr.bf16.mxu0 0
    %2243 = vmatmul.mubr.bf16.gmra.mxu0 %v2199
    %v2244 = vpop.f32.mrf.mxu0
    %v2245 = vadd.f32 0.0, %v2244
    %v2246 = vpop.f32.mrf.mxu0
    %v2247 = vpop.f32.mrf.mxu0
    %v2248 = vadd.f32 0.0, %v2247
    %v2249 = vpop.f32.mrf.mxu0
    %2250 = vmatprep.mubr.bf16.mxu0 0
    %2251 = vmatmul.mubr.bf16.gmra.mxu0 %v2202
    %v2252 = vpop.f32.mrf.mxu0
    %v2253 = vadd.f32 0.0, %v2252
    %v2254 = vpop.f32.mrf.mxu0
    %v2255 = vpop.f32.mrf.mxu0
    %v2256 = vadd.f32 0.0, %v2255
    %v2257 = vpop.f32.mrf.mxu0
    %2258 = vmatprep.mubr.bf16.mxu0 0
    %2259 = vmatmul.mubr.bf16.gmra.mxu0 %v2205
    %v2260 = vpop.f32.mrf.mxu0
    %v2261 = vadd.f32 0.0, %v2260
    %v2262 = vpop.f32.mrf.mxu0
    %v2263 = vpop.f32.mrf.mxu0
    %v2264 = vadd.f32 0.0, %v2263
    %v2265 = vpop.f32.mrf.mxu0
    %2266 = vmatprep.mubr.bf16.mxu0 0
    %2267 = vmatmul.mubr.bf16.gmra.mxu0 %v2208
    %v2268 = vpop.f32.mrf.mxu0
    %v2269 = vadd.f32 0.0, %v2268
    %v2270 = vpop.f32.mrf.mxu0
    %v2271 = vpop.f32.mrf.mxu0
    %v2272 = vadd.f32 0.0, %v2271
    %v2273 = vpop.f32.mrf.mxu0
    %2274 = vdwg.mxu0
    %v2275 = vadd.f32 %v1884, %v2245
    %v2276 = vadd.f32 %v1885, %v2248
    %v2277 = vadd.f32 %v1886, %v2253
    %v2278 = vadd.f32 %v1887, %v2256
    %v2279 = vadd.f32 %v1888, %v2261
    %v2280 = vadd.f32 %v1889, %v2264
    %v2281 = vadd.f32 %v1890, %v2269
    %v2282 = vadd.f32 %v1891, %v2272
    %v2284 = vlaneseq
    %v2285 = vshrl.u32 %v2284, 7
    %v2286 = vsub.s32 0, %v2285
    %v2287 = vrot.slane %v672, %v2286
    %v2289 = vadd.f32 %v2275, %v2287
    %v2290 = vadd.f32 %v2276, %v2287
    %v2291 = vadd.f32 %v2277, %v2287
    %v2292 = vadd.f32 %v2278, %v2287
    %v2293 = vadd.f32 %v2279, %v2287
    %v2294 = vadd.f32 %v2280, %v2287
    %v2295 = vadd.f32 %v2281, %v2287
    %v2296 = vadd.f32 %v2282, %v2287
    %2297 = vst [vmem:[#allocation3] sm:$0xff] %v2289
    %2298 = vst [vmem:[#allocation3 + $0x8] sm:$0xff] %v2290
    %2299 = vst [vmem:[#allocation3 + $0x10] sm:$0xff] %v2291
    %2300 = vst [vmem:[#allocation3 + $0x18] sm:$0xff] %v2292
    %2301 = vst [vmem:[#allocation3 + $0x20] sm:$0xff] %v2293
    %2302 = vst [vmem:[#allocation3 + $0x28] sm:$0xff] %v2294
    %2303 = vst [vmem:[#allocation3 + $0x30] sm:$0xff] %v2295
    %2304 = vst [vmem:[#allocation3 + $0x38] sm:$0xff] %v2296
    %v2305 = vld [vmem:[#allocation2 + $0x60] sm:$0xf]
    %v2306 = vld [vmem:[#allocation2 + $0x6c] sm:$0xf]
    %v2307 = vld [vmem:[#allocation2 + $0x78] sm:$0xf]
    %v2308 = vld [vmem:[#allocation2 + $0x84] sm:$0xf]
    %v2309 = vld [vmem:[#allocation2 + $0x90] sm:$0xf]
    %v2310 = vld [vmem:[#allocation2 + $0x9c] sm:$0xf]
    %v2311 = vld [vmem:[#allocation2 + $0xa8] sm:$0xf]
    %v2312 = vld [vmem:[#allocation2 + $0xb4] sm:$0xf]
    %v2313 = vld [vmem:[#allocation2 + $0x64] sm:$0xf]
    %v2314 = vld [vmem:[#allocation2 + $0x70] sm:$0xf]
    %v2315 = vld [vmem:[#allocation2 + $0x7c] sm:$0xf]
    %v2316 = vld [vmem:[#allocation2 + $0x88] sm:$0xf]
    %v2317 = vld [vmem:[#allocation2 + $0x94] sm:$0xf]
    %v2318 = vld [vmem:[#allocation2 + $0xa0] sm:$0xf]
    %v2319 = vld [vmem:[#allocation2 + $0xac] sm:$0xf]
    %v2320 = vld [vmem:[#allocation2 + $0xb8] sm:$0xf]
    %v2321 = vld [vmem:[#allocation2 + $0x68] sm:$0xf]
    %v2322 = vld [vmem:[#allocation2 + $0x74] sm:$0xf]
    %v2323 = vld [vmem:[#allocation2 + $0x80] sm:$0xf]
    %v2324 = vld [vmem:[#allocation2 + $0x8c] sm:$0xf]
    %v2325 = vld [vmem:[#allocation2 + $0x98] sm:$0xf]
    %v2326 = vld [vmem:[#allocation2 + $0xa4] sm:$0xf]
    %v2327 = vld [vmem:[#allocation2 + $0xb0] sm:$0xf]
    %v2328 = vld [vmem:[#allocation2 + $0xbc] sm:$0xf]
    %v2337 = vunpack.c.l.b16 %v2305
    %v2338 = vunpack.c.l.b16 %v2306
    %v2339 = vunpack.c.l.b16 %v2307
    %v2340 = vunpack.c.l.b16 %v2308
    %v2341 = vunpack.c.l.b16 %v2309
    %v2342 = vunpack.c.l.b16 %v2310
    %v2343 = vunpack.c.l.b16 %v2311
    %v2344 = vunpack.c.l.b16 %v2312
    %v2345 = vpack.c.b16 %v2338, %v2337
    %v2346 = vpack.c.b16 %v2340, %v2339
    %v2347 = vpack.c.b16 %v2342, %v2341
    %v2348 = vpack.c.b16 %v2344, %v2343
    %v2357 = vunpack.c.l.b16 %v2313
    %v2358 = vunpack.c.l.b16 %v2314
    %v2359 = vunpack.c.l.b16 %v2315
    %v2360 = vunpack.c.l.b16 %v2316
    %v2361 = vunpack.c.l.b16 %v2317
    %v2362 = vunpack.c.l.b16 %v2318
    %v2363 = vunpack.c.l.b16 %v2319
    %v2364 = vunpack.c.l.b16 %v2320
    %v2365 = vpack.c.b16 %v2358, %v2357
    %v2366 = vpack.c.b16 %v2360, %v2359
    %v2367 = vpack.c.b16 %v2362, %v2361
    %v2368 = vpack.c.b16 %v2364, %v2363
    %v2370 = vsel %vm737, %v2345, 0
    %v2373 = vsel %vm737, %v2346, 0
    %v2376 = vsel %vm737, %v2347, 0
    %v2379 = vsel %vm737, %v2348, 0
    %v2382 = vsel %vm737, %v2365, 0
    %v2385 = vsel %vm737, %v2366, 0
    %v2388 = vsel %vm737, %v2367, 0
    %v2391 = vsel %vm737, %v2368, 0
    %2393 = vmatprep.subr.bf16.mxu0 0
    %2394 = vmatpush1.bf16.xpose.msra.mxu0 0
    %2395 = vmatprep.subr.bf16.mxu0 0
    %2396 = vmatpush1.bf16.xpose.msra.mxu0 0
    %2397 = vmatprep.subr.bf16.mxu0 0
    %2398 = vmatpush1.bf16.xpose.msra.mxu0 0
    %2399 = vmatprep.subr.bf16.mxu0 0
    %2400 = vmatpush1.bf16.xpose.msra.mxu0 0
    %2401 = vmatprep.subr.bf16.mxu0 0
    %2402 = vmatpush1.bf16.xpose.msra.mxu0 %v2391
    %2403 = vmatprep.subr.bf16.mxu0 0
    %2404 = vmatpush1.bf16.xpose.msra.mxu0 %v2388
    %2405 = vmatprep.subr.bf16.mxu0 0
    %2406 = vmatpush1.bf16.xpose.msra.mxu0 %v2385
    %2407 = vmatprep.subr.bf16.mxu0 0
    %2408 = vmatpush1.bf16.xpose.msra.mxu0 %v2382
    %2409 = vmatprep.subr.bf16.mxu0 0
    %2410 = vmatpush2.bf16.xpose.msra.mxu0 0
    %2411 = vmatprep.subr.bf16.mxu0 0
    %2412 = vmatpush2.bf16.xpose.msra.mxu0 0
    %2413 = vmatprep.subr.bf16.mxu0 0
    %2414 = vmatpush2.bf16.xpose.msra.mxu0 0
    %2415 = vmatprep.subr.bf16.mxu0 0
    %2416 = vmatpush2.bf16.xpose.msra.mxu0 0
    %2417 = vmatprep.subr.bf16.mxu0 0
    %2418 = vmatpush2.bf16.xpose.msra.mxu0 0
    %2419 = vmatprep.subr.bf16.mxu0 0
    %2420 = vmatpush2.bf16.xpose.msra.mxu0 0
    %2421 = vmatprep.subr.bf16.mxu0 0
    %2422 = vmatpush2.bf16.xpose.msra.mxu0 0
    %2423 = vmatprep.subr.bf16.mxu0 0
    %2424 = vmatpush2.bf16.xpose.msra.mxu0 0
    %2425 = vmatprep.mubr.bf16.mxu0 0
    %2426 = vmatmul.mubr.bf16.gmra.mxu0 %v2370
    %v2427 = vpop.f32.mrf.mxu0
    %v2428 = vadd.f32 %v664, %v2427
    %v2429 = vpop.f32.mrf.mxu0
    %v2430 = vpop.f32.mrf.mxu0
    %v2431 = vadd.f32 %v665, %v2430
    %v2432 = vpop.f32.mrf.mxu0
    %2433 = vmatprep.mubr.bf16.mxu0 0
    %2434 = vmatmul.mubr.bf16.gmra.mxu0 %v2373
    %v2435 = vpop.f32.mrf.mxu0
    %v2436 = vadd.f32 %v666, %v2435
    %v2437 = vpop.f32.mrf.mxu0
    %v2438 = vpop.f32.mrf.mxu0
    %v2439 = vadd.f32 %v667, %v2438
    %v2440 = vpop.f32.mrf.mxu0
    %2441 = vmatprep.mubr.bf16.mxu0 0
    %2442 = vmatmul.mubr.bf16.gmra.mxu0 %v2376
    %v2443 = vpop.f32.mrf.mxu0
    %v2444 = vadd.f32 %v668, %v2443
    %v2445 = vpop.f32.mrf.mxu0
    %v2446 = vpop.f32.mrf.mxu0
    %v2447 = vadd.f32 %v669, %v2446
    %v2448 = vpop.f32.mrf.mxu0
    %2449 = vmatprep.mubr.bf16.mxu0 0
    %2450 = vmatmul.mubr.bf16.gmra.mxu0 %v2379
    %v2451 = vpop.f32.mrf.mxu0
    %v2452 = vadd.f32 %v670, %v2451
    %v2453 = vpop.f32.mrf.mxu0
    %v2454 = vpop.f32.mrf.mxu0
    %v2455 = vadd.f32 %v671, %v2454
    %v2456 = vpop.f32.mrf.mxu0
    %2457 = vdwg.mxu0
    %v2458 = vsel %vm827, %v2428, -inf
    %2459 = vmax.xlane.f32.xlu0 %v2458
    %v2460 = vpop.xlane.xlu0 %2459
    %v2461 = vsel %vm827, %v2431, -inf
    %2462 = vmax.xlane.f32.xlu0 %v2461
    %v2463 = vpop.xlane.xlu0 %2462
    %v2464 = vsel %vm827, %v2436, -inf
    %2465 = vmax.xlane.f32.xlu0 %v2464
    %v2466 = vpop.xlane.xlu0 %2465
    %v2467 = vsel %vm827, %v2439, -inf
    %2468 = vmax.xlane.f32.xlu0 %v2467
    %v2469 = vpop.xlane.xlu0 %2468
    %v2470 = vsel %vm827, %v2444, -inf
    %2471 = vmax.xlane.f32.xlu0 %v2470
    %v2472 = vpop.xlane.xlu0 %2471
    %v2473 = vsel %vm827, %v2447, -inf
    %2474 = vmax.xlane.f32.xlu0 %v2473
    %v2475 = vpop.xlane.xlu0 %2474
    %v2476 = vsel %vm827, %v2452, -inf
    %2477 = vmax.xlane.f32.xlu0 %v2476
    %v2478 = vpop.xlane.xlu0 %2477
    %v2479 = vsel %vm827, %v2455, -inf
    %2480 = vmax.xlane.f32.xlu0 %v2479
    %v2481 = vpop.xlane.xlu0 %2480
    %v2482 = vsub.f32 %v2428, %v2460
    %v2483 = vsub.f32 %v2431, %v2463
    %v2484 = vsub.f32 %v2436, %v2466
    %v2485 = vsub.f32 %v2439, %v2469
    %v2486 = vsub.f32 %v2444, %v2472
    %v2487 = vsub.f32 %v2447, %v2475
    %v2488 = vsub.f32 %v2452, %v2478
    %v2489 = vsub.f32 %v2455, %v2481
    %v2490 = vmul.f32 %v2482, 1.442695
    %v2491 = vpow.pop %v2490
    %v2492 = vmul.f32 %v2483, 1.442695
    %v2493 = vpow.pop %v2492
    %v2494 = vmul.f32 %v2484, 1.442695
    %v2495 = vpow.pop %v2494
    %v2496 = vmul.f32 %v2485, 1.442695
    %v2497 = vpow.pop %v2496
    %v2498 = vmul.f32 %v2486, 1.442695
    %v2499 = vpow.pop %v2498
    %v2500 = vmul.f32 %v2487, 1.442695
    %v2501 = vpow.pop %v2500
    %v2502 = vmul.f32 %v2488, 1.442695
    %v2503 = vpow.pop %v2502
    %v2504 = vmul.f32 %v2489, 1.442695
    %v2505 = vpow.pop %v2504
    %v2506 = vsel %vm827, %v2491, 0.0
    %2507 = vadd.xlane.f32.xlu0 %v2506
    %v2508 = vpop.xlane.xlu0 %2507
    %v2509 = vsel %vm827, %v2493, 0.0
    %2510 = vadd.xlane.f32.xlu0 %v2509
    %v2511 = vpop.xlane.xlu0 %2510
    %v2512 = vsel %vm827, %v2495, 0.0
    %2513 = vadd.xlane.f32.xlu0 %v2512
    %v2514 = vpop.xlane.xlu0 %2513
    %v2515 = vsel %vm827, %v2497, 0.0
    %2516 = vadd.xlane.f32.xlu0 %v2515
    %v2517 = vpop.xlane.xlu0 %2516
    %v2518 = vsel %vm827, %v2499, 0.0
    %2519 = vadd.xlane.f32.xlu0 %v2518
    %v2520 = vpop.xlane.xlu0 %2519
    %v2521 = vsel %vm827, %v2501, 0.0
    %2522 = vadd.xlane.f32.xlu0 %v2521
    %v2523 = vpop.xlane.xlu0 %2522
    %v2524 = vsel %vm827, %v2503, 0.0
    %2525 = vadd.xlane.f32.xlu0 %v2524
    %v2526 = vpop.xlane.xlu0 %2525
    %v2527 = vsel %vm827, %v2505, 0.0
    %2528 = vadd.xlane.f32.xlu0 %v2527
    %v2529 = vpop.xlane.xlu0 %2528
    %v2530 = vrcp.pop %v2508
    %v2531 = vrcp.pop %v2511
    %v2532 = vrcp.pop %v2514
    %v2533 = vrcp.pop %v2517
    %v2534 = vrcp.pop %v2520
    %v2535 = vrcp.pop %v2523
    %v2536 = vrcp.pop %v2526
    %v2537 = vrcp.pop %v2529
    %v2538 = vmul.f32 %v2491, %v2530
    %v2539 = vmul.f32 %v2493, %v2531
    %v2540 = vmul.f32 %v2495, %v2532
    %v2541 = vmul.f32 %v2497, %v2533
    %v2542 = vmul.f32 %v2499, %v2534
    %v2543 = vmul.f32 %v2501, %v2535
    %v2544 = vmul.f32 %v2503, %v2536
    %v2545 = vmul.f32 %v2505, %v2537
    %v2546 = vpack.c.bf16 %v2539, %v2538
    %v2547 = vpack.c.bf16 %v2541, %v2540
    %v2548 = vpack.c.bf16 %v2543, %v2542
    %v2549 = vpack.c.bf16 %v2545, %v2544
    %v2558 = vunpack.c.l.b16 %v2321
    %v2559 = vunpack.c.l.b16 %v2322
    %v2560 = vunpack.c.l.b16 %v2323
    %v2561 = vunpack.c.l.b16 %v2324
    %v2562 = vunpack.c.l.b16 %v2325
    %v2563 = vunpack.c.l.b16 %v2326
    %v2564 = vunpack.c.l.b16 %v2327
    %v2565 = vunpack.c.l.b16 %v2328
    %v2566 = vpack.c.b16 %v2559, %v2558
    %v2567 = vpack.c.b16 %v2561, %v2560
    %v2568 = vpack.c.b16 %v2563, %v2562
    %v2569 = vpack.c.b16 %v2565, %v2564
    %v2575 = vsel %vm827, %v2546, 0
    %v2578 = vsel %vm827, %v2547, 0
    %v2581 = vsel %vm827, %v2548, 0
    %v2584 = vsel %vm827, %v2549, 0
    %2586 = vmatprep.subr.bf16.mxu0 0
    %2587 = vmatpush1.bf16.msra.mxu0 0
    %2588 = vmatprep.subr.bf16.mxu0 0
    %2589 = vmatpush1.bf16.msra.mxu0 0
    %2590 = vmatprep.subr.bf16.mxu0 0
    %2591 = vmatpush1.bf16.msra.mxu0 0
    %2592 = vmatprep.subr.bf16.mxu0 0
    %2593 = vmatpush1.bf16.msra.mxu0 0
    %2594 = vmatprep.subr.bf16.mxu0 0
    %2595 = vmatpush1.bf16.msra.mxu0 %v2569
    %2596 = vmatprep.subr.bf16.mxu0 0
    %2597 = vmatpush1.bf16.msra.mxu0 %v2568
    %2598 = vmatprep.subr.bf16.mxu0 0
    %2599 = vmatpush1.bf16.msra.mxu0 %v2567
    %2600 = vmatprep.subr.bf16.mxu0 0
    %2601 = vmatpush1.bf16.msra.mxu0 %v2566
    %2602 = vmatprep.subr.bf16.mxu0 0
    %2603 = vmatpush2.bf16.msra.mxu0 0
    %2604 = vmatprep.subr.bf16.mxu0 0
    %2605 = vmatpush2.bf16.msra.mxu0 0
    %2606 = vmatprep.subr.bf16.mxu0 0
    %2607 = vmatpush2.bf16.msra.mxu0 0
    %2608 = vmatprep.subr.bf16.mxu0 0
    %2609 = vmatpush2.bf16.msra.mxu0 0
    %2610 = vmatprep.subr.bf16.mxu0 0
    %2611 = vmatpush2.bf16.msra.mxu0 0
    %2612 = vmatprep.subr.bf16.mxu0 0
    %2613 = vmatpush2.bf16.msra.mxu0 0
    %2614 = vmatprep.subr.bf16.mxu0 0
    %2615 = vmatpush2.bf16.msra.mxu0 0
    %2616 = vmatprep.subr.bf16.mxu0 0
    %2617 = vmatpush2.bf16.msra.mxu0 0
    %2618 = vmatprep.mubr.bf16.mxu0 0
    %2619 = vmatmul.mubr.bf16.gmra.mxu0 %v2575
    %v2620 = vpop.f32.mrf.mxu0
    %v2621 = vadd.f32 0.0, %v2620
    %v2622 = vpop.f32.mrf.mxu0
    %v2623 = vpop.f32.mrf.mxu0
    %v2624 = vadd.f32 0.0, %v2623
    %v2625 = vpop.f32.mrf.mxu0
    %2626 = vmatprep.mubr.bf16.mxu0 0
    %2627 = vmatmul.mubr.bf16.gmra.mxu0 %v2578
    %v2628 = vpop.f32.mrf.mxu0
    %v2629 = vadd.f32 0.0, %v2628
    %v2630 = vpop.f32.mrf.mxu0
    %v2631 = vpop.f32.mrf.mxu0
    %v2632 = vadd.f32 0.0, %v2631
    %v2633 = vpop.f32.mrf.mxu0
    %2634 = vmatprep.mubr.bf16.mxu0 0
    %2635 = vmatmul.mubr.bf16.gmra.mxu0 %v2581
    %v2636 = vpop.f32.mrf.mxu0
    %v2637 = vadd.f32 0.0, %v2636
    %v2638 = vpop.f32.mrf.mxu0
    %v2639 = vpop.f32.mrf.mxu0
    %v2640 = vadd.f32 0.0, %v2639
    %v2641 = vpop.f32.mrf.mxu0
    %2642 = vmatprep.mubr.bf16.mxu0 0
    %2643 = vmatmul.mubr.bf16.gmra.mxu0 %v2584
    %v2644 = vpop.f32.mrf.mxu0
    %v2645 = vadd.f32 0.0, %v2644
    %v2646 = vpop.f32.mrf.mxu0
    %v2647 = vpop.f32.mrf.mxu0
    %v2648 = vadd.f32 0.0, %v2647
    %v2649 = vpop.f32.mrf.mxu0
    %2650 = vdwg.mxu0
    %v2651 = vpack.c.bf16 %v2624, %v2621
    %v2652 = vpack.c.bf16 %v2632, %v2629
    %v2653 = vpack.c.bf16 %v2640, %v2637
    %v2654 = vpack.c.bf16 %v2648, %v2645
    %v2655 = vld [vmem:[%s2] sm:$0xf]
    %v2656 = vld [vmem:[%s2 + $0x4] sm:$0xf]
    %v2657 = vld [vmem:[%s2 + $0x8] sm:$0xf]
    %v2658 = vld [vmem:[%s2 + $0xc] sm:$0xf]
    %2659 = vrot.lane.b32.xlu0 %v2345, 96
    %v2660 = vpop.permute.xlu0 %2659
    %2661 = vrot.lane.b32.xlu0 %v2346, 96
    %v2662 = vpop.permute.xlu0 %2661
    %2663 = vrot.lane.b32.xlu0 %v2347, 96
    %v2664 = vpop.permute.xlu0 %2663
    %2665 = vrot.lane.b32.xlu0 %v2348, 96
    %v2666 = vpop.permute.xlu0 %2665
    %2667 = vrot.lane.b32.xlu0 %v2365, 96
    %v2668 = vpop.permute.xlu0 %2667
    %2669 = vrot.lane.b32.xlu0 %v2366, 96
    %v2670 = vpop.permute.xlu0 %2669
    %2671 = vrot.lane.b32.xlu0 %v2367, 96
    %v2672 = vpop.permute.xlu0 %2671
    %2673 = vrot.lane.b32.xlu0 %v2368, 96
    %v2674 = vpop.permute.xlu0 %2673
    %v2676 = vsel %vm737, %v2660, 0
    %v2679 = vsel %vm737, %v2662, 0
    %v2682 = vsel %vm737, %v2664, 0
    %v2685 = vsel %vm737, %v2666, 0
    %v2688 = vsel %vm737, %v2668, 0
    %v2691 = vsel %vm737, %v2670, 0
    %v2694 = vsel %vm737, %v2672, 0
    %v2697 = vsel %vm737, %v2674, 0
    %2699 = vmatprep.subr.bf16.mxu0 0
    %2700 = vmatpush1.bf16.xpose.msra.mxu0 0
    %2701 = vmatprep.subr.bf16.mxu0 0
    %2702 = vmatpush1.bf16.xpose.msra.mxu0 0
    %2703 = vmatprep.subr.bf16.mxu0 0
    %2704 = vmatpush1.bf16.xpose.msra.mxu0 0
    %2705 = vmatprep.subr.bf16.mxu0 0
    %2706 = vmatpush1.bf16.xpose.msra.mxu0 0
    %2707 = vmatprep.subr.bf16.mxu0 0
    %2708 = vmatpush1.bf16.xpose.msra.mxu0 %v2697
    %2709 = vmatprep.subr.bf16.mxu0 0
    %2710 = vmatpush1.bf16.xpose.msra.mxu0 %v2694
    %2711 = vmatprep.subr.bf16.mxu0 0
    %2712 = vmatpush1.bf16.xpose.msra.mxu0 %v2691
    %2713 = vmatprep.subr.bf16.mxu0 0
    %2714 = vmatpush1.bf16.xpose.msra.mxu0 %v2688
    %2715 = vmatprep.subr.bf16.mxu0 0
    %2716 = vmatpush2.bf16.xpose.msra.mxu0 0
    %2717 = vmatprep.subr.bf16.mxu0 0
    %2718 = vmatpush2.bf16.xpose.msra.mxu0 0
    %2719 = vmatprep.subr.bf16.mxu0 0
    %2720 = vmatpush2.bf16.xpose.msra.mxu0 0
    %2721 = vmatprep.subr.bf16.mxu0 0
    %2722 = vmatpush2.bf16.xpose.msra.mxu0 0
    %2723 = vmatprep.subr.bf16.mxu0 0
    %2724 = vmatpush2.bf16.xpose.msra.mxu0 0
    %2725 = vmatprep.subr.bf16.mxu0 0
    %2726 = vmatpush2.bf16.xpose.msra.mxu0 0
    %2727 = vmatprep.subr.bf16.mxu0 0
    %2728 = vmatpush2.bf16.xpose.msra.mxu0 0
    %2729 = vmatprep.subr.bf16.mxu0 0
    %2730 = vmatpush2.bf16.xpose.msra.mxu0 0
    %2731 = vmatprep.mubr.bf16.mxu0 0
    %2732 = vmatmul.mubr.bf16.gmra.mxu0 %v2676
    %v2733 = vpop.f32.mrf.mxu0
    %v2734 = vadd.f32 %v664, %v2733
    %v2735 = vpop.f32.mrf.mxu0
    %v2736 = vpop.f32.mrf.mxu0
    %v2737 = vadd.f32 %v665, %v2736
    %v2738 = vpop.f32.mrf.mxu0
    %2739 = vmatprep.mubr.bf16.mxu0 0
    %2740 = vmatmul.mubr.bf16.gmra.mxu0 %v2679
    %v2741 = vpop.f32.mrf.mxu0
    %v2742 = vadd.f32 %v666, %v2741
    %v2743 = vpop.f32.mrf.mxu0
    %v2744 = vpop.f32.mrf.mxu0
    %v2745 = vadd.f32 %v667, %v2744
    %v2746 = vpop.f32.mrf.mxu0
    %2747 = vmatprep.mubr.bf16.mxu0 0
    %2748 = vmatmul.mubr.bf16.gmra.mxu0 %v2682
    %v2749 = vpop.f32.mrf.mxu0
    %v2750 = vadd.f32 %v668, %v2749
    %v2751 = vpop.f32.mrf.mxu0
    %v2752 = vpop.f32.mrf.mxu0
    %v2753 = vadd.f32 %v669, %v2752
    %v2754 = vpop.f32.mrf.mxu0
    %2755 = vmatprep.mubr.bf16.mxu0 0
    %2756 = vmatmul.mubr.bf16.gmra.mxu0 %v2685
    %v2757 = vpop.f32.mrf.mxu0
    %v2758 = vadd.f32 %v670, %v2757
    %v2759 = vpop.f32.mrf.mxu0
    %v2760 = vpop.f32.mrf.mxu0
    %v2761 = vadd.f32 %v671, %v2760
    %v2762 = vpop.f32.mrf.mxu0
    %2763 = vdwg.mxu0
    %v2764 = vsel %vm827, %v2734, -inf
    %2765 = vmax.xlane.f32.xlu0 %v2764
    %v2766 = vpop.xlane.xlu0 %2765
    %v2767 = vsel %vm827, %v2737, -inf
    %2768 = vmax.xlane.f32.xlu0 %v2767
    %v2769 = vpop.xlane.xlu0 %2768
    %v2770 = vsel %vm827, %v2742, -inf
    %2771 = vmax.xlane.f32.xlu0 %v2770
    %v2772 = vpop.xlane.xlu0 %2771
    %v2773 = vsel %vm827, %v2745, -inf
    %2774 = vmax.xlane.f32.xlu0 %v2773
    %v2775 = vpop.xlane.xlu0 %2774
    %v2776 = vsel %vm827, %v2750, -inf
    %2777 = vmax.xlane.f32.xlu0 %v2776
    %v2778 = vpop.xlane.xlu0 %2777
    %v2779 = vsel %vm827, %v2753, -inf
    %2780 = vmax.xlane.f32.xlu0 %v2779
    %v2781 = vpop.xlane.xlu0 %2780
    %v2782 = vsel %vm827, %v2758, -inf
    %2783 = vmax.xlane.f32.xlu0 %v2782
    %v2784 = vpop.xlane.xlu0 %2783
    %v2785 = vsel %vm827, %v2761, -inf
    %2786 = vmax.xlane.f32.xlu0 %v2785
    %v2787 = vpop.xlane.xlu0 %2786
    %v2788 = vsub.f32 %v2734, %v2766
    %v2789 = vsub.f32 %v2737, %v2769
    %v2790 = vsub.f32 %v2742, %v2772
    %v2791 = vsub.f32 %v2745, %v2775
    %v2792 = vsub.f32 %v2750, %v2778
    %v2793 = vsub.f32 %v2753, %v2781
    %v2794 = vsub.f32 %v2758, %v2784
    %v2795 = vsub.f32 %v2761, %v2787
    %v2796 = vmul.f32 %v2788, 1.442695
    %v2797 = vpow.pop %v2796
    %v2798 = vmul.f32 %v2789, 1.442695
    %v2799 = vpow.pop %v2798
    %v2800 = vmul.f32 %v2790, 1.442695
    %v2801 = vpow.pop %v2800
    %v2802 = vmul.f32 %v2791, 1.442695
    %v2803 = vpow.pop %v2802
    %v2804 = vmul.f32 %v2792, 1.442695
    %v2805 = vpow.pop %v2804
    %v2806 = vmul.f32 %v2793, 1.442695
    %v2807 = vpow.pop %v2806
    %v2808 = vmul.f32 %v2794, 1.442695
    %v2809 = vpow.pop %v2808
    %v2810 = vmul.f32 %v2795, 1.442695
    %v2811 = vpow.pop %v2810
    %v2812 = vsel %vm827, %v2797, 0.0
    %2813 = vadd.xlane.f32.xlu0 %v2812
    %v2814 = vpop.xlane.xlu0 %2813
    %v2815 = vsel %vm827, %v2799, 0.0
    %2816 = vadd.xlane.f32.xlu0 %v2815
    %v2817 = vpop.xlane.xlu0 %2816
    %v2818 = vsel %vm827, %v2801, 0.0
    %2819 = vadd.xlane.f32.xlu0 %v2818
    %v2820 = vpop.xlane.xlu0 %2819
    %v2821 = vsel %vm827, %v2803, 0.0
    %2822 = vadd.xlane.f32.xlu0 %v2821
    %v2823 = vpop.xlane.xlu0 %2822
    %v2824 = vsel %vm827, %v2805, 0.0
    %2825 = vadd.xlane.f32.xlu0 %v2824
    %v2826 = vpop.xlane.xlu0 %2825
    %v2827 = vsel %vm827, %v2807, 0.0
    %2828 = vadd.xlane.f32.xlu0 %v2827
    %v2829 = vpop.xlane.xlu0 %2828
    %v2830 = vsel %vm827, %v2809, 0.0
    %2831 = vadd.xlane.f32.xlu0 %v2830
    %v2832 = vpop.xlane.xlu0 %2831
    %v2833 = vsel %vm827, %v2811, 0.0
    %2834 = vadd.xlane.f32.xlu0 %v2833
    %v2835 = vpop.xlane.xlu0 %2834
    %v2836 = vrcp.pop %v2814
    %v2837 = vrcp.pop %v2817
    %v2838 = vrcp.pop %v2820
    %v2839 = vrcp.pop %v2823
    %v2840 = vrcp.pop %v2826
    %v2841 = vrcp.pop %v2829
    %v2842 = vrcp.pop %v2832
    %v2843 = vrcp.pop %v2835
    %v2844 = vmul.f32 %v2797, %v2836
    %v2845 = vmul.f32 %v2799, %v2837
    %v2846 = vmul.f32 %v2801, %v2838
    %v2847 = vmul.f32 %v2803, %v2839
    %v2848 = vmul.f32 %v2805, %v2840
    %v2849 = vmul.f32 %v2807, %v2841
    %v2850 = vmul.f32 %v2809, %v2842
    %v2851 = vmul.f32 %v2811, %v2843
    %v2852 = vpack.c.bf16 %v2845, %v2844
    %v2853 = vpack.c.bf16 %v2847, %v2846
    %v2854 = vpack.c.bf16 %v2849, %v2848
    %v2855 = vpack.c.bf16 %v2851, %v2850
    %2856 = vrot.lane.b32.xlu0 %v2566, 96
    %v2857 = vpop.permute.xlu0 %2856
    %2858 = vrot.lane.b32.xlu0 %v2567, 96
    %v2859 = vpop.permute.xlu0 %2858
    %2860 = vrot.lane.b32.xlu0 %v2568, 96
    %v2861 = vpop.permute.xlu0 %2860
    %2862 = vrot.lane.b32.xlu0 %v2569, 96
    %v2863 = vpop.permute.xlu0 %2862
    %v2869 = vsel %vm827, %v2852, 0
    %v2872 = vsel %vm827, %v2853, 0
    %v2875 = vsel %vm827, %v2854, 0
    %v2878 = vsel %vm827, %v2855, 0
    %2880 = vmatprep.subr.bf16.mxu0 0
    %2881 = vmatpush1.bf16.msra.mxu0 0
    %2882 = vmatprep.subr.bf16.mxu0 0
    %2883 = vmatpush1.bf16.msra.mxu0 0
    %2884 = vmatprep.subr.bf16.mxu0 0
    %2885 = vmatpush1.bf16.msra.mxu0 0
    %2886 = vmatprep.subr.bf16.mxu0 0
    %2887 = vmatpush1.bf16.msra.mxu0 0
    %2888 = vmatprep.subr.bf16.mxu0 0
    %2889 = vmatpush1.bf16.msra.mxu0 %v2863
    %2890 = vmatprep.subr.bf16.mxu0 0
    %2891 = vmatpush1.bf16.msra.mxu0 %v2861
    %2892 = vmatprep.subr.bf16.mxu0 0
    %2893 = vmatpush1.bf16.msra.mxu0 %v2859
    %2894 = vmatprep.subr.bf16.mxu0 0
    %2895 = vmatpush1.bf16.msra.mxu0 %v2857
    %2896 = vmatprep.subr.bf16.mxu0 0
    %2897 = vmatpush2.bf16.msra.mxu0 0
    %2898 = vmatprep.subr.bf16.mxu0 0
    %2899 = vmatpush2.bf16.msra.mxu0 0
    %2900 = vmatprep.subr.bf16.mxu0 0
    %2901 = vmatpush2.bf16.msra.mxu0 0
    %2902 = vmatprep.subr.bf16.mxu0 0
    %2903 = vmatpush2.bf16.msra.mxu0 0
    %2904 = vmatprep.subr.bf16.mxu0 0
    %2905 = vmatpush2.bf16.msra.mxu0 0
    %2906 = vmatprep.subr.bf16.mxu0 0
    %2907 = vmatpush2.bf16.msra.mxu0 0
    %2908 = vmatprep.subr.bf16.mxu0 0
    %2909 = vmatpush2.bf16.msra.mxu0 0
    %2910 = vmatprep.subr.bf16.mxu0 0
    %2911 = vmatpush2.bf16.msra.mxu0 0
    %2912 = vmatprep.mubr.bf16.mxu0 0
    %2913 = vmatmul.mubr.bf16.gmra.mxu0 %v2869
    %v2914 = vpop.f32.mrf.mxu0
    %v2915 = vadd.f32 0.0, %v2914
    %v2916 = vpop.f32.mrf.mxu0
    %v2917 = vpop.f32.mrf.mxu0
    %v2918 = vadd.f32 0.0, %v2917
    %v2919 = vpop.f32.mrf.mxu0
    %2920 = vmatprep.mubr.bf16.mxu0 0
    %2921 = vmatmul.mubr.bf16.gmra.mxu0 %v2872
    %v2922 = vpop.f32.mrf.mxu0
    %v2923 = vadd.f32 0.0, %v2922
    %v2924 = vpop.f32.mrf.mxu0
    %v2925 = vpop.f32.mrf.mxu0
    %v2926 = vadd.f32 0.0, %v2925
    %v2927 = vpop.f32.mrf.mxu0
    %2928 = vmatprep.mubr.bf16.mxu0 0
    %2929 = vmatmul.mubr.bf16.gmra.mxu0 %v2875
    %v2930 = vpop.f32.mrf.mxu0
    %v2931 = vadd.f32 0.0, %v2930
    %v2932 = vpop.f32.mrf.mxu0
    %v2933 = vpop.f32.mrf.mxu0
    %v2934 = vadd.f32 0.0, %v2933
    %v2935 = vpop.f32.mrf.mxu0
    %2936 = vmatprep.mubr.bf16.mxu0 0
    %2937 = vmatmul.mubr.bf16.gmra.mxu0 %v2878
    %v2938 = vpop.f32.mrf.mxu0
    %v2939 = vadd.f32 0.0, %v2938
    %v2940 = vpop.f32.mrf.mxu0
    %v2941 = vpop.f32.mrf.mxu0
    %v2942 = vadd.f32 0.0, %v2941
    %v2943 = vpop.f32.mrf.mxu0
    %2944 = vdwg.mxu0
    %v2945 = vpack.c.bf16 %v2918, %v2915
    %v2946 = vpack.c.bf16 %v2926, %v2923
    %v2947 = vpack.c.bf16 %v2934, %v2931
    %v2948 = vpack.c.bf16 %v2942, %v2939
    %v2949 = vld [vmem:[%s2 + $0x10] sm:$0xf]
    %v2950 = vld [vmem:[%s2 + $0x14] sm:$0xf]
    %v2951 = vld [vmem:[%s2 + $0x18] sm:$0xf]
    %v2952 = vld [vmem:[%s2 + $0x1c] sm:$0xf]
    %v2957 = vunpack.c.l.b16 %v2949
    %v2958 = vunpack.c.l.b16 %v2950
    %v2959 = vunpack.c.l.b16 %v2951
    %v2960 = vunpack.c.l.b16 %v2952
    %v2961 = vpack.c.b16 %v2958, %v2957
    %v2962 = vpack.c.b16 %v2960, %v2959
    %v2966 = vsel %vm737, %v2945, 0
    %v2969 = vsel %vm737, %v2946, 0
    %v2972 = vsel %vm737, %v2947, 0
    %v2975 = vsel %vm737, %v2948, 0
    %2977 = vmatprep.subr.bf16.mxu0 0
    %2978 = vmatpush1.bf16.msra.mxu0 0
    %2979 = vmatprep.subr.bf16.mxu0 0
    %2980 = vmatpush1.bf16.msra.mxu0 0
    %2981 = vmatprep.subr.bf16.mxu0 0
    %2982 = vmatpush1.bf16.msra.mxu0 0
    %2983 = vmatprep.subr.bf16.mxu0 0
    %2984 = vmatpush1.bf16.msra.mxu0 0
    %2985 = vmatprep.subr.bf16.mxu0 0
    %2986 = vmatpush1.bf16.msra.mxu0 0
    %2987 = vmatprep.subr.bf16.mxu0 0
    %2988 = vmatpush1.bf16.msra.mxu0 0
    %2989 = vmatprep.subr.bf16.mxu0 0
    %2990 = vmatpush1.bf16.msra.mxu0 %v2962
    %2991 = vmatprep.subr.bf16.mxu0 0
    %2992 = vmatpush1.bf16.msra.mxu0 %v2961
    %2993 = vmatprep.subr.bf16.mxu0 0
    %2994 = vmatpush2.bf16.msra.mxu0 0
    %2995 = vmatprep.subr.bf16.mxu0 0
    %2996 = vmatpush2.bf16.msra.mxu0 0
    %2997 = vmatprep.subr.bf16.mxu0 0
    %2998 = vmatpush2.bf16.msra.mxu0 0
    %2999 = vmatprep.subr.bf16.mxu0 0
    %3000 = vmatpush2.bf16.msra.mxu0 0
    %3001 = vmatprep.subr.bf16.mxu0 0
    %3002 = vmatpush2.bf16.msra.mxu0 0
    %3003 = vmatprep.subr.bf16.mxu0 0
    %3004 = vmatpush2.bf16.msra.mxu0 0
    %3005 = vmatprep.subr.bf16.mxu0 0
    %3006 = vmatpush2.bf16.msra.mxu0 0
    %3007 = vmatprep.subr.bf16.mxu0 0
    %3008 = vmatpush2.bf16.msra.mxu0 0
    %3009 = vmatprep.mubr.bf16.mxu0 0
    %3010 = vmatmul.mubr.bf16.gmra.mxu0 %v2966
    %v3011 = vpop.f32.mrf.mxu0
    %v3012 = vadd.f32 0.0, %v3011
    %v3013 = vpop.f32.mrf.mxu0
    %v3014 = vpop.f32.mrf.mxu0
    %v3015 = vadd.f32 0.0, %v3014
    %v3016 = vpop.f32.mrf.mxu0
    %3017 = vmatprep.mubr.bf16.mxu0 0
    %3018 = vmatmul.mubr.bf16.gmra.mxu0 %v2969
    %v3019 = vpop.f32.mrf.mxu0
    %v3020 = vadd.f32 0.0, %v3019
    %v3021 = vpop.f32.mrf.mxu0
    %v3022 = vpop.f32.mrf.mxu0
    %v3023 = vadd.f32 0.0, %v3022
    %v3024 = vpop.f32.mrf.mxu0
    %3025 = vmatprep.mubr.bf16.mxu0 0
    %3026 = vmatmul.mubr.bf16.gmra.mxu0 %v2972
    %v3027 = vpop.f32.mrf.mxu0
    %v3028 = vadd.f32 0.0, %v3027
    %v3029 = vpop.f32.mrf.mxu0
    %v3030 = vpop.f32.mrf.mxu0
    %v3031 = vadd.f32 0.0, %v3030
    %v3032 = vpop.f32.mrf.mxu0
    %3033 = vmatprep.mubr.bf16.mxu0 0
    %3034 = vmatmul.mubr.bf16.gmra.mxu0 %v2975
    %v3035 = vpop.f32.mrf.mxu0
    %v3036 = vadd.f32 0.0, %v3035
    %v3037 = vpop.f32.mrf.mxu0
    %v3038 = vpop.f32.mrf.mxu0
    %v3039 = vadd.f32 0.0, %v3038
    %v3040 = vpop.f32.mrf.mxu0
    %3041 = vdwg.mxu0
    %v3046 = vunpack.c.l.b16 %v2655
    %v3047 = vunpack.c.l.b16 %v2656
    %v3048 = vunpack.c.l.b16 %v2657
    %v3049 = vunpack.c.l.b16 %v2658
    %v3050 = vpack.c.b16 %v3047, %v3046
    %v3051 = vpack.c.b16 %v3049, %v3048
    %v3055 = vsel %vm737, %v2651, 0
    %v3058 = vsel %vm737, %v2652, 0
    %v3061 = vsel %vm737, %v2653, 0
    %v3064 = vsel %vm737, %v2654, 0
    %3066 = vmatprep.subr.bf16.mxu0 0
    %3067 = vmatpush1.bf16.msra.mxu0 0
    %3068 = vmatprep.subr.bf16.mxu0 0
    %3069 = vmatpush1.bf16.msra.mxu0 0
    %3070 = vmatprep.subr.bf16.mxu0 0
    %3071 = vmatpush1.bf16.msra.mxu0 0
    %3072 = vmatprep.subr.bf16.mxu0 0
    %3073 = vmatpush1.bf16.msra.mxu0 0
    %3074 = vmatprep.subr.bf16.mxu0 0
    %3075 = vmatpush1.bf16.msra.mxu0 0
    %3076 = vmatprep.subr.bf16.mxu0 0
    %3077 = vmatpush1.bf16.msra.mxu0 0
    %3078 = vmatprep.subr.bf16.mxu0 0
    %3079 = vmatpush1.bf16.msra.mxu0 %v3051
    %3080 = vmatprep.subr.bf16.mxu0 0
    %3081 = vmatpush1.bf16.msra.mxu0 %v3050
    %3082 = vmatprep.subr.bf16.mxu0 0
    %3083 = vmatpush2.bf16.msra.mxu0 0
    %3084 = vmatprep.subr.bf16.mxu0 0
    %3085 = vmatpush2.bf16.msra.mxu0 0
    %3086 = vmatprep.subr.bf16.mxu0 0
    %3087 = vmatpush2.bf16.msra.mxu0 0
    %3088 = vmatprep.subr.bf16.mxu0 0
    %3089 = vmatpush2.bf16.msra.mxu0 0
    %3090 = vmatprep.subr.bf16.mxu0 0
    %3091 = vmatpush2.bf16.msra.mxu0 0
    %3092 = vmatprep.subr.bf16.mxu0 0
    %3093 = vmatpush2.bf16.msra.mxu0 0
    %3094 = vmatprep.subr.bf16.mxu0 0
    %3095 = vmatpush2.bf16.msra.mxu0 0
    %3096 = vmatprep.subr.bf16.mxu0 0
    %3097 = vmatpush2.bf16.msra.mxu0 0
    %3098 = vmatprep.mubr.bf16.mxu0 0
    %3099 = vmatmul.mubr.bf16.gmra.mxu0 %v3055
    %v3100 = vpop.f32.mrf.mxu0
    %v3101 = vadd.f32 %v3012, %v3100
    %v3102 = vpop.f32.mrf.mxu0
    %v3103 = vpop.f32.mrf.mxu0
    %v3104 = vadd.f32 %v3015, %v3103
    %v3105 = vpop.f32.mrf.mxu0
    %3106 = vmatprep.mubr.bf16.mxu0 0
    %3107 = vmatmul.mubr.bf16.gmra.mxu0 %v3058
    %v3108 = vpop.f32.mrf.mxu0
    %v3109 = vadd.f32 %v3020, %v3108
    %v3110 = vpop.f32.mrf.mxu0
    %v3111 = vpop.f32.mrf.mxu0
    %v3112 = vadd.f32 %v3023, %v3111
    %v3113 = vpop.f32.mrf.mxu0
    %3114 = vmatprep.mubr.bf16.mxu0 0
    %3115 = vmatmul.mubr.bf16.gmra.mxu0 %v3061
    %v3116 = vpop.f32.mrf.mxu0
    %v3117 = vadd.f32 %v3028, %v3116
    %v3118 = vpop.f32.mrf.mxu0
    %v3119 = vpop.f32.mrf.mxu0
    %v3120 = vadd.f32 %v3031, %v3119
    %v3121 = vpop.f32.mrf.mxu0
    %3122 = vmatprep.mubr.bf16.mxu0 0
    %3123 = vmatmul.mubr.bf16.gmra.mxu0 %v3064
    %v3124 = vpop.f32.mrf.mxu0
    %v3125 = vadd.f32 %v3036, %v3124
    %v3126 = vpop.f32.mrf.mxu0
    %v3127 = vpop.f32.mrf.mxu0
    %v3128 = vadd.f32 %v3039, %v3127
    %v3129 = vpop.f32.mrf.mxu0
    %3130 = vdwg.mxu0
    %3131 = vrot.lane.b32.xlu0 %v2345, 64
    %v3132 = vpop.permute.xlu0 %3131
    %3133 = vrot.lane.b32.xlu0 %v2346, 64
    %v3134 = vpop.permute.xlu0 %3133
    %3135 = vrot.lane.b32.xlu0 %v2347, 64
    %v3136 = vpop.permute.xlu0 %3135
    %3137 = vrot.lane.b32.xlu0 %v2348, 64
    %v3138 = vpop.permute.xlu0 %3137
    %3139 = vrot.lane.b32.xlu0 %v2365, 64
    %v3140 = vpop.permute.xlu0 %3139
    %3141 = vrot.lane.b32.xlu0 %v2366, 64
    %v3142 = vpop.permute.xlu0 %3141
    %3143 = vrot.lane.b32.xlu0 %v2367, 64
    %v3144 = vpop.permute.xlu0 %3143
    %3145 = vrot.lane.b32.xlu0 %v2368, 64
    %v3146 = vpop.permute.xlu0 %3145
    %v3148 = vsel %vm737, %v3132, 0
    %v3151 = vsel %vm737, %v3134, 0
    %v3154 = vsel %vm737, %v3136, 0
    %v3157 = vsel %vm737, %v3138, 0
    %v3160 = vsel %vm737, %v3140, 0
    %v3163 = vsel %vm737, %v3142, 0
    %v3166 = vsel %vm737, %v3144, 0
    %v3169 = vsel %vm737, %v3146, 0
    %3171 = vmatprep.subr.bf16.mxu0 0
    %3172 = vmatpush1.bf16.xpose.msra.mxu0 0
    %3173 = vmatprep.subr.bf16.mxu0 0
    %3174 = vmatpush1.bf16.xpose.msra.mxu0 0
    %3175 = vmatprep.subr.bf16.mxu0 0
    %3176 = vmatpush1.bf16.xpose.msra.mxu0 0
    %3177 = vmatprep.subr.bf16.mxu0 0
    %3178 = vmatpush1.bf16.xpose.msra.mxu0 0
    %3179 = vmatprep.subr.bf16.mxu0 0
    %3180 = vmatpush1.bf16.xpose.msra.mxu0 %v3169
    %3181 = vmatprep.subr.bf16.mxu0 0
    %3182 = vmatpush1.bf16.xpose.msra.mxu0 %v3166
    %3183 = vmatprep.subr.bf16.mxu0 0
    %3184 = vmatpush1.bf16.xpose.msra.mxu0 %v3163
    %3185 = vmatprep.subr.bf16.mxu0 0
    %3186 = vmatpush1.bf16.xpose.msra.mxu0 %v3160
    %3187 = vmatprep.subr.bf16.mxu0 0
    %3188 = vmatpush2.bf16.xpose.msra.mxu0 0
    %3189 = vmatprep.subr.bf16.mxu0 0
    %3190 = vmatpush2.bf16.xpose.msra.mxu0 0
    %3191 = vmatprep.subr.bf16.mxu0 0
    %3192 = vmatpush2.bf16.xpose.msra.mxu0 0
    %3193 = vmatprep.subr.bf16.mxu0 0
    %3194 = vmatpush2.bf16.xpose.msra.mxu0 0
    %3195 = vmatprep.subr.bf16.mxu0 0
    %3196 = vmatpush2.bf16.xpose.msra.mxu0 0
    %3197 = vmatprep.subr.bf16.mxu0 0
    %3198 = vmatpush2.bf16.xpose.msra.mxu0 0
    %3199 = vmatprep.subr.bf16.mxu0 0
    %3200 = vmatpush2.bf16.xpose.msra.mxu0 0
    %3201 = vmatprep.subr.bf16.mxu0 0
    %3202 = vmatpush2.bf16.xpose.msra.mxu0 0
    %3203 = vmatprep.mubr.bf16.mxu0 0
    %3204 = vmatmul.mubr.bf16.gmra.mxu0 %v3148
    %v3205 = vpop.f32.mrf.mxu0
    %v3206 = vadd.f32 %v664, %v3205
    %v3207 = vpop.f32.mrf.mxu0
    %v3208 = vpop.f32.mrf.mxu0
    %v3209 = vadd.f32 %v665, %v3208
    %v3210 = vpop.f32.mrf.mxu0
    %3211 = vmatprep.mubr.bf16.mxu0 0
    %3212 = vmatmul.mubr.bf16.gmra.mxu0 %v3151
    %v3213 = vpop.f32.mrf.mxu0
    %v3214 = vadd.f32 %v666, %v3213
    %v3215 = vpop.f32.mrf.mxu0
    %v3216 = vpop.f32.mrf.mxu0
    %v3217 = vadd.f32 %v667, %v3216
    %v3218 = vpop.f32.mrf.mxu0
    %3219 = vmatprep.mubr.bf16.mxu0 0
    %3220 = vmatmul.mubr.bf16.gmra.mxu0 %v3154
    %v3221 = vpop.f32.mrf.mxu0
    %v3222 = vadd.f32 %v668, %v3221
    %v3223 = vpop.f32.mrf.mxu0
    %v3224 = vpop.f32.mrf.mxu0
    %v3225 = vadd.f32 %v669, %v3224
    %v3226 = vpop.f32.mrf.mxu0
    %3227 = vmatprep.mubr.bf16.mxu0 0
    %3228 = vmatmul.mubr.bf16.gmra.mxu0 %v3157
    %v3229 = vpop.f32.mrf.mxu0
    %v3230 = vadd.f32 %v670, %v3229
    %v3231 = vpop.f32.mrf.mxu0
    %v3232 = vpop.f32.mrf.mxu0
    %v3233 = vadd.f32 %v671, %v3232
    %v3234 = vpop.f32.mrf.mxu0
    %3235 = vdwg.mxu0
    %v3236 = vsel %vm827, %v3206, -inf
    %3237 = vmax.xlane.f32.xlu0 %v3236
    %v3238 = vpop.xlane.xlu0 %3237
    %v3239 = vsel %vm827, %v3209, -inf
    %3240 = vmax.xlane.f32.xlu0 %v3239
    %v3241 = vpop.xlane.xlu0 %3240
    %v3242 = vsel %vm827, %v3214, -inf
    %3243 = vmax.xlane.f32.xlu0 %v3242
    %v3244 = vpop.xlane.xlu0 %3243
    %v3245 = vsel %vm827, %v3217, -inf
    %3246 = vmax.xlane.f32.xlu0 %v3245
    %v3247 = vpop.xlane.xlu0 %3246
    %v3248 = vsel %vm827, %v3222, -inf
    %3249 = vmax.xlane.f32.xlu0 %v3248
    %v3250 = vpop.xlane.xlu0 %3249
    %v3251 = vsel %vm827, %v3225, -inf
    %3252 = vmax.xlane.f32.xlu0 %v3251
    %v3253 = vpop.xlane.xlu0 %3252
    %v3254 = vsel %vm827, %v3230, -inf
    %3255 = vmax.xlane.f32.xlu0 %v3254
    %v3256 = vpop.xlane.xlu0 %3255
    %v3257 = vsel %vm827, %v3233, -inf
    %3258 = vmax.xlane.f32.xlu0 %v3257
    %v3259 = vpop.xlane.xlu0 %3258
    %v3260 = vsub.f32 %v3206, %v3238
    %v3261 = vsub.f32 %v3209, %v3241
    %v3262 = vsub.f32 %v3214, %v3244
    %v3263 = vsub.f32 %v3217, %v3247
    %v3264 = vsub.f32 %v3222, %v3250
    %v3265 = vsub.f32 %v3225, %v3253
    %v3266 = vsub.f32 %v3230, %v3256
    %v3267 = vsub.f32 %v3233, %v3259
    %v3268 = vmul.f32 %v3260, 1.442695
    %v3269 = vpow.pop %v3268
    %v3270 = vmul.f32 %v3261, 1.442695
    %v3271 = vpow.pop %v3270
    %v3272 = vmul.f32 %v3262, 1.442695
    %v3273 = vpow.pop %v3272
    %v3274 = vmul.f32 %v3263, 1.442695
    %v3275 = vpow.pop %v3274
    %v3276 = vmul.f32 %v3264, 1.442695
    %v3277 = vpow.pop %v3276
    %v3278 = vmul.f32 %v3265, 1.442695
    %v3279 = vpow.pop %v3278
    %v3280 = vmul.f32 %v3266, 1.442695
    %v3281 = vpow.pop %v3280
    %v3282 = vmul.f32 %v3267, 1.442695
    %v3283 = vpow.pop %v3282
    %v3284 = vsel %vm827, %v3269, 0.0
    %3285 = vadd.xlane.f32.xlu0 %v3284
    %v3286 = vpop.xlane.xlu0 %3285
    %v3287 = vsel %vm827, %v3271, 0.0
    %3288 = vadd.xlane.f32.xlu0 %v3287
    %v3289 = vpop.xlane.xlu0 %3288
    %v3290 = vsel %vm827, %v3273, 0.0
    %3291 = vadd.xlane.f32.xlu0 %v3290
    %v3292 = vpop.xlane.xlu0 %3291
    %v3293 = vsel %vm827, %v3275, 0.0
    %3294 = vadd.xlane.f32.xlu0 %v3293
    %v3295 = vpop.xlane.xlu0 %3294
    %v3296 = vsel %vm827, %v3277, 0.0
    %3297 = vadd.xlane.f32.xlu0 %v3296
    %v3298 = vpop.xlane.xlu0 %3297
    %v3299 = vsel %vm827, %v3279, 0.0
    %3300 = vadd.xlane.f32.xlu0 %v3299
    %v3301 = vpop.xlane.xlu0 %3300
    %v3302 = vsel %vm827, %v3281, 0.0
    %3303 = vadd.xlane.f32.xlu0 %v3302
    %v3304 = vpop.xlane.xlu0 %3303
    %v3305 = vsel %vm827, %v3283, 0.0
    %3306 = vadd.xlane.f32.xlu0 %v3305
    %v3307 = vpop.xlane.xlu0 %3306
    %v3308 = vrcp.pop %v3286
    %v3309 = vrcp.pop %v3289
    %v3310 = vrcp.pop %v3292
    %v3311 = vrcp.pop %v3295
    %v3312 = vrcp.pop %v3298
    %v3313 = vrcp.pop %v3301
    %v3314 = vrcp.pop %v3304
    %v3315 = vrcp.pop %v3307
    %v3316 = vmul.f32 %v3269, %v3308
    %v3317 = vmul.f32 %v3271, %v3309
    %v3318 = vmul.f32 %v3273, %v3310
    %v3319 = vmul.f32 %v3275, %v3311
    %v3320 = vmul.f32 %v3277, %v3312
    %v3321 = vmul.f32 %v3279, %v3313
    %v3322 = vmul.f32 %v3281, %v3314
    %v3323 = vmul.f32 %v3283, %v3315
    %v3324 = vpack.c.bf16 %v3317, %v3316
    %v3325 = vpack.c.bf16 %v3319, %v3318
    %v3326 = vpack.c.bf16 %v3321, %v3320
    %v3327 = vpack.c.bf16 %v3323, %v3322
    %3328 = vrot.lane.b32.xlu0 %v2566, 64
    %v3329 = vpop.permute.xlu0 %3328
    %3330 = vrot.lane.b32.xlu0 %v2567, 64
    %v3331 = vpop.permute.xlu0 %3330
    %3332 = vrot.lane.b32.xlu0 %v2568, 64
    %v3333 = vpop.permute.xlu0 %3332
    %3334 = vrot.lane.b32.xlu0 %v2569, 64
    %v3335 = vpop.permute.xlu0 %3334
    %v3341 = vsel %vm827, %v3324, 0
    %v3344 = vsel %vm827, %v3325, 0
    %v3347 = vsel %vm827, %v3326, 0
    %v3350 = vsel %vm827, %v3327, 0
    %3352 = vmatprep.subr.bf16.mxu0 0
    %3353 = vmatpush1.bf16.msra.mxu0 0
    %3354 = vmatprep.subr.bf16.mxu0 0
    %3355 = vmatpush1.bf16.msra.mxu0 0
    %3356 = vmatprep.subr.bf16.mxu0 0
    %3357 = vmatpush1.bf16.msra.mxu0 0
    %3358 = vmatprep.subr.bf16.mxu0 0
    %3359 = vmatpush1.bf16.msra.mxu0 0
    %3360 = vmatprep.subr.bf16.mxu0 0
    %3361 = vmatpush1.bf16.msra.mxu0 %v3335
    %3362 = vmatprep.subr.bf16.mxu0 0
    %3363 = vmatpush1.bf16.msra.mxu0 %v3333
    %3364 = vmatprep.subr.bf16.mxu0 0
    %3365 = vmatpush1.bf16.msra.mxu0 %v3331
    %3366 = vmatprep.subr.bf16.mxu0 0
    %3367 = vmatpush1.bf16.msra.mxu0 %v3329
    %3368 = vmatprep.subr.bf16.mxu0 0
    %3369 = vmatpush2.bf16.msra.mxu0 0
    %3370 = vmatprep.subr.bf16.mxu0 0
    %3371 = vmatpush2.bf16.msra.mxu0 0
    %3372 = vmatprep.subr.bf16.mxu0 0
    %3373 = vmatpush2.bf16.msra.mxu0 0
    %3374 = vmatprep.subr.bf16.mxu0 0
    %3375 = vmatpush2.bf16.msra.mxu0 0
    %3376 = vmatprep.subr.bf16.mxu0 0
    %3377 = vmatpush2.bf16.msra.mxu0 0
    %3378 = vmatprep.subr.bf16.mxu0 0
    %3379 = vmatpush2.bf16.msra.mxu0 0
    %3380 = vmatprep.subr.bf16.mxu0 0
    %3381 = vmatpush2.bf16.msra.mxu0 0
    %3382 = vmatprep.subr.bf16.mxu0 0
    %3383 = vmatpush2.bf16.msra.mxu0 0
    %3384 = vmatprep.mubr.bf16.mxu0 0
    %3385 = vmatmul.mubr.bf16.gmra.mxu0 %v3341
    %v3386 = vpop.f32.mrf.mxu0
    %v3387 = vadd.f32 0.0, %v3386
    %v3388 = vpop.f32.mrf.mxu0
    %v3389 = vpop.f32.mrf.mxu0
    %v3390 = vadd.f32 0.0, %v3389
    %v3391 = vpop.f32.mrf.mxu0
    %3392 = vmatprep.mubr.bf16.mxu0 0
    %3393 = vmatmul.mubr.bf16.gmra.mxu0 %v3344
    %v3394 = vpop.f32.mrf.mxu0
    %v3395 = vadd.f32 0.0, %v3394
    %v3396 = vpop.f32.mrf.mxu0
    %v3397 = vpop.f32.mrf.mxu0
    %v3398 = vadd.f32 0.0, %v3397
    %v3399 = vpop.f32.mrf.mxu0
    %3400 = vmatprep.mubr.bf16.mxu0 0
    %3401 = vmatmul.mubr.bf16.gmra.mxu0 %v3347
    %v3402 = vpop.f32.mrf.mxu0
    %v3403 = vadd.f32 0.0, %v3402
    %v3404 = vpop.f32.mrf.mxu0
    %v3405 = vpop.f32.mrf.mxu0
    %v3406 = vadd.f32 0.0, %v3405
    %v3407 = vpop.f32.mrf.mxu0
    %3408 = vmatprep.mubr.bf16.mxu0 0
    %3409 = vmatmul.mubr.bf16.gmra.mxu0 %v3350
    %v3410 = vpop.f32.mrf.mxu0
    %v3411 = vadd.f32 0.0, %v3410
    %v3412 = vpop.f32.mrf.mxu0
    %v3413 = vpop.f32.mrf.mxu0
    %v3414 = vadd.f32 0.0, %v3413
    %v3415 = vpop.f32.mrf.mxu0
    %3416 = vdwg.mxu0
    %v3417 = vpack.c.bf16 %v3390, %v3387
    %v3418 = vpack.c.bf16 %v3398, %v3395
    %v3419 = vpack.c.bf16 %v3406, %v3403
    %v3420 = vpack.c.bf16 %v3414, %v3411
    %v3421 = vld [vmem:[%s2 + $0x20] sm:$0xf]
    %v3422 = vld [vmem:[%s2 + $0x24] sm:$0xf]
    %v3423 = vld [vmem:[%s2 + $0x28] sm:$0xf]
    %v3424 = vld [vmem:[%s2 + $0x2c] sm:$0xf]
    %v3429 = vunpack.c.l.b16 %v3421
    %v3430 = vunpack.c.l.b16 %v3422
    %v3431 = vunpack.c.l.b16 %v3423
    %v3432 = vunpack.c.l.b16 %v3424
    %v3433 = vpack.c.b16 %v3430, %v3429
    %v3434 = vpack.c.b16 %v3432, %v3431
    %v3438 = vsel %vm737, %v3417, 0
    %v3441 = vsel %vm737, %v3418, 0
    %v3444 = vsel %vm737, %v3419, 0
    %v3447 = vsel %vm737, %v3420, 0
    %3449 = vmatprep.subr.bf16.mxu0 0
    %3450 = vmatpush1.bf16.msra.mxu0 0
    %3451 = vmatprep.subr.bf16.mxu0 0
    %3452 = vmatpush1.bf16.msra.mxu0 0
    %3453 = vmatprep.subr.bf16.mxu0 0
    %3454 = vmatpush1.bf16.msra.mxu0 0
    %3455 = vmatprep.subr.bf16.mxu0 0
    %3456 = vmatpush1.bf16.msra.mxu0 0
    %3457 = vmatprep.subr.bf16.mxu0 0
    %3458 = vmatpush1.bf16.msra.mxu0 0
    %3459 = vmatprep.subr.bf16.mxu0 0
    %3460 = vmatpush1.bf16.msra.mxu0 0
    %3461 = vmatprep.subr.bf16.mxu0 0
    %3462 = vmatpush1.bf16.msra.mxu0 %v3434
    %3463 = vmatprep.subr.bf16.mxu0 0
    %3464 = vmatpush1.bf16.msra.mxu0 %v3433
    %3465 = vmatprep.subr.bf16.mxu0 0
    %3466 = vmatpush2.bf16.msra.mxu0 0
    %3467 = vmatprep.subr.bf16.mxu0 0
    %3468 = vmatpush2.bf16.msra.mxu0 0
    %3469 = vmatprep.subr.bf16.mxu0 0
    %3470 = vmatpush2.bf16.msra.mxu0 0
    %3471 = vmatprep.subr.bf16.mxu0 0
    %3472 = vmatpush2.bf16.msra.mxu0 0
    %3473 = vmatprep.subr.bf16.mxu0 0
    %3474 = vmatpush2.bf16.msra.mxu0 0
    %3475 = vmatprep.subr.bf16.mxu0 0
    %3476 = vmatpush2.bf16.msra.mxu0 0
    %3477 = vmatprep.subr.bf16.mxu0 0
    %3478 = vmatpush2.bf16.msra.mxu0 0
    %3479 = vmatprep.subr.bf16.mxu0 0
    %3480 = vmatpush2.bf16.msra.mxu0 0
    %3481 = vmatprep.mubr.bf16.mxu0 0
    %3482 = vmatmul.mubr.bf16.gmra.mxu0 %v3438
    %v3483 = vpop.f32.mrf.mxu0
    %v3484 = vadd.f32 0.0, %v3483
    %v3485 = vpop.f32.mrf.mxu0
    %v3486 = vpop.f32.mrf.mxu0
    %v3487 = vadd.f32 0.0, %v3486
    %v3488 = vpop.f32.mrf.mxu0
    %3489 = vmatprep.mubr.bf16.mxu0 0
    %3490 = vmatmul.mubr.bf16.gmra.mxu0 %v3441
    %v3491 = vpop.f32.mrf.mxu0
    %v3492 = vadd.f32 0.0, %v3491
    %v3493 = vpop.f32.mrf.mxu0
    %v3494 = vpop.f32.mrf.mxu0
    %v3495 = vadd.f32 0.0, %v3494
    %v3496 = vpop.f32.mrf.mxu0
    %3497 = vmatprep.mubr.bf16.mxu0 0
    %3498 = vmatmul.mubr.bf16.gmra.mxu0 %v3444
    %v3499 = vpop.f32.mrf.mxu0
    %v3500 = vadd.f32 0.0, %v3499
    %v3501 = vpop.f32.mrf.mxu0
    %v3502 = vpop.f32.mrf.mxu0
    %v3503 = vadd.f32 0.0, %v3502
    %v3504 = vpop.f32.mrf.mxu0
    %3505 = vmatprep.mubr.bf16.mxu0 0
    %3506 = vmatmul.mubr.bf16.gmra.mxu0 %v3447
    %v3507 = vpop.f32.mrf.mxu0
    %v3508 = vadd.f32 0.0, %v3507
    %v3509 = vpop.f32.mrf.mxu0
    %v3510 = vpop.f32.mrf.mxu0
    %v3511 = vadd.f32 0.0, %v3510
    %v3512 = vpop.f32.mrf.mxu0
    %3513 = vdwg.mxu0
    %v3514 = vadd.f32 %v3101, %v3484
    %v3515 = vadd.f32 %v3104, %v3487
    %v3516 = vadd.f32 %v3109, %v3492
    %v3517 = vadd.f32 %v3112, %v3495
    %v3518 = vadd.f32 %v3117, %v3500
    %v3519 = vadd.f32 %v3120, %v3503
    %v3520 = vadd.f32 %v3125, %v3508
    %v3521 = vadd.f32 %v3128, %v3511
    %3522 = vrot.lane.b32.xlu0 %v2345, 32
    %v3523 = vpop.permute.xlu0 %3522
    %3524 = vrot.lane.b32.xlu0 %v2346, 32
    %v3525 = vpop.permute.xlu0 %3524
    %3526 = vrot.lane.b32.xlu0 %v2347, 32
    %v3527 = vpop.permute.xlu0 %3526
    %3528 = vrot.lane.b32.xlu0 %v2348, 32
    %v3529 = vpop.permute.xlu0 %3528
    %3530 = vrot.lane.b32.xlu0 %v2365, 32
    %v3531 = vpop.permute.xlu0 %3530
    %3532 = vrot.lane.b32.xlu0 %v2366, 32
    %v3533 = vpop.permute.xlu0 %3532
    %3534 = vrot.lane.b32.xlu0 %v2367, 32
    %v3535 = vpop.permute.xlu0 %3534
    %3536 = vrot.lane.b32.xlu0 %v2368, 32
    %v3537 = vpop.permute.xlu0 %3536
    %v3539 = vsel %vm737, %v3523, 0
    %v3542 = vsel %vm737, %v3525, 0
    %v3545 = vsel %vm737, %v3527, 0
    %v3548 = vsel %vm737, %v3529, 0
    %v3551 = vsel %vm737, %v3531, 0
    %v3554 = vsel %vm737, %v3533, 0
    %v3557 = vsel %vm737, %v3535, 0
    %v3560 = vsel %vm737, %v3537, 0
    %3562 = vmatprep.subr.bf16.mxu0 0
    %3563 = vmatpush1.bf16.xpose.msra.mxu0 0
    %3564 = vmatprep.subr.bf16.mxu0 0
    %3565 = vmatpush1.bf16.xpose.msra.mxu0 0
    %3566 = vmatprep.subr.bf16.mxu0 0
    %3567 = vmatpush1.bf16.xpose.msra.mxu0 0
    %3568 = vmatprep.subr.bf16.mxu0 0
    %3569 = vmatpush1.bf16.xpose.msra.mxu0 0
    %3570 = vmatprep.subr.bf16.mxu0 0
    %3571 = vmatpush1.bf16.xpose.msra.mxu0 %v3560
    %3572 = vmatprep.subr.bf16.mxu0 0
    %3573 = vmatpush1.bf16.xpose.msra.mxu0 %v3557
    %3574 = vmatprep.subr.bf16.mxu0 0
    %3575 = vmatpush1.bf16.xpose.msra.mxu0 %v3554
    %3576 = vmatprep.subr.bf16.mxu0 0
    %3577 = vmatpush1.bf16.xpose.msra.mxu0 %v3551
    %3578 = vmatprep.subr.bf16.mxu0 0
    %3579 = vmatpush2.bf16.xpose.msra.mxu0 0
    %3580 = vmatprep.subr.bf16.mxu0 0
    %3581 = vmatpush2.bf16.xpose.msra.mxu0 0
    %3582 = vmatprep.subr.bf16.mxu0 0
    %3583 = vmatpush2.bf16.xpose.msra.mxu0 0
    %3584 = vmatprep.subr.bf16.mxu0 0
    %3585 = vmatpush2.bf16.xpose.msra.mxu0 0
    %3586 = vmatprep.subr.bf16.mxu0 0
    %3587 = vmatpush2.bf16.xpose.msra.mxu0 0
    %3588 = vmatprep.subr.bf16.mxu0 0
    %3589 = vmatpush2.bf16.xpose.msra.mxu0 0
    %3590 = vmatprep.subr.bf16.mxu0 0
    %3591 = vmatpush2.bf16.xpose.msra.mxu0 0
    %3592 = vmatprep.subr.bf16.mxu0 0
    %3593 = vmatpush2.bf16.xpose.msra.mxu0 0
    %3594 = vmatprep.mubr.bf16.mxu0 0
    %3595 = vmatmul.mubr.bf16.gmra.mxu0 %v3539
    %v3596 = vpop.f32.mrf.mxu0
    %v3597 = vadd.f32 %v664, %v3596
    %v3598 = vpop.f32.mrf.mxu0
    %v3599 = vpop.f32.mrf.mxu0
    %v3600 = vadd.f32 %v665, %v3599
    %v3601 = vpop.f32.mrf.mxu0
    %3602 = vmatprep.mubr.bf16.mxu0 0
    %3603 = vmatmul.mubr.bf16.gmra.mxu0 %v3542
    %v3604 = vpop.f32.mrf.mxu0
    %v3605 = vadd.f32 %v666, %v3604
    %v3606 = vpop.f32.mrf.mxu0
    %v3607 = vpop.f32.mrf.mxu0
    %v3608 = vadd.f32 %v667, %v3607
    %v3609 = vpop.f32.mrf.mxu0
    %3610 = vmatprep.mubr.bf16.mxu0 0
    %3611 = vmatmul.mubr.bf16.gmra.mxu0 %v3545
    %v3612 = vpop.f32.mrf.mxu0
    %v3613 = vadd.f32 %v668, %v3612
    %v3614 = vpop.f32.mrf.mxu0
    %v3615 = vpop.f32.mrf.mxu0
    %v3616 = vadd.f32 %v669, %v3615
    %v3617 = vpop.f32.mrf.mxu0
    %3618 = vmatprep.mubr.bf16.mxu0 0
    %3619 = vmatmul.mubr.bf16.gmra.mxu0 %v3548
    %v3620 = vpop.f32.mrf.mxu0
    %v3621 = vadd.f32 %v670, %v3620
    %v3622 = vpop.f32.mrf.mxu0
    %v3623 = vpop.f32.mrf.mxu0
    %v3624 = vadd.f32 %v671, %v3623
    %v3625 = vpop.f32.mrf.mxu0
    %3626 = vdwg.mxu0
    %v3627 = vsel %vm827, %v3597, -inf
    %3628 = vmax.xlane.f32.xlu0 %v3627
    %v3629 = vpop.xlane.xlu0 %3628
    %v3630 = vsel %vm827, %v3600, -inf
    %3631 = vmax.xlane.f32.xlu0 %v3630
    %v3632 = vpop.xlane.xlu0 %3631
    %v3633 = vsel %vm827, %v3605, -inf
    %3634 = vmax.xlane.f32.xlu0 %v3633
    %v3635 = vpop.xlane.xlu0 %3634
    %v3636 = vsel %vm827, %v3608, -inf
    %3637 = vmax.xlane.f32.xlu0 %v3636
    %v3638 = vpop.xlane.xlu0 %3637
    %v3639 = vsel %vm827, %v3613, -inf
    %3640 = vmax.xlane.f32.xlu0 %v3639
    %v3641 = vpop.xlane.xlu0 %3640
    %v3642 = vsel %vm827, %v3616, -inf
    %3643 = vmax.xlane.f32.xlu0 %v3642
    %v3644 = vpop.xlane.xlu0 %3643
    %v3645 = vsel %vm827, %v3621, -inf
    %3646 = vmax.xlane.f32.xlu0 %v3645
    %v3647 = vpop.xlane.xlu0 %3646
    %v3648 = vsel %vm827, %v3624, -inf
    %3649 = vmax.xlane.f32.xlu0 %v3648
    %v3650 = vpop.xlane.xlu0 %3649
    %v3651 = vsub.f32 %v3597, %v3629
    %v3652 = vsub.f32 %v3600, %v3632
    %v3653 = vsub.f32 %v3605, %v3635
    %v3654 = vsub.f32 %v3608, %v3638
    %v3655 = vsub.f32 %v3613, %v3641
    %v3656 = vsub.f32 %v3616, %v3644
    %v3657 = vsub.f32 %v3621, %v3647
    %v3658 = vsub.f32 %v3624, %v3650
    %v3659 = vmul.f32 %v3651, 1.442695
    %v3660 = vpow.pop %v3659
    %v3661 = vmul.f32 %v3652, 1.442695
    %v3662 = vpow.pop %v3661
    %v3663 = vmul.f32 %v3653, 1.442695
    %v3664 = vpow.pop %v3663
    %v3665 = vmul.f32 %v3654, 1.442695
    %v3666 = vpow.pop %v3665
    %v3667 = vmul.f32 %v3655, 1.442695
    %v3668 = vpow.pop %v3667
    %v3669 = vmul.f32 %v3656, 1.442695
    %v3670 = vpow.pop %v3669
    %v3671 = vmul.f32 %v3657, 1.442695
    %v3672 = vpow.pop %v3671
    %v3673 = vmul.f32 %v3658, 1.442695
    %v3674 = vpow.pop %v3673
    %v3675 = vsel %vm827, %v3660, 0.0
    %3676 = vadd.xlane.f32.xlu0 %v3675
    %v3677 = vpop.xlane.xlu0 %3676
    %v3678 = vsel %vm827, %v3662, 0.0
    %3679 = vadd.xlane.f32.xlu0 %v3678
    %v3680 = vpop.xlane.xlu0 %3679
    %v3681 = vsel %vm827, %v3664, 0.0
    %3682 = vadd.xlane.f32.xlu0 %v3681
    %v3683 = vpop.xlane.xlu0 %3682
    %v3684 = vsel %vm827, %v3666, 0.0
    %3685 = vadd.xlane.f32.xlu0 %v3684
    %v3686 = vpop.xlane.xlu0 %3685
    %v3687 = vsel %vm827, %v3668, 0.0
    %3688 = vadd.xlane.f32.xlu0 %v3687
    %v3689 = vpop.xlane.xlu0 %3688
    %v3690 = vsel %vm827, %v3670, 0.0
    %3691 = vadd.xlane.f32.xlu0 %v3690
    %v3692 = vpop.xlane.xlu0 %3691
    %v3693 = vsel %vm827, %v3672, 0.0
    %3694 = vadd.xlane.f32.xlu0 %v3693
    %v3695 = vpop.xlane.xlu0 %3694
    %v3696 = vsel %vm827, %v3674, 0.0
    %3697 = vadd.xlane.f32.xlu0 %v3696
    %v3698 = vpop.xlane.xlu0 %3697
    %v3699 = vrcp.pop %v3677
    %v3700 = vrcp.pop %v3680
    %v3701 = vrcp.pop %v3683
    %v3702 = vrcp.pop %v3686
    %v3703 = vrcp.pop %v3689
    %v3704 = vrcp.pop %v3692
    %v3705 = vrcp.pop %v3695
    %v3706 = vrcp.pop %v3698
    %v3707 = vmul.f32 %v3660, %v3699
    %v3708 = vmul.f32 %v3662, %v3700
    %v3709 = vmul.f32 %v3664, %v3701
    %v3710 = vmul.f32 %v3666, %v3702
    %v3711 = vmul.f32 %v3668, %v3703
    %v3712 = vmul.f32 %v3670, %v3704
    %v3713 = vmul.f32 %v3672, %v3705
    %v3714 = vmul.f32 %v3674, %v3706
    %v3715 = vpack.c.bf16 %v3708, %v3707
    %v3716 = vpack.c.bf16 %v3710, %v3709
    %v3717 = vpack.c.bf16 %v3712, %v3711
    %v3718 = vpack.c.bf16 %v3714, %v3713
    %3719 = vrot.lane.b32.xlu0 %v2566, 32
    %v3720 = vpop.permute.xlu0 %3719
    %3721 = vrot.lane.b32.xlu0 %v2567, 32
    %v3722 = vpop.permute.xlu0 %3721
    %3723 = vrot.lane.b32.xlu0 %v2568, 32
    %v3724 = vpop.permute.xlu0 %3723
    %3725 = vrot.lane.b32.xlu0 %v2569, 32
    %v3726 = vpop.permute.xlu0 %3725
    %v3732 = vsel %vm827, %v3715, 0
    %v3735 = vsel %vm827, %v3716, 0
    %v3738 = vsel %vm827, %v3717, 0
    %v3741 = vsel %vm827, %v3718, 0
    %3743 = vmatprep.subr.bf16.mxu0 0
    %3744 = vmatpush1.bf16.msra.mxu0 0
    %3745 = vmatprep.subr.bf16.mxu0 0
    %3746 = vmatpush1.bf16.msra.mxu0 0
    %3747 = vmatprep.subr.bf16.mxu0 0
    %3748 = vmatpush1.bf16.msra.mxu0 0
    %3749 = vmatprep.subr.bf16.mxu0 0
    %3750 = vmatpush1.bf16.msra.mxu0 0
    %3751 = vmatprep.subr.bf16.mxu0 0
    %3752 = vmatpush1.bf16.msra.mxu0 %v3726
    %3753 = vmatprep.subr.bf16.mxu0 0
    %3754 = vmatpush1.bf16.msra.mxu0 %v3724
    %3755 = vmatprep.subr.bf16.mxu0 0
    %3756 = vmatpush1.bf16.msra.mxu0 %v3722
    %3757 = vmatprep.subr.bf16.mxu0 0
    %3758 = vmatpush1.bf16.msra.mxu0 %v3720
    %3759 = vmatprep.subr.bf16.mxu0 0
    %3760 = vmatpush2.bf16.msra.mxu0 0
    %3761 = vmatprep.subr.bf16.mxu0 0
    %3762 = vmatpush2.bf16.msra.mxu0 0
    %3763 = vmatprep.subr.bf16.mxu0 0
    %3764 = vmatpush2.bf16.msra.mxu0 0
    %3765 = vmatprep.subr.bf16.mxu0 0
    %3766 = vmatpush2.bf16.msra.mxu0 0
    %3767 = vmatprep.subr.bf16.mxu0 0
    %3768 = vmatpush2.bf16.msra.mxu0 0
    %3769 = vmatprep.subr.bf16.mxu0 0
    %3770 = vmatpush2.bf16.msra.mxu0 0
    %3771 = vmatprep.subr.bf16.mxu0 0
    %3772 = vmatpush2.bf16.msra.mxu0 0
    %3773 = vmatprep.subr.bf16.mxu0 0
    %3774 = vmatpush2.bf16.msra.mxu0 0
    %3775 = vmatprep.mubr.bf16.mxu0 0
    %3776 = vmatmul.mubr.bf16.gmra.mxu0 %v3732
    %v3777 = vpop.f32.mrf.mxu0
    %v3778 = vadd.f32 0.0, %v3777
    %v3779 = vpop.f32.mrf.mxu0
    %v3780 = vpop.f32.mrf.mxu0
    %v3781 = vadd.f32 0.0, %v3780
    %v3782 = vpop.f32.mrf.mxu0
    %3783 = vmatprep.mubr.bf16.mxu0 0
    %3784 = vmatmul.mubr.bf16.gmra.mxu0 %v3735
    %v3785 = vpop.f32.mrf.mxu0
    %v3786 = vadd.f32 0.0, %v3785
    %v3787 = vpop.f32.mrf.mxu0
    %v3788 = vpop.f32.mrf.mxu0
    %v3789 = vadd.f32 0.0, %v3788
    %v3790 = vpop.f32.mrf.mxu0
    %3791 = vmatprep.mubr.bf16.mxu0 0
    %3792 = vmatmul.mubr.bf16.gmra.mxu0 %v3738
    %v3793 = vpop.f32.mrf.mxu0
    %v3794 = vadd.f32 0.0, %v3793
    %v3795 = vpop.f32.mrf.mxu0
    %v3796 = vpop.f32.mrf.mxu0
    %v3797 = vadd.f32 0.0, %v3796
    %v3798 = vpop.f32.mrf.mxu0
    %3799 = vmatprep.mubr.bf16.mxu0 0
    %3800 = vmatmul.mubr.bf16.gmra.mxu0 %v3741
    %v3801 = vpop.f32.mrf.mxu0
    %v3802 = vadd.f32 0.0, %v3801
    %v3803 = vpop.f32.mrf.mxu0
    %v3804 = vpop.f32.mrf.mxu0
    %v3805 = vadd.f32 0.0, %v3804
    %v3806 = vpop.f32.mrf.mxu0
    %3807 = vdwg.mxu0
    %v3808 = vpack.c.bf16 %v3781, %v3778
    %v3809 = vpack.c.bf16 %v3789, %v3786
    %v3810 = vpack.c.bf16 %v3797, %v3794
    %v3811 = vpack.c.bf16 %v3805, %v3802
    %v3812 = vld [vmem:[%s2 + $0x30] sm:$0xf]
    %v3813 = vld [vmem:[%s2 + $0x34] sm:$0xf]
    %v3814 = vld [vmem:[%s2 + $0x38] sm:$0xf]
    %v3815 = vld [vmem:[%s2 + $0x3c] sm:$0xf]
    %v3820 = vunpack.c.l.b16 %v3812
    %v3821 = vunpack.c.l.b16 %v3813
    %v3822 = vunpack.c.l.b16 %v3814
    %v3823 = vunpack.c.l.b16 %v3815
    %v3824 = vpack.c.b16 %v3821, %v3820
    %v3825 = vpack.c.b16 %v3823, %v3822
    %v3829 = vsel %vm737, %v3808, 0
    %v3832 = vsel %vm737, %v3809, 0
    %v3835 = vsel %vm737, %v3810, 0
    %v3838 = vsel %vm737, %v3811, 0
    %3840 = vmatprep.subr.bf16.mxu0 0
    %3841 = vmatpush1.bf16.msra.mxu0 0
    %3842 = vmatprep.subr.bf16.mxu0 0
    %3843 = vmatpush1.bf16.msra.mxu0 0
    %3844 = vmatprep.subr.bf16.mxu0 0
    %3845 = vmatpush1.bf16.msra.mxu0 0
    %3846 = vmatprep.subr.bf16.mxu0 0
    %3847 = vmatpush1.bf16.msra.mxu0 0
    %3848 = vmatprep.subr.bf16.mxu0 0
    %3849 = vmatpush1.bf16.msra.mxu0 0
    %3850 = vmatprep.subr.bf16.mxu0 0
    %3851 = vmatpush1.bf16.msra.mxu0 0
    %3852 = vmatprep.subr.bf16.mxu0 0
    %3853 = vmatpush1.bf16.msra.mxu0 %v3825
    %3854 = vmatprep.subr.bf16.mxu0 0
    %3855 = vmatpush1.bf16.msra.mxu0 %v3824
    %3856 = vmatprep.subr.bf16.mxu0 0
    %3857 = vmatpush2.bf16.msra.mxu0 0
    %3858 = vmatprep.subr.bf16.mxu0 0
    %3859 = vmatpush2.bf16.msra.mxu0 0
    %3860 = vmatprep.subr.bf16.mxu0 0
    %3861 = vmatpush2.bf16.msra.mxu0 0
    %3862 = vmatprep.subr.bf16.mxu0 0
    %3863 = vmatpush2.bf16.msra.mxu0 0
    %3864 = vmatprep.subr.bf16.mxu0 0
    %3865 = vmatpush2.bf16.msra.mxu0 0
    %3866 = vmatprep.subr.bf16.mxu0 0
    %3867 = vmatpush2.bf16.msra.mxu0 0
    %3868 = vmatprep.subr.bf16.mxu0 0
    %3869 = vmatpush2.bf16.msra.mxu0 0
    %3870 = vmatprep.subr.bf16.mxu0 0
    %3871 = vmatpush2.bf16.msra.mxu0 0
    %3872 = vmatprep.mubr.bf16.mxu0 0
    %3873 = vmatmul.mubr.bf16.gmra.mxu0 %v3829
    %v3874 = vpop.f32.mrf.mxu0
    %v3875 = vadd.f32 0.0, %v3874
    %v3876 = vpop.f32.mrf.mxu0
    %v3877 = vpop.f32.mrf.mxu0
    %v3878 = vadd.f32 0.0, %v3877
    %v3879 = vpop.f32.mrf.mxu0
    %3880 = vmatprep.mubr.bf16.mxu0 0
    %3881 = vmatmul.mubr.bf16.gmra.mxu0 %v3832
    %v3882 = vpop.f32.mrf.mxu0
    %v3883 = vadd.f32 0.0, %v3882
    %v3884 = vpop.f32.mrf.mxu0
    %v3885 = vpop.f32.mrf.mxu0
    %v3886 = vadd.f32 0.0, %v3885
    %v3887 = vpop.f32.mrf.mxu0
    %3888 = vmatprep.mubr.bf16.mxu0 0
    %3889 = vmatmul.mubr.bf16.gmra.mxu0 %v3835
    %v3890 = vpop.f32.mrf.mxu0
    %v3891 = vadd.f32 0.0, %v3890
    %v3892 = vpop.f32.mrf.mxu0
    %v3893 = vpop.f32.mrf.mxu0
    %v3894 = vadd.f32 0.0, %v3893
    %v3895 = vpop.f32.mrf.mxu0
    %3896 = vmatprep.mubr.bf16.mxu0 0
    %3897 = vmatmul.mubr.bf16.gmra.mxu0 %v3838
    %v3898 = vpop.f32.mrf.mxu0
    %v3899 = vadd.f32 0.0, %v3898
    %v3900 = vpop.f32.mrf.mxu0
    %v3901 = vpop.f32.mrf.mxu0
    %v3902 = vadd.f32 0.0, %v3901
    %v3903 = vpop.f32.mrf.mxu0
    %3904 = vdwg.mxu0
    %v3905 = vadd.f32 %v3514, %v3875
    %v3906 = vadd.f32 %v3515, %v3878
    %v3907 = vadd.f32 %v3516, %v3883
    %v3908 = vadd.f32 %v3517, %v3886
    %v3909 = vadd.f32 %v3518, %v3891
    %v3910 = vadd.f32 %v3519, %v3894
    %v3911 = vadd.f32 %v3520, %v3899
    %v3912 = vadd.f32 %v3521, %v3902
    %v3913 = vadd.f32 %v3905, %v2287
    %v3914 = vadd.f32 %v3906, %v2287
    %v3915 = vadd.f32 %v3907, %v2287
    %v3916 = vadd.f32 %v3908, %v2287
    %v3917 = vadd.f32 %v3909, %v2287
    %v3918 = vadd.f32 %v3910, %v2287
    %v3919 = vadd.f32 %v3911, %v2287
    %v3920 = vadd.f32 %v3912, %v2287
    %3921 = vst [vmem:[#allocation3 + $0x40] sm:$0xff] %v3913
    %3922 = vst [vmem:[#allocation3 + $0x48] sm:$0xff] %v3914
    %3923 = vst [vmem:[#allocation3 + $0x50] sm:$0xff] %v3915
    %3924 = vst [vmem:[#allocation3 + $0x58] sm:$0xff] %v3916
    %3925 = vst [vmem:[#allocation3 + $0x60] sm:$0xff] %v3917
    %3926 = vst [vmem:[#allocation3 + $0x68] sm:$0xff] %v3918
    %3927 = vst [vmem:[#allocation3 + $0x70] sm:$0xff] %v3919
    %3928 = vst [vmem:[#allocation3 + $0x78] sm:$0xff] %v3920
    // Predicated region
    $region18: #{multi_head_attention.1} parent=1 // pred_check
      _
    $region19: #{multi_head_attention.1} parent=1 // pred_check_branch
      %3930 = sbr.rel (0) target = $region21
    $region20: #{multi_head_attention.1} parent=1 // pred_region
      %s3932 = ssub.s32 2048, 2048
      %3933 = vsyncadd [#allocation4], %s3932
      %s3934 = sshll.u32 [#allocation3], 4
      %s3935 = int_to_ptr.vmem [resolvable:$true] %s3934
      %3940 = dma.vmem_to_hbm [thread:$0]  %s3935, 2048, %s4, [#allocation4], 128, 128, 8
    $region21: #{multi_head_attention.1} parent=1 // pred_fallthru
      _
    // Predicated region
    $region22: #{multi_head_attention.1} parent=1 // pred_check
      _
    $region23: #{multi_head_attention.1} parent=1 // pred_check_branch
      %3942 = sbr.rel (0) target = $region25
    $region24: #{multi_head_attention.1} parent=1 // pred_region
      %3943 = dma.done [#allocation4], 2048
    $region25: #{multi_head_attention.1} parent=1 // pred_fallthru
      _
    %3944 = vsyncpa [#allocation4], 1

</llo_original>
